<compile_context>
chip_gen: v7x
topology: tpu7x:2x2x1
jax: 0.10.0
libtpu: 0.0.40
codegen_flags: <defaults>
</compile_context>

<pallas_src>
import jax
import jax.numpy as jnp
from jax.experimental import pallas as pl
from jax.experimental.pallas import tpu as pltpu

IN_FEATURES = 28 * 28          # 784
HIDDEN_SIZE = 500
NUM_CLASSES = 10

# Lane-dense padded dims (multiples of 128).
IN_PAD = 896                   # 7 * 128  (784 zero-padded)
HID_PAD = 512                  # 500 zero-padded
OUT_PAD = 128                  # 10 zero-padded

# Batch tile: 1024 amortizes the per-grid-step pipeline overhead on v6e/v7x.
# VMEM at tile_b=1024: ~3.5 MB x bufs + ~1 MB out bufs + ~2.1 MB resident bf16
# weights + a few MB of f32 'h' temporaries -- well inside the 48 MiB scoped
# limit requested below (and v7x's 64 MiB physical per-core VMEM).
TILE_B_MAX = 1024


def _round_up(x, m):
    return ((x + m - 1) // m) * m


def _pad2(a, rows, cols):
    """Zero-pad a 2-D array to (rows, cols)."""
    return jnp.zeros((rows, cols), a.dtype).at[: a.shape[0], : a.shape[1]].set(a)


def prepare_params(params):
    """One-time param prep: pad to lane-dense shapes, cast weights to bf16.

    Call once after init / loading; pass the result to mlp_forward so the
    per-call HBM traffic is only the kernel's own ~2.1 MB bf16 weight DMA.
    """
    (w1, b1), (w2, b2), (w3, b3), (w4, b4) = params
    w1p = _pad2(w1, IN_PAD, HID_PAD).astype(jnp.bfloat16)
    w2p = _pad2(w2, HID_PAD, HID_PAD).astype(jnp.bfloat16)
    w3p = _pad2(w3, HID_PAD, HID_PAD).astype(jnp.bfloat16)
    w4p = _pad2(w4, HID_PAD, OUT_PAD).astype(jnp.bfloat16)
    b1p = _pad2(b1, 1, HID_PAD)      # biases stay f32 (added post-accumulation)
    b2p = _pad2(b2, 1, HID_PAD)
    b3p = _pad2(b3, 1, HID_PAD)
    b4p = _pad2(b4, 1, OUT_PAD)
    return (w1p, b1p, w2p, b2p, w3p, b3p, w4p, b4p)


def mlp_kernel(x_ref, w1_ref, b1_ref, w2_ref, b2_ref,
               w3_ref, b3_ref, w4_ref, b4_ref, o_ref):
    # x / weights stream in bf16; all accumulation and bias adds are f32
    # (v5e's VPU has no bf16, and f32 accumulation preserves accuracy).
    h = jnp.dot(x_ref[...], w1_ref[...],
                preferred_element_type=jnp.float32) + b1_ref[...]
    h = jnp.dot(h.astype(jnp.bfloat16), w2_ref[...],
                preferred_element_type=jnp.float32) + b2_ref[...]
    h = jnp.dot(h.astype(jnp.bfloat16), w3_ref[...],
                preferred_element_type=jnp.float32) + b3_ref[...]
    o_ref[...] = (jnp.dot(h.astype(jnp.bfloat16), w4_ref[...],
                          preferred_element_type=jnp.float32)
                  + b4_ref[...]).astype(o_ref.dtype)


@jax.jit
def mlp_forward(x_nchw, prepped_params):
    """x_nchw: (B, C, H, W) with C*H*W == 784. Returns (B, NUM_CLASSES) f32.

    prepped_params: output of prepare_params(params)."""
    batch = x_nchw.shape[0]
    # Single reshape + bf16 cast (no intermediate f32 copy of x in HBM).
    x = x_nchw.reshape(batch, -1).astype(jnp.bfloat16)
    assert x.shape[1] == IN_FEATURES

    w1p, b1p, w2p, b2p, w3p, b3p, w4p, b4p = prepped_params

    # --- batch tile selection -------------------------------------------------
    # Multiple of 16 (bf16 sublane tile is (16,128)).
    tile_b = min(TILE_B_MAX, _round_up(batch, 16))
    # Prefer >= 2 grid steps so dimension_semantics=("parallel",) can feed both
    # v7x TensorCores (no-op on v5e/v6e).
    if _round_up(batch, tile_b) == tile_b and tile_b >= 32:
        tile_b = _round_up(tile_b // 2, 16)
    padded_batch = _round_up(batch, tile_b)

    x_pad = _pad2(x, padded_batch, IN_PAD)

    grid = (padded_batch // tile_b,)

    def streamed(shape):             # streamed along the batch grid axis
        return pl.BlockSpec(shape, lambda i: (i, 0))

    def resident(shape):             # same block every step -> VMEM-resident,
        return pl.BlockSpec(shape, lambda i: (0, 0),      # single-buffered
                            pipeline_mode=pl.Buffered(1))

    flops = 2 * padded_batch * (IN_PAD * HID_PAD
                                + HID_PAD * HID_PAD * 2
                                + HID_PAD * OUT_PAD)
    bytes_accessed = (
        (IN_PAD * HID_PAD + 2 * HID_PAD * HID_PAD + HID_PAD * OUT_PAD) * 2  # bf16 W
        + (3 * HID_PAD + OUT_PAD) * 4                                       # f32 b
        + padded_batch * IN_PAD * 2                                         # bf16 x
        + padded_batch * OUT_PAD * 4)                                       # f32 out

    out = pl.pallas_call(
        mlp_kernel,
        out_shape=jax.ShapeDtypeStruct((padded_batch, OUT_PAD), jnp.float32),
        grid=grid,
        in_specs=[
            streamed((tile_b, IN_PAD)),
            resident((IN_PAD, HID_PAD)), resident((1, HID_PAD)),
            resident((HID_PAD, HID_PAD)), resident((1, HID_PAD)),
            resident((HID_PAD, HID_PAD)), resident((1, HID_PAD)),
            resident((HID_PAD, OUT_PAD)), resident((1, OUT_PAD)),
        ],
        out_specs=streamed((tile_b, OUT_PAD)),
        compiler_params=pltpu.CompilerParams(
            dimension_semantics=("parallel",),
            vmem_limit_bytes=48 << 20),
        cost_estimate=pl.CostEstimate(
            flops=flops, transcendentals=0, bytes_accessed=bytes_accessed),
    )(x_pad, w1p, b1p, w2p, b2p, w3p, b3p, w4p, b4p)

    # Drop batch padding and the zero-padded logit lanes.
    return out[:batch, :NUM_CLASSES]


def init_params(key):
    """nn.Linear-style init U(-1/sqrt(fan_in), 1/sqrt(fan_in)).
    Weights stored as (in_features, out_features); biases as (1, out_features)."""
    dims = [(IN_FEATURES, HIDDEN_SIZE),
            (HIDDEN_SIZE, HIDDEN_SIZE),
            (HIDDEN_SIZE, HIDDEN_SIZE),
            (HIDDEN_SIZE, NUM_CLASSES)]
    params = []
    for (fan_in, fan_out) in dims:
        key, kw, kb = jax.random.split(key, 3)
        bound = 1.0 / jnp.sqrt(fan_in)
        w = jax.random.uniform(kw, (fan_in, fan_out), jnp.float32,
                               minval=-bound, maxval=bound)
        bvec = jax.random.uniform(kb, (1, fan_out), jnp.float32,
                                  minval=-bound, maxval=bound)
        params.append((w, bvec))
    return params


if __name__ == "__main__":
    root = jax.random.PRNGKey(0)
    k_params, k_x = jax.random.split(root)
    params = init_params(k_params)

    # One-time prep (padding + bf16 cast) -- NOT per forward call.
    prepped = jax.block_until_ready(prepare_params(params))

    # MNIST-like input: batch=2, channels=1, 28x28  (C*H*W = 784)
    x = jax.random.normal(k_x, (2, 1, 28, 28), jnp.float32)

    y = mlp_forward(x, prepped)
    y = jax.block_until_ready(y)
    assert y.shape == (2, NUM_CLASSES)

    # Reference 1: same bf16 streaming / f32 accumulation as the kernel.
    ref = x.reshape(-1, IN_FEATURES)
    for (w, bvec) in params:
        ref = jnp.dot(ref.astype(jnp.bfloat16), w.astype(jnp.bfloat16),
                      preferred_element_type=jnp.float32) + bvec
    assert jnp.allclose(y, ref, atol=2e-3, rtol=2e-3)

    # Reference 2: pure-f32 forward (semantics check, loose tol for bf16 weights).
    ref32 = x.reshape(-1, IN_FEATURES).astype(jnp.float32)
    for (w, bvec) in params:
        ref32 = ref32 @ w + bvec
    assert jnp.allclose(y, ref32, atol=1e-1, rtol=1e-1)

    print("KERNEL_OK")
</pallas_src>

<mosaic_0001>
module attributes {stable_mosaic.version = 11 : i64} {
  func.func @mlp_kernel(%arg0: i32, %arg1: memref<16x896xbf16, #tpu.memory_space<vmem>>, %arg2: memref<896x512xbf16, #tpu.memory_space<vmem>>, %arg3: memref<1x512xf32, #tpu.memory_space<vmem>>, %arg4: memref<512x512xbf16, #tpu.memory_space<vmem>>, %arg5: memref<1x512xf32, #tpu.memory_space<vmem>>, %arg6: memref<512x512xbf16, #tpu.memory_space<vmem>>, %arg7: memref<1x512xf32, #tpu.memory_space<vmem>>, %arg8: memref<512x128xbf16, #tpu.memory_space<vmem>>, %arg9: memref<1x128xf32, #tpu.memory_space<vmem>>, %arg10: memref<16x128xf32, #tpu.memory_space<vmem>>) attributes {dimension_semantics = [#tpu.dimension_semantics<parallel>], iteration_bounds = array<i64: 1>, scalar_prefetch = 0 : i64, scratch_operands = 0 : i64, tpu.core_type = #tpu.core_type<tc>, window_params = [{transform_indices = @transform_0, window_bounds = array<i64: 16, 896>}, {pipeline_mode = #tpu.pipeline_mode<synchronous>, transform_indices = @transform_1, window_bounds = array<i64: 896, 512>}, {pipeline_mode = #tpu.pipeline_mode<synchronous>, transform_indices = @transform_2, window_bounds = array<i64: 1, 512>}, {pipeline_mode = #tpu.pipeline_mode<synchronous>, transform_indices = @transform_3, window_bounds = array<i64: 512, 512>}, {pipeline_mode = #tpu.pipeline_mode<synchronous>, transform_indices = @transform_4, window_bounds = array<i64: 1, 512>}, {pipeline_mode = #tpu.pipeline_mode<synchronous>, transform_indices = @transform_5, window_bounds = array<i64: 512, 512>}, {pipeline_mode = #tpu.pipeline_mode<synchronous>, transform_indices = @transform_6, window_bounds = array<i64: 1, 512>}, {pipeline_mode = #tpu.pipeline_mode<synchronous>, transform_indices = @transform_7, window_bounds = array<i64: 512, 128>}, {pipeline_mode = #tpu.pipeline_mode<synchronous>, transform_indices = @transform_8, window_bounds = array<i64: 1, 128>}, {transform_indices = @transform_9, window_bounds = array<i64: 16, 128>}]} {
    %c0 = arith.constant 0 : index
    %c0_0 = arith.constant 0 : index
    %0 = vector.load %arg1[%c0, %c0_0] : memref<16x896xbf16, #tpu.memory_space<vmem>>, vector<16x896xbf16>
    %c0_1 = arith.constant 0 : index
    %c0_2 = arith.constant 0 : index
    %1 = vector.load %arg2[%c0_1, %c0_2] : memref<896x512xbf16, #tpu.memory_space<vmem>>, vector<896x512xbf16>
    %cst = arith.constant dense<0.000000e+00> : vector<16x512xf32>
    %2 = tpu.matmul %0, %1, %cst {dimension_numbers = #tpu.dot_dimension_numbers<[1], [0], [0], [1], [0, 0, 1, 1], [], []>} : vector<16x896xbf16>, vector<896x512xbf16>, vector<16x512xf32> -> vector<16x512xf32>
    %c0_3 = arith.constant 0 : index
    %c0_4 = arith.constant 0 : index
    %3 = vector.load %arg3[%c0_3, %c0_4] : memref<1x512xf32, #tpu.memory_space<vmem>>, vector<1x512xf32>
    %4 = vector.broadcast %3 : vector<1x512xf32> to vector<16x512xf32>
    %5 = arith.addf %2, %4 : vector<16x512xf32>
    %6 = arith.truncf %5 : vector<16x512xf32> to vector<16x512xbf16>
    %c0_5 = arith.constant 0 : index
    %c0_6 = arith.constant 0 : index
    %7 = vector.load %arg4[%c0_5, %c0_6] : memref<512x512xbf16, #tpu.memory_space<vmem>>, vector<512x512xbf16>
    %cst_7 = arith.constant dense<0.000000e+00> : vector<16x512xf32>
    %8 = tpu.matmul %6, %7, %cst_7 {dimension_numbers = #tpu.dot_dimension_numbers<[1], [0], [0], [1], [0, 0, 1, 1], [], []>} : vector<16x512xbf16>, vector<512x512xbf16>, vector<16x512xf32> -> vector<16x512xf32>
    %c0_8 = arith.constant 0 : index
    %c0_9 = arith.constant 0 : index
    %9 = vector.load %arg5[%c0_8, %c0_9] : memref<1x512xf32, #tpu.memory_space<vmem>>, vector<1x512xf32>
    %10 = vector.broadcast %9 : vector<1x512xf32> to vector<16x512xf32>
    %11 = arith.addf %8, %10 : vector<16x512xf32>
    %12 = arith.truncf %11 : vector<16x512xf32> to vector<16x512xbf16>
    %c0_10 = arith.constant 0 : index
    %c0_11 = arith.constant 0 : index
    %13 = vector.load %arg6[%c0_10, %c0_11] : memref<512x512xbf16, #tpu.memory_space<vmem>>, vector<512x512xbf16>
    %cst_12 = arith.constant dense<0.000000e+00> : vector<16x512xf32>
    %14 = tpu.matmul %12, %13, %cst_12 {dimension_numbers = #tpu.dot_dimension_numbers<[1], [0], [0], [1], [0, 0, 1, 1], [], []>} : vector<16x512xbf16>, vector<512x512xbf16>, vector<16x512xf32> -> vector<16x512xf32>
    %c0_13 = arith.constant 0 : index
    %c0_14 = arith.constant 0 : index
    %15 = vector.load %arg7[%c0_13, %c0_14] : memref<1x512xf32, #tpu.memory_space<vmem>>, vector<1x512xf32>
    %16 = vector.broadcast %15 : vector<1x512xf32> to vector<16x512xf32>
    %17 = arith.addf %14, %16 : vector<16x512xf32>
    %18 = arith.truncf %17 : vector<16x512xf32> to vector<16x512xbf16>
    %c0_15 = arith.constant 0 : index
    %c0_16 = arith.constant 0 : index
    %19 = vector.load %arg8[%c0_15, %c0_16] : memref<512x128xbf16, #tpu.memory_space<vmem>>, vector<512x128xbf16>
    %cst_17 = arith.constant dense<0.000000e+00> : vector<16x128xf32>
    %20 = tpu.matmul %18, %19, %cst_17 {dimension_numbers = #tpu.dot_dimension_numbers<[1], [0], [0], [1], [0, 0, 1, 1], [], []>} : vector<16x512xbf16>, vector<512x128xbf16>, vector<16x128xf32> -> vector<16x128xf32>
    %c0_18 = arith.constant 0 : index
    %c0_19 = arith.constant 0 : index
    %21 = vector.load %arg9[%c0_18, %c0_19] : memref<1x128xf32, #tpu.memory_space<vmem>>, vector<1x128xf32>
    %22 = vector.broadcast %21 : vector<1x128xf32> to vector<16x128xf32>
    %23 = arith.addf %20, %22 : vector<16x128xf32>
    %c0_20 = arith.constant 0 : index
    %c0_21 = arith.constant 0 : index
    %24 = vector.load %arg10[%c0_20, %c0_21] : memref<16x128xf32, #tpu.memory_space<vmem>>, vector<16x128xf32>
    tpu.vector_store %arg10[%c0_20, %c0_21], %23 {strides = array<i32>} : memref<16x128xf32, #tpu.memory_space<vmem>>, vector<16x128xf32>,
    return
  }
  func.func @transform_0(%arg0: i32) -> (i32, i32) {
    %c0_i32 = arith.constant 0 : i32
    %c0_i32_0 = arith.constant 0 : i32
    return %arg0, %c0_i32 : i32, i32
  }
  func.func @transform_1(%arg0: i32) -> (i32, i32) {
    %c0_i32 = arith.constant 0 : i32
    %c0_i32_0 = arith.constant 0 : i32
    %c0_i32_1 = arith.constant 0 : i32
    return %c0_i32, %c0_i32_0 : i32, i32
  }
  func.func @transform_2(%arg0: i32) -> (i32, i32) {
    %c0_i32 = arith.constant 0 : i32
    %c0_i32_0 = arith.constant 0 : i32
    %c0_i32_1 = arith.constant 0 : i32
    return %c0_i32, %c0_i32_0 : i32, i32
  }
  func.func @transform_3(%arg0: i32) -> (i32, i32) {
    %c0_i32 = arith.constant 0 : i32
    %c0_i32_0 = arith.constant 0 : i32
    %c0_i32_1 = arith.constant 0 : i32
    return %c0_i32, %c0_i32_0 : i32, i32
  }
  func.func @transform_4(%arg0: i32) -> (i32, i32) {
    %c0_i32 = arith.constant 0 : i32
    %c0_i32_0 = arith.constant 0 : i32
    %c0_i32_1 = arith.constant 0 : i32
    return %c0_i32, %c0_i32_0 : i32, i32
  }
  func.func @transform_5(%arg0: i32) -> (i32, i32) {
    %c0_i32 = arith.constant 0 : i32
    %c0_i32_0 = arith.constant 0 : i32
    %c0_i32_1 = arith.constant 0 : i32
    return %c0_i32, %c0_i32_0 : i32, i32
  }
  func.func @transform_6(%arg0: i32) -> (i32, i32) {
    %c0_i32 = arith.constant 0 : i32
    %c0_i32_0 = arith.constant 0 : i32
    %c0_i32_1 = arith.constant 0 : i32
    return %c0_i32, %c0_i32_0 : i32, i32
  }
  func.func @transform_7(%arg0: i32) -> (i32, i32) {
    %c0_i32 = arith.constant 0 : i32
    %c0_i32_0 = arith.constant 0 : i32
    %c0_i32_1 = arith.constant 0 : i32
    return %c0_i32, %c0_i32_0 : i32, i32
  }
  func.func @transform_8(%arg0: i32) -> (i32, i32) {
    %c0_i32 = arith.constant 0 : i32
    %c0_i32_0 = arith.constant 0 : i32
    %c0_i32_1 = arith.constant 0 : i32
    return %c0_i32, %c0_i32_0 : i32, i32
  }
  func.func @transform_9(%arg0: i32) -> (i32, i32) {
    %c0_i32 = arith.constant 0 : i32
    %c0_i32_0 = arith.constant 0 : i32
    return %arg0, %c0_i32 : i32, i32
  }
}

</mosaic_0001>

<llo_original>
// kernel: mlp_forward.1
$region0: #{mlp_forward.1}
  #allocation0 [shape = 'u32[]', space=smem, size = 0x4, offset = 0x4, fixed_abs, tag = 'smem constant byte address 0x4 - core index']
  #allocation1 [shape = 'u32[144,128]{1,0:T(1,128)}', space=vmem, size = 0x12000, scoped, tag = 'internal scratch']
  %s0 = inlined_call_operand.vmem [shape: bf16[16,896], index: 0, kind: input, shape index: {}]
  %s1 = inlined_call_operand.hbm [shape: bf16[896,512], index: 1, kind: input, shape index: {}]
  %s2 = inlined_call_operand.vmem [shape: f32[1,512], index: 2, kind: input, shape index: {}]
  %s3 = inlined_call_operand.hbm [shape: bf16[512,512], index: 3, kind: input, shape index: {}]
  %s4 = inlined_call_operand.vmem [shape: f32[1,512], index: 4, kind: input, shape index: {}]
  %s5 = inlined_call_operand.hbm [shape: bf16[512,512], index: 5, kind: input, shape index: {}]
  %s6 = inlined_call_operand.vmem [shape: f32[1,512], index: 6, kind: input, shape index: {}]
  %s7 = inlined_call_operand.hbm [shape: bf16[512,128], index: 7, kind: input, shape index: {}]
  %s8 = inlined_call_operand.vmem [shape: f32[1,128], index: 8, kind: input, shape index: {}]
  %s9 = inlined_call_operand.vmem [shape: f32[16,128], index: 9, kind: output, shape index: {}]
  %s10 = sld [smem:[#allocation0]]
  $region62: #{mlp_forward.1} parent=0
    _
  %s12 = ssub.s32 1, %s10
  %s13 = scalar_select 0, %s12, %s10
  $region1: #{mlp_forward.1} parent=0
    #allocation2 [shape = 'u8[917504]{0}', space=vmem, size = 0xe0000, scoped, tag = 'input window, operand 1, single buffered']
    #allocation3 [shape = 's32[1]{0}', space=sflag, size = 0x4, scoped, tag = 'scoped memory for mlp_forward.1']
    #allocation4 [shape = 'u8[524288]{0}', space=vmem, size = 0x80000, scoped, tag = 'input window, operand 3, single buffered']
    #allocation5 [shape = 's32[1]{0}', space=sflag, size = 0x4, scoped, tag = 'scoped memory for mlp_forward.1']
    #allocation6 [shape = 'u8[524288]{0}', space=vmem, size = 0x80000, scoped, tag = 'input window, operand 5, single buffered']
    #allocation7 [shape = 'u8[131072]{0}', space=vmem, size = 0x20000, scoped, tag = 'input window, operand 7, single buffered']
    #allocation8 [shape = 's32[1]{0}', space=sflag, size = 0x4, scoped, tag = 'scoped memory for mlp_forward.1']
    %14 = vsyncpa [#allocation3], 0
    %15 = vsyncpa [#allocation5], 0
    %16 = vsyncpa [#allocation8], 0
    // Predicated region
    $region2: #{mlp_forward.1} parent=1 // pred_check
      _
    $region3: #{mlp_forward.1} parent=1 // pred_check_branch
      %18 = sbr.rel (0) target = $region5
    $region4: #{mlp_forward.1} parent=1 // pred_region
      _
    $region5: #{mlp_forward.1} parent=1 // pred_fallthru
      _
    // Predicated region
    $region6: #{mlp_forward.1} parent=1 // pred_check
      _
    $region7: #{mlp_forward.1} parent=1 // pred_check_branch
      %20 = sbr.rel (0) target = $region9
    $region8: #{mlp_forward.1} parent=1 // pred_region
      %s22 = ssub.s32 28672, 28672
      %23 = vsyncadd [#allocation3], %s22
      %s24 = sshll.u32 [#allocation2], 4
      %s25 = int_to_ptr.vmem [resolvable:$true] %s24
      %30 = dma.hbm_to_vmem [thread:$0]  %s1, 28672, %s25, [#allocation3], 256, 256, 16
    $region9: #{mlp_forward.1} parent=1 // pred_fallthru
      _
    // Predicated region
    $region10: #{mlp_forward.1} parent=1 // pred_check
      _
    $region11: #{mlp_forward.1} parent=1 // pred_check_branch
      %32 = sbr.rel (0) target = $region13
    $region12: #{mlp_forward.1} parent=1 // pred_region
      _
    $region13: #{mlp_forward.1} parent=1 // pred_fallthru
      _
    // Predicated region
    $region14: #{mlp_forward.1} parent=1 // pred_check
      _
    $region15: #{mlp_forward.1} parent=1 // pred_check_branch
      %34 = sbr.rel (0) target = $region17
    $region16: #{mlp_forward.1} parent=1 // pred_region
      %s36 = ssub.s32 16384, 16384
      %37 = vsyncadd [#allocation5], %s36
      %s38 = sshll.u32 [#allocation4], 4
      %s39 = int_to_ptr.vmem [resolvable:$true] %s38
      %44 = dma.hbm_to_vmem [thread:$0]  %s3, 16384, %s39, [#allocation5], 256, 256, 16
    $region17: #{mlp_forward.1} parent=1 // pred_fallthru
      _
    // Predicated region
    $region18: #{mlp_forward.1} parent=1 // pred_check
      _
    $region19: #{mlp_forward.1} parent=1 // pred_check_branch
      %46 = sbr.rel (0) target = $region21
    $region20: #{mlp_forward.1} parent=1 // pred_region
      _
    $region21: #{mlp_forward.1} parent=1 // pred_fallthru
      _
    // Predicated region
    $region22: #{mlp_forward.1} parent=1 // pred_check
      _
    $region23: #{mlp_forward.1} parent=1 // pred_check_branch
      %48 = sbr.rel (0) target = $region25
    $region24: #{mlp_forward.1} parent=1 // pred_region
      %s50 = ssub.s32 16384, 16384
      %51 = vsyncadd [#allocation5], %s50
      %s52 = sshll.u32 [#allocation6], 4
      %s53 = int_to_ptr.vmem [resolvable:$true] %s52
      %58 = dma.hbm_to_vmem [thread:$0]  %s5, 16384, %s53, [#allocation5], 256, 256, 16
    $region25: #{mlp_forward.1} parent=1 // pred_fallthru
      _
    // Predicated region
    $region26: #{mlp_forward.1} parent=1 // pred_check
      _
    $region27: #{mlp_forward.1} parent=1 // pred_check_branch
      %60 = sbr.rel (0) target = $region29
    $region28: #{mlp_forward.1} parent=1 // pred_region
      _
    $region29: #{mlp_forward.1} parent=1 // pred_fallthru
      _
    // Predicated region
    $region30: #{mlp_forward.1} parent=1 // pred_check
      _
    $region31: #{mlp_forward.1} parent=1 // pred_check_branch
      %62 = sbr.rel (0) target = $region33
    $region32: #{mlp_forward.1} parent=1 // pred_region
      %s64 = ssub.s32 4096, 4096
      %65 = vsyncadd [#allocation8], %s64
      %s66 = sshll.u32 [#allocation7], 4
      %s67 = int_to_ptr.vmem [resolvable:$true] %s66
      %72 = dma.hbm_to_vmem [thread:$0]  %s7, 4096, %s67, [#allocation8], 64, 64, 4
    $region33: #{mlp_forward.1} parent=1 // pred_fallthru
      _
    // Predicated region
    $region34: #{mlp_forward.1} parent=1 // pred_check
      _
    $region35: #{mlp_forward.1} parent=1 // pred_check_branch
      %74 = sbr.rel (0) target = $region37
    $region36: #{mlp_forward.1} parent=1 // pred_region
      _
    $region37: #{mlp_forward.1} parent=1 // pred_fallthru
      _
    // Predicated region
    $region38: #{mlp_forward.1} parent=1 // pred_check
      _
    $region39: #{mlp_forward.1} parent=1 // pred_check_branch
      %76 = sbr.rel (0) target = $region41
    $region40: #{mlp_forward.1} parent=1 // pred_region
      %77 = dma.done [#allocation3], 28672
    $region41: #{mlp_forward.1} parent=1 // pred_fallthru
      _
    // Predicated region
    $region42: #{mlp_forward.1} parent=1 // pred_check
      _
    $region43: #{mlp_forward.1} parent=1 // pred_check_branch
      %79 = sbr.rel (0) target = $region45
    $region44: #{mlp_forward.1} parent=1 // pred_region
      %80 = dma.done [#allocation5], 16384
    $region45: #{mlp_forward.1} parent=1 // pred_fallthru
      _
    // Predicated region
    $region46: #{mlp_forward.1} parent=1 // pred_check
      _
    $region47: #{mlp_forward.1} parent=1 // pred_check_branch
      %82 = sbr.rel (0) target = $region49
    $region48: #{mlp_forward.1} parent=1 // pred_region
      %83 = dma.done [#allocation5], 16384
    $region49: #{mlp_forward.1} parent=1 // pred_fallthru
      _
    // Predicated region
    $region50: #{mlp_forward.1} parent=1 // pred_check
      _
    $region51: #{mlp_forward.1} parent=1 // pred_check_branch
      %85 = sbr.rel (0) target = $region53
    $region52: #{mlp_forward.1} parent=1 // pred_region
      %86 = dma.done [#allocation8], 4096
    $region53: #{mlp_forward.1} parent=1 // pred_fallthru
      _
    %v88 = vld [vmem:[%s0] sm:$0xff]
    %v89 = vld [vmem:[%s0 + $0x8] sm:$0xff]
    %v90 = vld [vmem:[%s0 + $0x10] sm:$0xff]
    %v91 = vld [vmem:[%s0 + $0x18] sm:$0xf]
    %v92 = vld [vmem:[%s0 + $0x1c] sm:$0xff]
    %v93 = vld [vmem:[%s0 + $0x24] sm:$0xff]
    %v94 = vld [vmem:[%s0 + $0x2c] sm:$0xff]
    %v95 = vld [vmem:[%s0 + $0x34] sm:$0xf]
    %v96 = vld [vmem:[#allocation2] sm:$0xff]
    %v97 = vld [vmem:[#allocation2 + $0x8] sm:$0xff]
    %v98 = vld [vmem:[#allocation2 + $0x10] sm:$0xff]
    %v99 = vld [vmem:[#allocation2 + $0x18] sm:$0xff]
    %v100 = vld [vmem:[#allocation2 + $0x20] sm:$0xff]
    %v101 = vld [vmem:[#allocation2 + $0x28] sm:$0xff]
    %v102 = vld [vmem:[#allocation2 + $0x30] sm:$0xff]
    %v103 = vld [vmem:[#allocation2 + $0x38] sm:$0xff]
    %v104 = vld [vmem:[#allocation2 + $0x40] sm:$0xff]
    %v105 = vld [vmem:[#allocation2 + $0x48] sm:$0xff]
    %v106 = vld [vmem:[#allocation2 + $0x50] sm:$0xff]
    %v107 = vld [vmem:[#allocation2 + $0x58] sm:$0xff]
    %v108 = vld [vmem:[#allocation2 + $0x60] sm:$0xff]
    %v109 = vld [vmem:[#allocation2 + $0x68] sm:$0xff]
    %v110 = vld [vmem:[#allocation2 + $0x70] sm:$0xff]
    %v111 = vld [vmem:[#allocation2 + $0x78] sm:$0xff]
    %v112 = vld [vmem:[#allocation2 + $0x80] sm:$0xff]
    %v113 = vld [vmem:[#allocation2 + $0x88] sm:$0xff]
    %v114 = vld [vmem:[#allocation2 + $0x90] sm:$0xff]
    %v115 = vld [vmem:[#allocation2 + $0x98] sm:$0xff]
    %v116 = vld [vmem:[#allocation2 + $0xa0] sm:$0xff]
    %v117 = vld [vmem:[#allocation2 + $0xa8] sm:$0xff]
    %v118 = vld [vmem:[#allocation2 + $0xb0] sm:$0xff]
    %v119 = vld [vmem:[#allocation2 + $0xb8] sm:$0xff]
    %v120 = vld [vmem:[#allocation2 + $0xc0] sm:$0xff]
    %v121 = vld [vmem:[#allocation2 + $0xc8] sm:$0xff]
    %v122 = vld [vmem:[#allocation2 + $0xd0] sm:$0xff]
    %v123 = vld [vmem:[#allocation2 + $0xd8] sm:$0xff]
    %v124 = vld [vmem:[#allocation2 + $0xe0] sm:$0xff]
    %v125 = vld [vmem:[#allocation2 + $0xe8] sm:$0xff]
    %v126 = vld [vmem:[#allocation2 + $0xf0] sm:$0xff]
    %v127 = vld [vmem:[#allocation2 + $0xf8] sm:$0xff]
    %v128 = vld [vmem:[#allocation2 + $0x100] sm:$0xff]
    %v129 = vld [vmem:[#allocation2 + $0x108] sm:$0xff]
    %v130 = vld [vmem:[#allocation2 + $0x110] sm:$0xff]
    %v131 = vld [vmem:[#allocation2 + $0x118] sm:$0xff]
    %v132 = vld [vmem:[#allocation2 + $0x120] sm:$0xff]
    %v133 = vld [vmem:[#allocation2 + $0x128] sm:$0xff]
    %v134 = vld [vmem:[#allocation2 + $0x130] sm:$0xff]
    %v135 = vld [vmem:[#allocation2 + $0x138] sm:$0xff]
    %v136 = vld [vmem:[#allocation2 + $0x140] sm:$0xff]
    %v137 = vld [vmem:[#allocation2 + $0x148] sm:$0xff]
    %v138 = vld [vmem:[#allocation2 + $0x150] sm:$0xff]
    %v139 = vld [vmem:[#allocation2 + $0x158] sm:$0xff]
    %v140 = vld [vmem:[#allocation2 + $0x160] sm:$0xff]
    %v141 = vld [vmem:[#allocation2 + $0x168] sm:$0xff]
    %v142 = vld [vmem:[#allocation2 + $0x170] sm:$0xff]
    %v143 = vld [vmem:[#allocation2 + $0x178] sm:$0xff]
    %v144 = vld [vmem:[#allocation2 + $0x180] sm:$0xff]
    %v145 = vld [vmem:[#allocation2 + $0x188] sm:$0xff]
    %v146 = vld [vmem:[#allocation2 + $0x190] sm:$0xff]
    %v147 = vld [vmem:[#allocation2 + $0x198] sm:$0xff]
    %v148 = vld [vmem:[#allocation2 + $0x1a0] sm:$0xff]
    %v149 = vld [vmem:[#allocation2 + $0x1a8] sm:$0xff]
    %v150 = vld [vmem:[#allocation2 + $0x1b0] sm:$0xff]
    %v151 = vld [vmem:[#allocation2 + $0x1b8] sm:$0xff]
    %v152 = vld [vmem:[#allocation2 + $0x1c0] sm:$0xff]
    %v153 = vld [vmem:[#allocation2 + $0x1c8] sm:$0xff]
    %v154 = vld [vmem:[#allocation2 + $0x1d0] sm:$0xff]
    %v155 = vld [vmem:[#allocation2 + $0x1d8] sm:$0xff]
    %v156 = vld [vmem:[#allocation2 + $0x1e0] sm:$0xff]
    %v157 = vld [vmem:[#allocation2 + $0x1e8] sm:$0xff]
    %v158 = vld [vmem:[#allocation2 + $0x1f0] sm:$0xff]
    %v159 = vld [vmem:[#allocation2 + $0x1f8] sm:$0xff]
    %v160 = vld [vmem:[#allocation2 + $0x200] sm:$0xff]
    %v161 = vld [vmem:[#allocation2 + $0x208] sm:$0xff]
    %v162 = vld [vmem:[#allocation2 + $0x210] sm:$0xff]
    %v163 = vld [vmem:[#allocation2 + $0x218] sm:$0xff]
    %v164 = vld [vmem:[#allocation2 + $0x220] sm:$0xff]
    %v165 = vld [vmem:[#allocation2 + $0x228] sm:$0xff]
    %v166 = vld [vmem:[#allocation2 + $0x230] sm:$0xff]
    %v167 = vld [vmem:[#allocation2 + $0x238] sm:$0xff]
    %v168 = vld [vmem:[#allocation2 + $0x240] sm:$0xff]
    %v169 = vld [vmem:[#allocation2 + $0x248] sm:$0xff]
    %v170 = vld [vmem:[#allocation2 + $0x250] sm:$0xff]
    %v171 = vld [vmem:[#allocation2 + $0x258] sm:$0xff]
    %v172 = vld [vmem:[#allocation2 + $0x260] sm:$0xff]
    %v173 = vld [vmem:[#allocation2 + $0x268] sm:$0xff]
    %v174 = vld [vmem:[#allocation2 + $0x270] sm:$0xff]
    %v175 = vld [vmem:[#allocation2 + $0x278] sm:$0xff]
    %v176 = vld [vmem:[#allocation2 + $0x280] sm:$0xff]
    %v177 = vld [vmem:[#allocation2 + $0x288] sm:$0xff]
    %v178 = vld [vmem:[#allocation2 + $0x290] sm:$0xff]
    %v179 = vld [vmem:[#allocation2 + $0x298] sm:$0xff]
    %v180 = vld [vmem:[#allocation2 + $0x2a0] sm:$0xff]
    %v181 = vld [vmem:[#allocation2 + $0x2a8] sm:$0xff]
    %v182 = vld [vmem:[#allocation2 + $0x2b0] sm:$0xff]
    %v183 = vld [vmem:[#allocation2 + $0x2b8] sm:$0xff]
    %v184 = vld [vmem:[#allocation2 + $0x2c0] sm:$0xff]
    %v185 = vld [vmem:[#allocation2 + $0x2c8] sm:$0xff]
    %v186 = vld [vmem:[#allocation2 + $0x2d0] sm:$0xff]
    %v187 = vld [vmem:[#allocation2 + $0x2d8] sm:$0xff]
    %v188 = vld [vmem:[#allocation2 + $0x2e0] sm:$0xff]
    %v189 = vld [vmem:[#allocation2 + $0x2e8] sm:$0xff]
    %v190 = vld [vmem:[#allocation2 + $0x2f0] sm:$0xff]
    %v191 = vld [vmem:[#allocation2 + $0x2f8] sm:$0xff]
    %v192 = vld [vmem:[#allocation2 + $0x300] sm:$0xff]
    %v193 = vld [vmem:[#allocation2 + $0x308] sm:$0xff]
    %v194 = vld [vmem:[#allocation2 + $0x310] sm:$0xff]
    %v195 = vld [vmem:[#allocation2 + $0x318] sm:$0xff]
    %v196 = vld [vmem:[#allocation2 + $0x320] sm:$0xff]
    %v197 = vld [vmem:[#allocation2 + $0x328] sm:$0xff]
    %v198 = vld [vmem:[#allocation2 + $0x330] sm:$0xff]
    %v199 = vld [vmem:[#allocation2 + $0x338] sm:$0xff]
    %v200 = vld [vmem:[#allocation2 + $0x340] sm:$0xff]
    %v201 = vld [vmem:[#allocation2 + $0x348] sm:$0xff]
    %v202 = vld [vmem:[#allocation2 + $0x350] sm:$0xff]
    %v203 = vld [vmem:[#allocation2 + $0x358] sm:$0xff]
    %v204 = vld [vmem:[#allocation2 + $0x360] sm:$0xff]
    %v205 = vld [vmem:[#allocation2 + $0x368] sm:$0xff]
    %v206 = vld [vmem:[#allocation2 + $0x370] sm:$0xff]
    %v207 = vld [vmem:[#allocation2 + $0x378] sm:$0xff]
    %v208 = vld [vmem:[#allocation2 + $0x380] sm:$0xff]
    %v209 = vld [vmem:[#allocation2 + $0x388] sm:$0xff]
    %v210 = vld [vmem:[#allocation2 + $0x390] sm:$0xff]
    %v211 = vld [vmem:[#allocation2 + $0x398] sm:$0xff]
    %v212 = vld [vmem:[#allocation2 + $0x3a0] sm:$0xff]
    %v213 = vld [vmem:[#allocation2 + $0x3a8] sm:$0xff]
    %v214 = vld [vmem:[#allocation2 + $0x3b0] sm:$0xff]
    %v215 = vld [vmem:[#allocation2 + $0x3b8] sm:$0xff]
    %v216 = vld [vmem:[#allocation2 + $0x3c0] sm:$0xff]
    %v217 = vld [vmem:[#allocation2 + $0x3c8] sm:$0xff]
    %v218 = vld [vmem:[#allocation2 + $0x3d0] sm:$0xff]
    %v219 = vld [vmem:[#allocation2 + $0x3d8] sm:$0xff]
    %v220 = vld [vmem:[#allocation2 + $0x3e0] sm:$0xff]
    %v221 = vld [vmem:[#allocation2 + $0x3e8] sm:$0xff]
    %v222 = vld [vmem:[#allocation2 + $0x3f0] sm:$0xff]
    %v223 = vld [vmem:[#allocation2 + $0x3f8] sm:$0xff]
    %v224 = vld [vmem:[#allocation2 + $0x400] sm:$0xff]
    %v225 = vld [vmem:[#allocation2 + $0x408] sm:$0xff]
    %v226 = vld [vmem:[#allocation2 + $0x410] sm:$0xff]
    %v227 = vld [vmem:[#allocation2 + $0x418] sm:$0xff]
    %v228 = vld [vmem:[#allocation2 + $0x420] sm:$0xff]
    %v229 = vld [vmem:[#allocation2 + $0x428] sm:$0xff]
    %v230 = vld [vmem:[#allocation2 + $0x430] sm:$0xff]
    %v231 = vld [vmem:[#allocation2 + $0x438] sm:$0xff]
    %v232 = vld [vmem:[#allocation2 + $0x440] sm:$0xff]
    %v233 = vld [vmem:[#allocation2 + $0x448] sm:$0xff]
    %v234 = vld [vmem:[#allocation2 + $0x450] sm:$0xff]
    %v235 = vld [vmem:[#allocation2 + $0x458] sm:$0xff]
    %v236 = vld [vmem:[#allocation2 + $0x460] sm:$0xff]
    %v237 = vld [vmem:[#allocation2 + $0x468] sm:$0xff]
    %v238 = vld [vmem:[#allocation2 + $0x470] sm:$0xff]
    %v239 = vld [vmem:[#allocation2 + $0x478] sm:$0xff]
    %v240 = vld [vmem:[#allocation2 + $0x480] sm:$0xff]
    %v241 = vld [vmem:[#allocation2 + $0x488] sm:$0xff]
    %v242 = vld [vmem:[#allocation2 + $0x490] sm:$0xff]
    %v243 = vld [vmem:[#allocation2 + $0x498] sm:$0xff]
    %v244 = vld [vmem:[#allocation2 + $0x4a0] sm:$0xff]
    %v245 = vld [vmem:[#allocation2 + $0x4a8] sm:$0xff]
    %v246 = vld [vmem:[#allocation2 + $0x4b0] sm:$0xff]
    %v247 = vld [vmem:[#allocation2 + $0x4b8] sm:$0xff]
    %v248 = vld [vmem:[#allocation2 + $0x4c0] sm:$0xff]
    %v249 = vld [vmem:[#allocation2 + $0x4c8] sm:$0xff]
    %v250 = vld [vmem:[#allocation2 + $0x4d0] sm:$0xff]
    %v251 = vld [vmem:[#allocation2 + $0x4d8] sm:$0xff]
    %v252 = vld [vmem:[#allocation2 + $0x4e0] sm:$0xff]
    %v253 = vld [vmem:[#allocation2 + $0x4e8] sm:$0xff]
    %v254 = vld [vmem:[#allocation2 + $0x4f0] sm:$0xff]
    %v255 = vld [vmem:[#allocation2 + $0x4f8] sm:$0xff]
    %v256 = vld [vmem:[#allocation2 + $0x500] sm:$0xff]
    %v257 = vld [vmem:[#allocation2 + $0x508] sm:$0xff]
    %v258 = vld [vmem:[#allocation2 + $0x510] sm:$0xff]
    %v259 = vld [vmem:[#allocation2 + $0x518] sm:$0xff]
    %v260 = vld [vmem:[#allocation2 + $0x520] sm:$0xff]
    %v261 = vld [vmem:[#allocation2 + $0x528] sm:$0xff]
    %v262 = vld [vmem:[#allocation2 + $0x530] sm:$0xff]
    %v263 = vld [vmem:[#allocation2 + $0x538] sm:$0xff]
    %v264 = vld [vmem:[#allocation2 + $0x540] sm:$0xff]
    %v265 = vld [vmem:[#allocation2 + $0x548] sm:$0xff]
    %v266 = vld [vmem:[#allocation2 + $0x550] sm:$0xff]
    %v267 = vld [vmem:[#allocation2 + $0x558] sm:$0xff]
    %v268 = vld [vmem:[#allocation2 + $0x560] sm:$0xff]
    %v269 = vld [vmem:[#allocation2 + $0x568] sm:$0xff]
    %v270 = vld [vmem:[#allocation2 + $0x570] sm:$0xff]
    %v271 = vld [vmem:[#allocation2 + $0x578] sm:$0xff]
    %v272 = vld [vmem:[#allocation2 + $0x580] sm:$0xff]
    %v273 = vld [vmem:[#allocation2 + $0x588] sm:$0xff]
    %v274 = vld [vmem:[#allocation2 + $0x590] sm:$0xff]
    %v275 = vld [vmem:[#allocation2 + $0x598] sm:$0xff]
    %v276 = vld [vmem:[#allocation2 + $0x5a0] sm:$0xff]
    %v277 = vld [vmem:[#allocation2 + $0x5a8] sm:$0xff]
    %v278 = vld [vmem:[#allocation2 + $0x5b0] sm:$0xff]
    %v279 = vld [vmem:[#allocation2 + $0x5b8] sm:$0xff]
    %v280 = vld [vmem:[#allocation2 + $0x5c0] sm:$0xff]
    %v281 = vld [vmem:[#allocation2 + $0x5c8] sm:$0xff]
    %v282 = vld [vmem:[#allocation2 + $0x5d0] sm:$0xff]
    %v283 = vld [vmem:[#allocation2 + $0x5d8] sm:$0xff]
    %v284 = vld [vmem:[#allocation2 + $0x5e0] sm:$0xff]
    %v285 = vld [vmem:[#allocation2 + $0x5e8] sm:$0xff]
    %v286 = vld [vmem:[#allocation2 + $0x5f0] sm:$0xff]
    %v287 = vld [vmem:[#allocation2 + $0x5f8] sm:$0xff]
    %v288 = vld [vmem:[#allocation2 + $0x600] sm:$0xff]
    %v289 = vld [vmem:[#allocation2 + $0x608] sm:$0xff]
    %v290 = vld [vmem:[#allocation2 + $0x610] sm:$0xff]
    %v291 = vld [vmem:[#allocation2 + $0x618] sm:$0xff]
    %v292 = vld [vmem:[#allocation2 + $0x620] sm:$0xff]
    %v293 = vld [vmem:[#allocation2 + $0x628] sm:$0xff]
    %v294 = vld [vmem:[#allocation2 + $0x630] sm:$0xff]
    %v295 = vld [vmem:[#allocation2 + $0x638] sm:$0xff]
    %v296 = vld [vmem:[#allocation2 + $0x640] sm:$0xff]
    %v297 = vld [vmem:[#allocation2 + $0x648] sm:$0xff]
    %v298 = vld [vmem:[#allocation2 + $0x650] sm:$0xff]
    %v299 = vld [vmem:[#allocation2 + $0x658] sm:$0xff]
    %v300 = vld [vmem:[#allocation2 + $0x660] sm:$0xff]
    %v301 = vld [vmem:[#allocation2 + $0x668] sm:$0xff]
    %v302 = vld [vmem:[#allocation2 + $0x670] sm:$0xff]
    %v303 = vld [vmem:[#allocation2 + $0x678] sm:$0xff]
    %v304 = vld [vmem:[#allocation2 + $0x680] sm:$0xff]
    %v305 = vld [vmem:[#allocation2 + $0x688] sm:$0xff]
    %v306 = vld [vmem:[#allocation2 + $0x690] sm:$0xff]
    %v307 = vld [vmem:[#allocation2 + $0x698] sm:$0xff]
    %v308 = vld [vmem:[#allocation2 + $0x6a0] sm:$0xff]
    %v309 = vld [vmem:[#allocation2 + $0x6a8] sm:$0xff]
    %v310 = vld [vmem:[#allocation2 + $0x6b0] sm:$0xff]
    %v311 = vld [vmem:[#allocation2 + $0x6b8] sm:$0xff]
    %v312 = vld [vmem:[#allocation2 + $0x6c0] sm:$0xff]
    %v313 = vld [vmem:[#allocation2 + $0x6c8] sm:$0xff]
    %v314 = vld [vmem:[#allocation2 + $0x6d0] sm:$0xff]
    %v315 = vld [vmem:[#allocation2 + $0x6d8] sm:$0xff]
    %v316 = vld [vmem:[#allocation2 + $0x6e0] sm:$0xff]
    %v317 = vld [vmem:[#allocation2 + $0x6e8] sm:$0xff]
    %v318 = vld [vmem:[#allocation2 + $0x6f0] sm:$0xff]
    %v319 = vld [vmem:[#allocation2 + $0x6f8] sm:$0xff]
    %v320 = vld [vmem:[%s2] sm:$0xf]
    %v322 = vlaneseq
    %v323 = vshrl.u32 %v322, 7
    %v324 = vsub.s32 0, %v323
    %v325 = vrot.slane %v320, %v324
    %v326 = vlaneseq
    %v327 = vshrl.u32 %v326, 7
    %v328 = vsub.s32 1, %v327
    %v329 = vrot.slane %v320, %v328
    %v330 = vlaneseq
    %v331 = vshrl.u32 %v330, 7
    %v332 = vsub.s32 2, %v331
    %v333 = vrot.slane %v320, %v332
    %v334 = vlaneseq
    %v335 = vshrl.u32 %v334, 7
    %v336 = vsub.s32 3, %v335
    %v337 = vrot.slane %v320, %v336
    %v350 = vunpack.c.l.b16 %v88
    %v351 = vunpack.c.h.b16 %v88
    %v352 = vunpack.c.l.b16 %v89
    %v353 = vunpack.c.h.b16 %v89
    %v354 = vunpack.c.l.b16 %v90
    %v355 = vunpack.c.h.b16 %v90
    %v356 = vunpack.c.l.b16 %v91
    %v357 = vunpack.c.l.b16 %v92
    %v358 = vunpack.c.h.b16 %v92
    %v359 = vunpack.c.l.b16 %v93
    %v360 = vunpack.c.h.b16 %v93
    %v361 = vunpack.c.l.b16 %v94
    %v362 = vunpack.c.h.b16 %v94
    %v363 = vunpack.c.l.b16 %v95
    %v364 = vpack.c.b16 %v357, %v350
    %v365 = vpack.c.b16 %v358, %v351
    %v366 = vpack.c.b16 %v359, %v352
    %v367 = vpack.c.b16 %v360, %v353
    %v368 = vpack.c.b16 %v361, %v354
    %v369 = vpack.c.b16 %v362, %v355
    %v370 = vpack.c.b16 %v363, %v356
    %v602 = vunpack.c.l.b16 %v96
    %v603 = vunpack.c.h.b16 %v96
    %v604 = vunpack.c.l.b16 %v97
    %v605 = vunpack.c.h.b16 %v97
    %v606 = vunpack.c.l.b16 %v98
    %v607 = vunpack.c.h.b16 %v98
    %v608 = vunpack.c.l.b16 %v99
    %v609 = vunpack.c.h.b16 %v99
    %v610 = vunpack.c.l.b16 %v100
    %v611 = vunpack.c.h.b16 %v100
    %v612 = vunpack.c.l.b16 %v101
    %v613 = vunpack.c.h.b16 %v101
    %v614 = vunpack.c.l.b16 %v102
    %v615 = vunpack.c.h.b16 %v102
    %v616 = vunpack.c.l.b16 %v103
    %v617 = vunpack.c.h.b16 %v103
    %v618 = vunpack.c.l.b16 %v104
    %v619 = vunpack.c.h.b16 %v104
    %v620 = vunpack.c.l.b16 %v105
    %v621 = vunpack.c.h.b16 %v105
    %v622 = vunpack.c.l.b16 %v106
    %v623 = vunpack.c.h.b16 %v106
    %v624 = vunpack.c.l.b16 %v107
    %v625 = vunpack.c.h.b16 %v107
    %v626 = vunpack.c.l.b16 %v108
    %v627 = vunpack.c.h.b16 %v108
    %v628 = vunpack.c.l.b16 %v109
    %v629 = vunpack.c.h.b16 %v109
    %v630 = vunpack.c.l.b16 %v110
    %v631 = vunpack.c.h.b16 %v110
    %v632 = vunpack.c.l.b16 %v111
    %v633 = vunpack.c.h.b16 %v111
    %v634 = vunpack.c.l.b16 %v112
    %v635 = vunpack.c.h.b16 %v112
    %v636 = vunpack.c.l.b16 %v113
    %v637 = vunpack.c.h.b16 %v113
    %v638 = vunpack.c.l.b16 %v114
    %v639 = vunpack.c.h.b16 %v114
    %v640 = vunpack.c.l.b16 %v115
    %v641 = vunpack.c.h.b16 %v115
    %v642 = vunpack.c.l.b16 %v116
    %v643 = vunpack.c.h.b16 %v116
    %v644 = vunpack.c.l.b16 %v117
    %v645 = vunpack.c.h.b16 %v117
    %v646 = vunpack.c.l.b16 %v118
    %v647 = vunpack.c.h.b16 %v118
    %v648 = vunpack.c.l.b16 %v119
    %v649 = vunpack.c.h.b16 %v119
    %v650 = vunpack.c.l.b16 %v120
    %v651 = vunpack.c.h.b16 %v120
    %v652 = vunpack.c.l.b16 %v121
    %v653 = vunpack.c.h.b16 %v121
    %v654 = vunpack.c.l.b16 %v122
    %v655 = vunpack.c.h.b16 %v122
    %v656 = vunpack.c.l.b16 %v123
    %v657 = vunpack.c.h.b16 %v123
    %v658 = vunpack.c.l.b16 %v124
    %v659 = vunpack.c.h.b16 %v124
    %v660 = vunpack.c.l.b16 %v125
    %v661 = vunpack.c.h.b16 %v125
    %v662 = vunpack.c.l.b16 %v126
    %v663 = vunpack.c.h.b16 %v126
    %v664 = vunpack.c.l.b16 %v127
    %v665 = vunpack.c.h.b16 %v127
    %v666 = vunpack.c.l.b16 %v128
    %v667 = vunpack.c.h.b16 %v128
    %v668 = vunpack.c.l.b16 %v129
    %v669 = vunpack.c.h.b16 %v129
    %v670 = vunpack.c.l.b16 %v130
    %v671 = vunpack.c.h.b16 %v130
    %v672 = vunpack.c.l.b16 %v131
    %v673 = vunpack.c.h.b16 %v131
    %v674 = vunpack.c.l.b16 %v132
    %v675 = vunpack.c.h.b16 %v132
    %v676 = vunpack.c.l.b16 %v133
    %v677 = vunpack.c.h.b16 %v133
    %v678 = vunpack.c.l.b16 %v134
    %v679 = vunpack.c.h.b16 %v134
    %v680 = vunpack.c.l.b16 %v135
    %v681 = vunpack.c.h.b16 %v135
    %v682 = vunpack.c.l.b16 %v136
    %v683 = vunpack.c.h.b16 %v136
    %v684 = vunpack.c.l.b16 %v137
    %v685 = vunpack.c.h.b16 %v137
    %v686 = vunpack.c.l.b16 %v138
    %v687 = vunpack.c.h.b16 %v138
    %v688 = vunpack.c.l.b16 %v139
    %v689 = vunpack.c.h.b16 %v139
    %v690 = vunpack.c.l.b16 %v140
    %v691 = vunpack.c.h.b16 %v140
    %v692 = vunpack.c.l.b16 %v141
    %v693 = vunpack.c.h.b16 %v141
    %v694 = vunpack.c.l.b16 %v142
    %v695 = vunpack.c.h.b16 %v142
    %v696 = vunpack.c.l.b16 %v143
    %v697 = vunpack.c.h.b16 %v143
    %v698 = vunpack.c.l.b16 %v144
    %v699 = vunpack.c.h.b16 %v144
    %v700 = vunpack.c.l.b16 %v145
    %v701 = vunpack.c.h.b16 %v145
    %v702 = vunpack.c.l.b16 %v146
    %v703 = vunpack.c.h.b16 %v146
    %v704 = vunpack.c.l.b16 %v147
    %v705 = vunpack.c.h.b16 %v147
    %v706 = vunpack.c.l.b16 %v148
    %v707 = vunpack.c.h.b16 %v148
    %v708 = vunpack.c.l.b16 %v149
    %v709 = vunpack.c.h.b16 %v149
    %v710 = vunpack.c.l.b16 %v150
    %v711 = vunpack.c.h.b16 %v150
    %v712 = vunpack.c.l.b16 %v151
    %v713 = vunpack.c.h.b16 %v151
    %v714 = vunpack.c.l.b16 %v152
    %v715 = vunpack.c.h.b16 %v152
    %v716 = vunpack.c.l.b16 %v153
    %v717 = vunpack.c.h.b16 %v153
    %v718 = vunpack.c.l.b16 %v154
    %v719 = vunpack.c.h.b16 %v154
    %v720 = vunpack.c.l.b16 %v155
    %v721 = vunpack.c.h.b16 %v155
    %v722 = vunpack.c.l.b16 %v156
    %v723 = vunpack.c.h.b16 %v156
    %v724 = vunpack.c.l.b16 %v157
    %v725 = vunpack.c.h.b16 %v157
    %v726 = vunpack.c.l.b16 %v158
    %v727 = vunpack.c.h.b16 %v158
    %v728 = vunpack.c.l.b16 %v159
    %v729 = vunpack.c.h.b16 %v159
    %v730 = vunpack.c.l.b16 %v160
    %v731 = vunpack.c.h.b16 %v160
    %v732 = vunpack.c.l.b16 %v161
    %v733 = vunpack.c.h.b16 %v161
    %v734 = vunpack.c.l.b16 %v162
    %v735 = vunpack.c.h.b16 %v162
    %v736 = vunpack.c.l.b16 %v163
    %v737 = vunpack.c.h.b16 %v163
    %v738 = vunpack.c.l.b16 %v164
    %v739 = vunpack.c.h.b16 %v164
    %v740 = vunpack.c.l.b16 %v165
    %v741 = vunpack.c.h.b16 %v165
    %v742 = vunpack.c.l.b16 %v166
    %v743 = vunpack.c.h.b16 %v166
    %v744 = vunpack.c.l.b16 %v167
    %v745 = vunpack.c.h.b16 %v167
    %v746 = vunpack.c.l.b16 %v168
    %v747 = vunpack.c.h.b16 %v168
    %v748 = vunpack.c.l.b16 %v169
    %v749 = vunpack.c.h.b16 %v169
    %v750 = vunpack.c.l.b16 %v170
    %v751 = vunpack.c.h.b16 %v170
    %v752 = vunpack.c.l.b16 %v171
    %v753 = vunpack.c.h.b16 %v171
    %v754 = vunpack.c.l.b16 %v172
    %v755 = vunpack.c.h.b16 %v172
    %v756 = vunpack.c.l.b16 %v173
    %v757 = vunpack.c.h.b16 %v173
    %v758 = vunpack.c.l.b16 %v174
    %v759 = vunpack.c.h.b16 %v174
    %v760 = vunpack.c.l.b16 %v175
    %v761 = vunpack.c.h.b16 %v175
    %v762 = vunpack.c.l.b16 %v176
    %v763 = vunpack.c.h.b16 %v176
    %v764 = vunpack.c.l.b16 %v177
    %v765 = vunpack.c.h.b16 %v177
    %v766 = vunpack.c.l.b16 %v178
    %v767 = vunpack.c.h.b16 %v178
    %v768 = vunpack.c.l.b16 %v179
    %v769 = vunpack.c.h.b16 %v179
    %v770 = vunpack.c.l.b16 %v180
    %v771 = vunpack.c.h.b16 %v180
    %v772 = vunpack.c.l.b16 %v181
    %v773 = vunpack.c.h.b16 %v181
    %v774 = vunpack.c.l.b16 %v182
    %v775 = vunpack.c.h.b16 %v182
    %v776 = vunpack.c.l.b16 %v183
    %v777 = vunpack.c.h.b16 %v183
    %v778 = vunpack.c.l.b16 %v184
    %v779 = vunpack.c.h.b16 %v184
    %v780 = vunpack.c.l.b16 %v185
    %v781 = vunpack.c.h.b16 %v185
    %v782 = vunpack.c.l.b16 %v186
    %v783 = vunpack.c.h.b16 %v186
    %v784 = vunpack.c.l.b16 %v187
    %v785 = vunpack.c.h.b16 %v187
    %v786 = vunpack.c.l.b16 %v188
    %v787 = vunpack.c.h.b16 %v188
    %v788 = vunpack.c.l.b16 %v189
    %v789 = vunpack.c.h.b16 %v189
    %v790 = vunpack.c.l.b16 %v190
    %v791 = vunpack.c.h.b16 %v190
    %v792 = vunpack.c.l.b16 %v191
    %v793 = vunpack.c.h.b16 %v191
    %v794 = vunpack.c.l.b16 %v192
    %v795 = vunpack.c.h.b16 %v192
    %v796 = vunpack.c.l.b16 %v193
    %v797 = vunpack.c.h.b16 %v193
    %v798 = vunpack.c.l.b16 %v194
    %v799 = vunpack.c.h.b16 %v194
    %v800 = vunpack.c.l.b16 %v195
    %v801 = vunpack.c.h.b16 %v195
    %v802 = vunpack.c.l.b16 %v196
    %v803 = vunpack.c.h.b16 %v196
    %v804 = vunpack.c.l.b16 %v197
    %v805 = vunpack.c.h.b16 %v197
    %v806 = vunpack.c.l.b16 %v198
    %v807 = vunpack.c.h.b16 %v198
    %v808 = vunpack.c.l.b16 %v199
    %v809 = vunpack.c.h.b16 %v199
    %v810 = vunpack.c.l.b16 %v200
    %v811 = vunpack.c.h.b16 %v200
    %v812 = vunpack.c.l.b16 %v201
    %v813 = vunpack.c.h.b16 %v201
    %v814 = vunpack.c.l.b16 %v202
    %v815 = vunpack.c.h.b16 %v202
    %v816 = vunpack.c.l.b16 %v203
    %v817 = vunpack.c.h.b16 %v203
    %v818 = vunpack.c.l.b16 %v204
    %v819 = vunpack.c.h.b16 %v204
    %v820 = vunpack.c.l.b16 %v205
    %v821 = vunpack.c.h.b16 %v205
    %v822 = vunpack.c.l.b16 %v206
    %v823 = vunpack.c.h.b16 %v206
    %v824 = vunpack.c.l.b16 %v207
    %v825 = vunpack.c.h.b16 %v207
    %v826 = vunpack.c.l.b16 %v208
    %v827 = vunpack.c.h.b16 %v208
    %v828 = vunpack.c.l.b16 %v209
    %v829 = vunpack.c.h.b16 %v209
    %v830 = vunpack.c.l.b16 %v210
    %v831 = vunpack.c.h.b16 %v210
    %v832 = vunpack.c.l.b16 %v211
    %v833 = vunpack.c.h.b16 %v211
    %v834 = vunpack.c.l.b16 %v212
    %v835 = vunpack.c.h.b16 %v212
    %v836 = vunpack.c.l.b16 %v213
    %v837 = vunpack.c.h.b16 %v213
    %v838 = vunpack.c.l.b16 %v214
    %v839 = vunpack.c.h.b16 %v214
    %v840 = vunpack.c.l.b16 %v215
    %v841 = vunpack.c.h.b16 %v215
    %v842 = vunpack.c.l.b16 %v216
    %v843 = vunpack.c.h.b16 %v216
    %v844 = vunpack.c.l.b16 %v217
    %v845 = vunpack.c.h.b16 %v217
    %v846 = vunpack.c.l.b16 %v218
    %v847 = vunpack.c.h.b16 %v218
    %v848 = vunpack.c.l.b16 %v219
    %v849 = vunpack.c.h.b16 %v219
    %v850 = vunpack.c.l.b16 %v220
    %v851 = vunpack.c.h.b16 %v220
    %v852 = vunpack.c.l.b16 %v221
    %v853 = vunpack.c.h.b16 %v221
    %v854 = vunpack.c.l.b16 %v222
    %v855 = vunpack.c.h.b16 %v222
    %v856 = vunpack.c.l.b16 %v223
    %v857 = vunpack.c.h.b16 %v223
    %v858 = vunpack.c.l.b16 %v224
    %v859 = vunpack.c.h.b16 %v224
    %v860 = vunpack.c.l.b16 %v225
    %v861 = vunpack.c.h.b16 %v225
    %v862 = vunpack.c.l.b16 %v226
    %v863 = vunpack.c.h.b16 %v226
    %v864 = vunpack.c.l.b16 %v227
    %v865 = vunpack.c.h.b16 %v227
    %v866 = vunpack.c.l.b16 %v228
    %v867 = vunpack.c.h.b16 %v228
    %v868 = vunpack.c.l.b16 %v229
    %v869 = vunpack.c.h.b16 %v229
    %v870 = vunpack.c.l.b16 %v230
    %v871 = vunpack.c.h.b16 %v230
    %v872 = vunpack.c.l.b16 %v231
    %v873 = vunpack.c.h.b16 %v231
    %v874 = vunpack.c.l.b16 %v232
    %v875 = vunpack.c.h.b16 %v232
    %v876 = vunpack.c.l.b16 %v233
    %v877 = vunpack.c.h.b16 %v233
    %v878 = vunpack.c.l.b16 %v234
    %v879 = vunpack.c.h.b16 %v234
    %v880 = vunpack.c.l.b16 %v235
    %v881 = vunpack.c.h.b16 %v235
    %v882 = vunpack.c.l.b16 %v236
    %v883 = vunpack.c.h.b16 %v236
    %v884 = vunpack.c.l.b16 %v237
    %v885 = vunpack.c.h.b16 %v237
    %v886 = vunpack.c.l.b16 %v238
    %v887 = vunpack.c.h.b16 %v238
    %v888 = vunpack.c.l.b16 %v239
    %v889 = vunpack.c.h.b16 %v239
    %v890 = vunpack.c.l.b16 %v240
    %v891 = vunpack.c.h.b16 %v240
    %v892 = vunpack.c.l.b16 %v241
    %v893 = vunpack.c.h.b16 %v241
    %v894 = vunpack.c.l.b16 %v242
    %v895 = vunpack.c.h.b16 %v242
    %v896 = vunpack.c.l.b16 %v243
    %v897 = vunpack.c.h.b16 %v243
    %v898 = vunpack.c.l.b16 %v244
    %v899 = vunpack.c.h.b16 %v244
    %v900 = vunpack.c.l.b16 %v245
    %v901 = vunpack.c.h.b16 %v245
    %v902 = vunpack.c.l.b16 %v246
    %v903 = vunpack.c.h.b16 %v246
    %v904 = vunpack.c.l.b16 %v247
    %v905 = vunpack.c.h.b16 %v247
    %v906 = vunpack.c.l.b16 %v248
    %v907 = vunpack.c.h.b16 %v248
    %v908 = vunpack.c.l.b16 %v249
    %v909 = vunpack.c.h.b16 %v249
    %v910 = vunpack.c.l.b16 %v250
    %v911 = vunpack.c.h.b16 %v250
    %v912 = vunpack.c.l.b16 %v251
    %v913 = vunpack.c.h.b16 %v251
    %v914 = vunpack.c.l.b16 %v252
    %v915 = vunpack.c.h.b16 %v252
    %v916 = vunpack.c.l.b16 %v253
    %v917 = vunpack.c.h.b16 %v253
    %v918 = vunpack.c.l.b16 %v254
    %v919 = vunpack.c.h.b16 %v254
    %v920 = vunpack.c.l.b16 %v255
    %v921 = vunpack.c.h.b16 %v255
    %v922 = vunpack.c.l.b16 %v256
    %v923 = vunpack.c.h.b16 %v256
    %v924 = vunpack.c.l.b16 %v257
    %v925 = vunpack.c.h.b16 %v257
    %v926 = vunpack.c.l.b16 %v258
    %v927 = vunpack.c.h.b16 %v258
    %v928 = vunpack.c.l.b16 %v259
    %v929 = vunpack.c.h.b16 %v259
    %v930 = vunpack.c.l.b16 %v260
    %v931 = vunpack.c.h.b16 %v260
    %v932 = vunpack.c.l.b16 %v261
    %v933 = vunpack.c.h.b16 %v261
    %v934 = vunpack.c.l.b16 %v262
    %v935 = vunpack.c.h.b16 %v262
    %v936 = vunpack.c.l.b16 %v263
    %v937 = vunpack.c.h.b16 %v263
    %v938 = vunpack.c.l.b16 %v264
    %v939 = vunpack.c.h.b16 %v264
    %v940 = vunpack.c.l.b16 %v265
    %v941 = vunpack.c.h.b16 %v265
    %v942 = vunpack.c.l.b16 %v266
    %v943 = vunpack.c.h.b16 %v266
    %v944 = vunpack.c.l.b16 %v267
    %v945 = vunpack.c.h.b16 %v267
    %v946 = vunpack.c.l.b16 %v268
    %v947 = vunpack.c.h.b16 %v268
    %v948 = vunpack.c.l.b16 %v269
    %v949 = vunpack.c.h.b16 %v269
    %v950 = vunpack.c.l.b16 %v270
    %v951 = vunpack.c.h.b16 %v270
    %v952 = vunpack.c.l.b16 %v271
    %v953 = vunpack.c.h.b16 %v271
    %v954 = vunpack.c.l.b16 %v272
    %v955 = vunpack.c.h.b16 %v272
    %v956 = vunpack.c.l.b16 %v273
    %v957 = vunpack.c.h.b16 %v273
    %v958 = vunpack.c.l.b16 %v274
    %v959 = vunpack.c.h.b16 %v274
    %v960 = vunpack.c.l.b16 %v275
    %v961 = vunpack.c.h.b16 %v275
    %v962 = vunpack.c.l.b16 %v276
    %v963 = vunpack.c.h.b16 %v276
    %v964 = vunpack.c.l.b16 %v277
    %v965 = vunpack.c.h.b16 %v277
    %v966 = vunpack.c.l.b16 %v278
    %v967 = vunpack.c.h.b16 %v278
    %v968 = vunpack.c.l.b16 %v279
    %v969 = vunpack.c.h.b16 %v279
    %v970 = vunpack.c.l.b16 %v280
    %v971 = vunpack.c.h.b16 %v280
    %v972 = vunpack.c.l.b16 %v281
    %v973 = vunpack.c.h.b16 %v281
    %v974 = vunpack.c.l.b16 %v282
    %v975 = vunpack.c.h.b16 %v282
    %v976 = vunpack.c.l.b16 %v283
    %v977 = vunpack.c.h.b16 %v283
    %v978 = vunpack.c.l.b16 %v284
    %v979 = vunpack.c.h.b16 %v284
    %v980 = vunpack.c.l.b16 %v285
    %v981 = vunpack.c.h.b16 %v285
    %v982 = vunpack.c.l.b16 %v286
    %v983 = vunpack.c.h.b16 %v286
    %v984 = vunpack.c.l.b16 %v287
    %v985 = vunpack.c.h.b16 %v287
    %v986 = vunpack.c.l.b16 %v288
    %v987 = vunpack.c.h.b16 %v288
    %v988 = vunpack.c.l.b16 %v289
    %v989 = vunpack.c.h.b16 %v289
    %v990 = vunpack.c.l.b16 %v290
    %v991 = vunpack.c.h.b16 %v290
    %v992 = vunpack.c.l.b16 %v291
    %v993 = vunpack.c.h.b16 %v291
    %v994 = vunpack.c.l.b16 %v292
    %v995 = vunpack.c.h.b16 %v292
    %v996 = vunpack.c.l.b16 %v293
    %v997 = vunpack.c.h.b16 %v293
    %v998 = vunpack.c.l.b16 %v294
    %v999 = vunpack.c.h.b16 %v294
    %v1000 = vunpack.c.l.b16 %v295
    %v1001 = vunpack.c.h.b16 %v295
    %v1002 = vunpack.c.l.b16 %v296
    %v1003 = vunpack.c.h.b16 %v296
    %v1004 = vunpack.c.l.b16 %v297
    %v1005 = vunpack.c.h.b16 %v297
    %v1006 = vunpack.c.l.b16 %v298
    %v1007 = vunpack.c.h.b16 %v298
    %v1008 = vunpack.c.l.b16 %v299
    %v1009 = vunpack.c.h.b16 %v299
    %v1010 = vunpack.c.l.b16 %v300
    %v1011 = vunpack.c.h.b16 %v300
    %v1012 = vunpack.c.l.b16 %v301
    %v1013 = vunpack.c.h.b16 %v301
    %v1014 = vunpack.c.l.b16 %v302
    %v1015 = vunpack.c.h.b16 %v302
    %v1016 = vunpack.c.l.b16 %v303
    %v1017 = vunpack.c.h.b16 %v303
    %v1018 = vunpack.c.l.b16 %v304
    %v1019 = vunpack.c.h.b16 %v304
    %v1020 = vunpack.c.l.b16 %v305
    %v1021 = vunpack.c.h.b16 %v305
    %v1022 = vunpack.c.l.b16 %v306
    %v1023 = vunpack.c.h.b16 %v306
    %v1024 = vunpack.c.l.b16 %v307
    %v1025 = vunpack.c.h.b16 %v307
    %v1026 = vunpack.c.l.b16 %v308
    %v1027 = vunpack.c.h.b16 %v308
    %v1028 = vunpack.c.l.b16 %v309
    %v1029 = vunpack.c.h.b16 %v309
    %v1030 = vunpack.c.l.b16 %v310
    %v1031 = vunpack.c.h.b16 %v310
    %v1032 = vunpack.c.l.b16 %v311
    %v1033 = vunpack.c.h.b16 %v311
    %v1034 = vunpack.c.l.b16 %v312
    %v1035 = vunpack.c.h.b16 %v312
    %v1036 = vunpack.c.l.b16 %v313
    %v1037 = vunpack.c.h.b16 %v313
    %v1038 = vunpack.c.l.b16 %v314
    %v1039 = vunpack.c.h.b16 %v314
    %v1040 = vunpack.c.l.b16 %v315
    %v1041 = vunpack.c.h.b16 %v315
    %v1042 = vunpack.c.l.b16 %v316
    %v1043 = vunpack.c.h.b16 %v316
    %v1044 = vunpack.c.l.b16 %v317
    %v1045 = vunpack.c.h.b16 %v317
    %v1046 = vunpack.c.l.b16 %v318
    %v1047 = vunpack.c.h.b16 %v318
    %v1048 = vunpack.c.l.b16 %v319
    %v1049 = vunpack.c.h.b16 %v319
    %v1050 = vpack.c.b16 %v606, %v602
    %v1051 = vpack.c.b16 %v607, %v603
    %v1052 = vpack.c.b16 %v608, %v604
    %v1053 = vpack.c.b16 %v609, %v605
    %v1054 = vpack.c.b16 %v614, %v610
    %v1055 = vpack.c.b16 %v615, %v611
    %v1056 = vpack.c.b16 %v616, %v612
    %v1057 = vpack.c.b16 %v617, %v613
    %v1058 = vpack.c.b16 %v622, %v618
    %v1059 = vpack.c.b16 %v623, %v619
    %v1060 = vpack.c.b16 %v624, %v620
    %v1061 = vpack.c.b16 %v625, %v621
    %v1062 = vpack.c.b16 %v630, %v626
    %v1063 = vpack.c.b16 %v631, %v627
    %v1064 = vpack.c.b16 %v632, %v628
    %v1065 = vpack.c.b16 %v633, %v629
    %v1066 = vpack.c.b16 %v638, %v634
    %v1067 = vpack.c.b16 %v639, %v635
    %v1068 = vpack.c.b16 %v640, %v636
    %v1069 = vpack.c.b16 %v641, %v637
    %v1070 = vpack.c.b16 %v646, %v642
    %v1071 = vpack.c.b16 %v647, %v643
    %v1072 = vpack.c.b16 %v648, %v644
    %v1073 = vpack.c.b16 %v649, %v645
    %v1074 = vpack.c.b16 %v654, %v650
    %v1075 = vpack.c.b16 %v655, %v651
    %v1076 = vpack.c.b16 %v656, %v652
    %v1077 = vpack.c.b16 %v657, %v653
    %v1078 = vpack.c.b16 %v662, %v658
    %v1079 = vpack.c.b16 %v663, %v659
    %v1080 = vpack.c.b16 %v664, %v660
    %v1081 = vpack.c.b16 %v665, %v661
    %v1082 = vpack.c.b16 %v670, %v666
    %v1083 = vpack.c.b16 %v671, %v667
    %v1084 = vpack.c.b16 %v672, %v668
    %v1085 = vpack.c.b16 %v673, %v669
    %v1086 = vpack.c.b16 %v678, %v674
    %v1087 = vpack.c.b16 %v679, %v675
    %v1088 = vpack.c.b16 %v680, %v676
    %v1089 = vpack.c.b16 %v681, %v677
    %v1090 = vpack.c.b16 %v686, %v682
    %v1091 = vpack.c.b16 %v687, %v683
    %v1092 = vpack.c.b16 %v688, %v684
    %v1093 = vpack.c.b16 %v689, %v685
    %v1094 = vpack.c.b16 %v694, %v690
    %v1095 = vpack.c.b16 %v695, %v691
    %v1096 = vpack.c.b16 %v696, %v692
    %v1097 = vpack.c.b16 %v697, %v693
    %v1098 = vpack.c.b16 %v702, %v698
    %v1099 = vpack.c.b16 %v703, %v699
    %v1100 = vpack.c.b16 %v704, %v700
    %v1101 = vpack.c.b16 %v705, %v701
    %v1102 = vpack.c.b16 %v710, %v706
    %v1103 = vpack.c.b16 %v711, %v707
    %v1104 = vpack.c.b16 %v712, %v708
    %v1105 = vpack.c.b16 %v713, %v709
    %v1106 = vpack.c.b16 %v718, %v714
    %v1107 = vpack.c.b16 %v719, %v715
    %v1108 = vpack.c.b16 %v720, %v716
    %v1109 = vpack.c.b16 %v721, %v717
    %v1110 = vpack.c.b16 %v726, %v722
    %v1111 = vpack.c.b16 %v727, %v723
    %v1112 = vpack.c.b16 %v728, %v724
    %v1113 = vpack.c.b16 %v729, %v725
    %v1114 = vpack.c.b16 %v734, %v730
    %v1115 = vpack.c.b16 %v735, %v731
    %v1116 = vpack.c.b16 %v736, %v732
    %v1117 = vpack.c.b16 %v737, %v733
    %v1118 = vpack.c.b16 %v742, %v738
    %v1119 = vpack.c.b16 %v743, %v739
    %v1120 = vpack.c.b16 %v744, %v740
    %v1121 = vpack.c.b16 %v745, %v741
    %v1122 = vpack.c.b16 %v750, %v746
    %v1123 = vpack.c.b16 %v751, %v747
    %v1124 = vpack.c.b16 %v752, %v748
    %v1125 = vpack.c.b16 %v753, %v749
    %v1126 = vpack.c.b16 %v758, %v754
    %v1127 = vpack.c.b16 %v759, %v755
    %v1128 = vpack.c.b16 %v760, %v756
    %v1129 = vpack.c.b16 %v761, %v757
    %v1130 = vpack.c.b16 %v766, %v762
    %v1131 = vpack.c.b16 %v767, %v763
    %v1132 = vpack.c.b16 %v768, %v764
    %v1133 = vpack.c.b16 %v769, %v765
    %v1134 = vpack.c.b16 %v774, %v770
    %v1135 = vpack.c.b16 %v775, %v771
    %v1136 = vpack.c.b16 %v776, %v772
    %v1137 = vpack.c.b16 %v777, %v773
    %v1138 = vpack.c.b16 %v782, %v778
    %v1139 = vpack.c.b16 %v783, %v779
    %v1140 = vpack.c.b16 %v784, %v780
    %v1141 = vpack.c.b16 %v785, %v781
    %v1142 = vpack.c.b16 %v790, %v786
    %v1143 = vpack.c.b16 %v791, %v787
    %v1144 = vpack.c.b16 %v792, %v788
    %v1145 = vpack.c.b16 %v793, %v789
    %v1146 = vpack.c.b16 %v798, %v794
    %v1147 = vpack.c.b16 %v799, %v795
    %v1148 = vpack.c.b16 %v800, %v796
    %v1149 = vpack.c.b16 %v801, %v797
    %v1150 = vpack.c.b16 %v806, %v802
    %v1151 = vpack.c.b16 %v807, %v803
    %v1152 = vpack.c.b16 %v808, %v804
    %v1153 = vpack.c.b16 %v809, %v805
    %v1154 = vpack.c.b16 %v814, %v810
    %v1155 = vpack.c.b16 %v815, %v811
    %v1156 = vpack.c.b16 %v816, %v812
    %v1157 = vpack.c.b16 %v817, %v813
    %v1158 = vpack.c.b16 %v822, %v818
    %v1159 = vpack.c.b16 %v823, %v819
    %v1160 = vpack.c.b16 %v824, %v820
    %v1161 = vpack.c.b16 %v825, %v821
    %v1162 = vpack.c.b16 %v830, %v826
    %v1163 = vpack.c.b16 %v831, %v827
    %v1164 = vpack.c.b16 %v832, %v828
    %v1165 = vpack.c.b16 %v833, %v829
    %v1166 = vpack.c.b16 %v838, %v834
    %v1167 = vpack.c.b16 %v839, %v835
    %v1168 = vpack.c.b16 %v840, %v836
    %v1169 = vpack.c.b16 %v841, %v837
    %v1170 = vpack.c.b16 %v846, %v842
    %v1171 = vpack.c.b16 %v847, %v843
    %v1172 = vpack.c.b16 %v848, %v844
    %v1173 = vpack.c.b16 %v849, %v845
    %v1174 = vpack.c.b16 %v854, %v850
    %v1175 = vpack.c.b16 %v855, %v851
    %v1176 = vpack.c.b16 %v856, %v852
    %v1177 = vpack.c.b16 %v857, %v853
    %v1178 = vpack.c.b16 %v862, %v858
    %v1179 = vpack.c.b16 %v863, %v859
    %v1180 = vpack.c.b16 %v864, %v860
    %v1181 = vpack.c.b16 %v865, %v861
    %v1182 = vpack.c.b16 %v870, %v866
    %v1183 = vpack.c.b16 %v871, %v867
    %v1184 = vpack.c.b16 %v872, %v868
    %v1185 = vpack.c.b16 %v873, %v869
    %v1186 = vpack.c.b16 %v878, %v874
    %v1187 = vpack.c.b16 %v879, %v875
    %v1188 = vpack.c.b16 %v880, %v876
    %v1189 = vpack.c.b16 %v881, %v877
    %v1190 = vpack.c.b16 %v886, %v882
    %v1191 = vpack.c.b16 %v887, %v883
    %v1192 = vpack.c.b16 %v888, %v884
    %v1193 = vpack.c.b16 %v889, %v885
    %v1194 = vpack.c.b16 %v894, %v890
    %v1195 = vpack.c.b16 %v895, %v891
    %v1196 = vpack.c.b16 %v896, %v892
    %v1197 = vpack.c.b16 %v897, %v893
    %v1198 = vpack.c.b16 %v902, %v898
    %v1199 = vpack.c.b16 %v903, %v899
    %v1200 = vpack.c.b16 %v904, %v900
    %v1201 = vpack.c.b16 %v905, %v901
    %v1202 = vpack.c.b16 %v910, %v906
    %v1203 = vpack.c.b16 %v911, %v907
    %v1204 = vpack.c.b16 %v912, %v908
    %v1205 = vpack.c.b16 %v913, %v909
    %v1206 = vpack.c.b16 %v918, %v914
    %v1207 = vpack.c.b16 %v919, %v915
    %v1208 = vpack.c.b16 %v920, %v916
    %v1209 = vpack.c.b16 %v921, %v917
    %v1210 = vpack.c.b16 %v926, %v922
    %v1211 = vpack.c.b16 %v927, %v923
    %v1212 = vpack.c.b16 %v928, %v924
    %v1213 = vpack.c.b16 %v929, %v925
    %v1214 = vpack.c.b16 %v934, %v930
    %v1215 = vpack.c.b16 %v935, %v931
    %v1216 = vpack.c.b16 %v936, %v932
    %v1217 = vpack.c.b16 %v937, %v933
    %v1218 = vpack.c.b16 %v942, %v938
    %v1219 = vpack.c.b16 %v943, %v939
    %v1220 = vpack.c.b16 %v944, %v940
    %v1221 = vpack.c.b16 %v945, %v941
    %v1222 = vpack.c.b16 %v950, %v946
    %v1223 = vpack.c.b16 %v951, %v947
    %v1224 = vpack.c.b16 %v952, %v948
    %v1225 = vpack.c.b16 %v953, %v949
    %v1226 = vpack.c.b16 %v958, %v954
    %v1227 = vpack.c.b16 %v959, %v955
    %v1228 = vpack.c.b16 %v960, %v956
    %v1229 = vpack.c.b16 %v961, %v957
    %v1230 = vpack.c.b16 %v966, %v962
    %v1231 = vpack.c.b16 %v967, %v963
    %v1232 = vpack.c.b16 %v968, %v964
    %v1233 = vpack.c.b16 %v969, %v965
    %v1234 = vpack.c.b16 %v974, %v970
    %v1235 = vpack.c.b16 %v975, %v971
    %v1236 = vpack.c.b16 %v976, %v972
    %v1237 = vpack.c.b16 %v977, %v973
    %v1238 = vpack.c.b16 %v982, %v978
    %v1239 = vpack.c.b16 %v983, %v979
    %v1240 = vpack.c.b16 %v984, %v980
    %v1241 = vpack.c.b16 %v985, %v981
    %v1242 = vpack.c.b16 %v990, %v986
    %v1243 = vpack.c.b16 %v991, %v987
    %v1244 = vpack.c.b16 %v992, %v988
    %v1245 = vpack.c.b16 %v993, %v989
    %v1246 = vpack.c.b16 %v998, %v994
    %v1247 = vpack.c.b16 %v999, %v995
    %v1248 = vpack.c.b16 %v1000, %v996
    %v1249 = vpack.c.b16 %v1001, %v997
    %v1250 = vpack.c.b16 %v1006, %v1002
    %v1251 = vpack.c.b16 %v1007, %v1003
    %v1252 = vpack.c.b16 %v1008, %v1004
    %v1253 = vpack.c.b16 %v1009, %v1005
    %v1254 = vpack.c.b16 %v1014, %v1010
    %v1255 = vpack.c.b16 %v1015, %v1011
    %v1256 = vpack.c.b16 %v1016, %v1012
    %v1257 = vpack.c.b16 %v1017, %v1013
    %v1258 = vpack.c.b16 %v1022, %v1018
    %v1259 = vpack.c.b16 %v1023, %v1019
    %v1260 = vpack.c.b16 %v1024, %v1020
    %v1261 = vpack.c.b16 %v1025, %v1021
    %v1262 = vpack.c.b16 %v1030, %v1026
    %v1263 = vpack.c.b16 %v1031, %v1027
    %v1264 = vpack.c.b16 %v1032, %v1028
    %v1265 = vpack.c.b16 %v1033, %v1029
    %v1266 = vpack.c.b16 %v1038, %v1034
    %v1267 = vpack.c.b16 %v1039, %v1035
    %v1268 = vpack.c.b16 %v1040, %v1036
    %v1269 = vpack.c.b16 %v1041, %v1037
    %v1270 = vpack.c.b16 %v1046, %v1042
    %v1271 = vpack.c.b16 %v1047, %v1043
    %v1272 = vpack.c.b16 %v1048, %v1044
    %v1273 = vpack.c.b16 %v1049, %v1045
    %1498 = vmatprep.subr.bf16.mxu0 %v1051
    %1499 = vmatpush1.bf16.msra.mxu0 %v1050
    %1500 = vmatprep.subr.bf16.mxu0 %v1055
    %1501 = vmatpush1.bf16.msra.mxu0 %v1054
    %1502 = vmatprep.subr.bf16.mxu0 %v1059
    %1503 = vmatpush1.bf16.msra.mxu0 %v1058
    %1504 = vmatprep.subr.bf16.mxu0 %v1063
    %1505 = vmatpush1.bf16.msra.mxu0 %v1062
    %1506 = vmatprep.subr.bf16.mxu0 %v1067
    %1507 = vmatpush1.bf16.msra.mxu0 %v1066
    %1508 = vmatprep.subr.bf16.mxu0 %v1071
    %1509 = vmatpush1.bf16.msra.mxu0 %v1070
    %1510 = vmatprep.subr.bf16.mxu0 %v1075
    %1511 = vmatpush1.bf16.msra.mxu0 %v1074
    %1512 = vmatprep.subr.bf16.mxu0 %v1079
    %1513 = vmatpush1.bf16.msra.mxu0 %v1078
    %1514 = vmatprep.subr.bf16.mxu0 %v1083
    %1515 = vmatpush1.bf16.msra.mxu0 %v1082
    %1516 = vmatprep.subr.bf16.mxu0 %v1087
    %1517 = vmatpush1.bf16.msra.mxu0 %v1086
    %1518 = vmatprep.subr.bf16.mxu0 %v1091
    %1519 = vmatpush1.bf16.msra.mxu0 %v1090
    %1520 = vmatprep.subr.bf16.mxu0 %v1095
    %1521 = vmatpush1.bf16.msra.mxu0 %v1094
    %1522 = vmatprep.subr.bf16.mxu0 %v1099
    %1523 = vmatpush1.bf16.msra.mxu0 %v1098
    %1524 = vmatprep.subr.bf16.mxu0 %v1103
    %1525 = vmatpush1.bf16.msra.mxu0 %v1102
    %1526 = vmatprep.subr.bf16.mxu0 %v1107
    %1527 = vmatpush1.bf16.msra.mxu0 %v1106
    %1528 = vmatprep.subr.bf16.mxu0 %v1111
    %1529 = vmatpush1.bf16.msra.mxu0 %v1110
    %1530 = vmatprep.mubr.bf16.mxu0 %v365
    %1531 = vmatmul.mubr.bf16.gmra.mrb[0].mxu0 %v364
    %v1532 = vpop.f32.mrb[0].mxu0
    %v1533 = vadd.f32 %v325, %v1532
    %v1534 = vpop.f32.mrb[0].mxu0
    %v1535 = vadd.f32 %v329, %v1534
    %v1536 = vpop.f32.mrb[0].mxu0
    %v1537 = vadd.f32 %v325, %v1536
    %v1538 = vpop.f32.mrb[0].mxu0
    %v1539 = vadd.f32 %v329, %v1538
    %1540 = vdwg.mxu0
    %1541 = vmatprep.subr.bf16.mxu0 %v1115
    %1542 = vmatpush1.bf16.msra.mxu0 %v1114
    %1543 = vmatprep.subr.bf16.mxu0 %v1119
    %1544 = vmatpush1.bf16.msra.mxu0 %v1118
    %1545 = vmatprep.subr.bf16.mxu0 %v1123
    %1546 = vmatpush1.bf16.msra.mxu0 %v1122
    %1547 = vmatprep.subr.bf16.mxu0 %v1127
    %1548 = vmatpush1.bf16.msra.mxu0 %v1126
    %1549 = vmatprep.subr.bf16.mxu0 %v1131
    %1550 = vmatpush1.bf16.msra.mxu0 %v1130
    %1551 = vmatprep.subr.bf16.mxu0 %v1135
    %1552 = vmatpush1.bf16.msra.mxu0 %v1134
    %1553 = vmatprep.subr.bf16.mxu0 %v1139
    %1554 = vmatpush1.bf16.msra.mxu0 %v1138
    %1555 = vmatprep.subr.bf16.mxu0 %v1143
    %1556 = vmatpush1.bf16.msra.mxu0 %v1142
    %1557 = vmatprep.subr.bf16.mxu0 %v1147
    %1558 = vmatpush1.bf16.msra.mxu0 %v1146
    %1559 = vmatprep.subr.bf16.mxu0 %v1151
    %1560 = vmatpush1.bf16.msra.mxu0 %v1150
    %1561 = vmatprep.subr.bf16.mxu0 %v1155
    %1562 = vmatpush1.bf16.msra.mxu0 %v1154
    %1563 = vmatprep.subr.bf16.mxu0 %v1159
    %1564 = vmatpush1.bf16.msra.mxu0 %v1158
    %1565 = vmatprep.subr.bf16.mxu0 %v1163
    %1566 = vmatpush1.bf16.msra.mxu0 %v1162
    %1567 = vmatprep.subr.bf16.mxu0 %v1167
    %1568 = vmatpush1.bf16.msra.mxu0 %v1166
    %1569 = vmatprep.subr.bf16.mxu0 %v1171
    %1570 = vmatpush1.bf16.msra.mxu0 %v1170
    %1571 = vmatprep.subr.bf16.mxu0 %v1175
    %1572 = vmatpush1.bf16.msra.mxu0 %v1174
    %1573 = vmatprep.mubr.bf16.mxu0 %v367
    %1574 = vmatmul.mubr.bf16.gmra.mrb[0].mxu0 %v366
    %v1575 = vpop.f32.mrb[0].mxu0
    %v1576 = vadd.f32 %v1533, %v1575
    %v1577 = vpop.f32.mrb[0].mxu0
    %v1578 = vadd.f32 %v1535, %v1577
    %v1579 = vpop.f32.mrb[0].mxu0
    %v1580 = vadd.f32 %v1537, %v1579
    %v1581 = vpop.f32.mrb[0].mxu0
    %v1582 = vadd.f32 %v1539, %v1581
    %1583 = vdwg.mxu0
    %1584 = vmatprep.subr.bf16.mxu0 %v1179
    %1585 = vmatpush1.bf16.msra.mxu0 %v1178
    %1586 = vmatprep.subr.bf16.mxu0 %v1183
    %1587 = vmatpush1.bf16.msra.mxu0 %v1182
    %1588 = vmatprep.subr.bf16.mxu0 %v1187
    %1589 = vmatpush1.bf16.msra.mxu0 %v1186
    %1590 = vmatprep.subr.bf16.mxu0 %v1191
    %1591 = vmatpush1.bf16.msra.mxu0 %v1190
    %1592 = vmatprep.subr.bf16.mxu0 %v1195
    %1593 = vmatpush1.bf16.msra.mxu0 %v1194
    %1594 = vmatprep.subr.bf16.mxu0 %v1199
    %1595 = vmatpush1.bf16.msra.mxu0 %v1198
    %1596 = vmatprep.subr.bf16.mxu0 %v1203
    %1597 = vmatpush1.bf16.msra.mxu0 %v1202
    %1598 = vmatprep.subr.bf16.mxu0 %v1207
    %1599 = vmatpush1.bf16.msra.mxu0 %v1206
    %1600 = vmatprep.subr.bf16.mxu0 %v1211
    %1601 = vmatpush1.bf16.msra.mxu0 %v1210
    %1602 = vmatprep.subr.bf16.mxu0 %v1215
    %1603 = vmatpush1.bf16.msra.mxu0 %v1214
    %1604 = vmatprep.subr.bf16.mxu0 %v1219
    %1605 = vmatpush1.bf16.msra.mxu0 %v1218
    %1606 = vmatprep.subr.bf16.mxu0 %v1223
    %1607 = vmatpush1.bf16.msra.mxu0 %v1222
    %1608 = vmatprep.subr.bf16.mxu0 %v1227
    %1609 = vmatpush1.bf16.msra.mxu0 %v1226
    %1610 = vmatprep.subr.bf16.mxu0 %v1231
    %1611 = vmatpush1.bf16.msra.mxu0 %v1230
    %1612 = vmatprep.subr.bf16.mxu0 %v1235
    %1613 = vmatpush1.bf16.msra.mxu0 %v1234
    %1614 = vmatprep.subr.bf16.mxu0 %v1239
    %1615 = vmatpush1.bf16.msra.mxu0 %v1238
    %1616 = vmatprep.mubr.bf16.mxu0 %v369
    %1617 = vmatmul.mubr.bf16.gmra.mrb[0].mxu0 %v368
    %v1618 = vpop.f32.mrb[0].mxu0
    %v1619 = vadd.f32 %v1576, %v1618
    %v1620 = vpop.f32.mrb[0].mxu0
    %v1621 = vadd.f32 %v1578, %v1620
    %v1622 = vpop.f32.mrb[0].mxu0
    %v1623 = vadd.f32 %v1580, %v1622
    %v1624 = vpop.f32.mrb[0].mxu0
    %v1625 = vadd.f32 %v1582, %v1624
    %1626 = vdwg.mxu0
    %1627 = vmatprep.subr.bf16.mxu0 %v1243
    %1628 = vmatpush1.bf16.msra.mxu0 %v1242
    %1629 = vmatprep.subr.bf16.mxu0 %v1247
    %1630 = vmatpush1.bf16.msra.mxu0 %v1246
    %1631 = vmatprep.subr.bf16.mxu0 %v1251
    %1632 = vmatpush1.bf16.msra.mxu0 %v1250
    %1633 = vmatprep.subr.bf16.mxu0 %v1255
    %1634 = vmatpush1.bf16.msra.mxu0 %v1254
    %1635 = vmatprep.subr.bf16.mxu0 %v1259
    %1636 = vmatpush1.bf16.msra.mxu0 %v1258
    %1637 = vmatprep.subr.bf16.mxu0 %v1263
    %1638 = vmatpush1.bf16.msra.mxu0 %v1262
    %1639 = vmatprep.subr.bf16.mxu0 %v1267
    %1640 = vmatpush1.bf16.msra.mxu0 %v1266
    %1641 = vmatprep.subr.bf16.mxu0 %v1271
    %1642 = vmatpush1.bf16.msra.mxu0 %v1270
    %1643 = vmatprep.subr.bf16.mxu0 0
    %1644 = vmatpush1.bf16.msra.mxu0 0
    %1645 = vmatprep.subr.bf16.mxu0 0
    %1646 = vmatpush1.bf16.msra.mxu0 0
    %1647 = vmatprep.subr.bf16.mxu0 0
    %1648 = vmatpush1.bf16.msra.mxu0 0
    %1649 = vmatprep.subr.bf16.mxu0 0
    %1650 = vmatpush1.bf16.msra.mxu0 0
    %1651 = vmatprep.subr.bf16.mxu0 0
    %1652 = vmatpush1.bf16.msra.mxu0 0
    %1653 = vmatprep.subr.bf16.mxu0 0
    %1654 = vmatpush1.bf16.msra.mxu0 0
    %1655 = vmatprep.subr.bf16.mxu0 0
    %1656 = vmatpush1.bf16.msra.mxu0 0
    %1657 = vmatprep.subr.bf16.mxu0 0
    %1658 = vmatpush1.bf16.msra.mxu0 0
    %1659 = vmatprep.mubr.bf16.mxu0 0
    %1660 = vmatmul.mubr.bf16.gmra.mrb[0].mxu0 %v370
    %v1661 = vpop.f32.mrb[0].mxu0
    %v1662 = vadd.f32 %v1619, %v1661
    %v1663 = vpop.f32.mrb[0].mxu0
    %v1664 = vadd.f32 %v1621, %v1663
    %v1665 = vpop.f32.mrb[0].mxu0
    %v1666 = vadd.f32 %v1623, %v1665
    %v1667 = vpop.f32.mrb[0].mxu0
    %v1668 = vadd.f32 %v1625, %v1667
    %1669 = vdwg.mxu0
    %1670 = vmatprep.subr.bf16.mxu0 %v1053
    %1671 = vmatpush1.bf16.msra.mxu0 %v1052
    %1672 = vmatprep.subr.bf16.mxu0 %v1057
    %1673 = vmatpush1.bf16.msra.mxu0 %v1056
    %1674 = vmatprep.subr.bf16.mxu0 %v1061
    %1675 = vmatpush1.bf16.msra.mxu0 %v1060
    %1676 = vmatprep.subr.bf16.mxu0 %v1065
    %1677 = vmatpush1.bf16.msra.mxu0 %v1064
    %1678 = vmatprep.subr.bf16.mxu0 %v1069
    %1679 = vmatpush1.bf16.msra.mxu0 %v1068
    %1680 = vmatprep.subr.bf16.mxu0 %v1073
    %1681 = vmatpush1.bf16.msra.mxu0 %v1072
    %1682 = vmatprep.subr.bf16.mxu0 %v1077
    %1683 = vmatpush1.bf16.msra.mxu0 %v1076
    %1684 = vmatprep.subr.bf16.mxu0 %v1081
    %1685 = vmatpush1.bf16.msra.mxu0 %v1080
    %1686 = vmatprep.subr.bf16.mxu0 %v1085
    %1687 = vmatpush1.bf16.msra.mxu0 %v1084
    %1688 = vmatprep.subr.bf16.mxu0 %v1089
    %1689 = vmatpush1.bf16.msra.mxu0 %v1088
    %1690 = vmatprep.subr.bf16.mxu0 %v1093
    %1691 = vmatpush1.bf16.msra.mxu0 %v1092
    %1692 = vmatprep.subr.bf16.mxu0 %v1097
    %1693 = vmatpush1.bf16.msra.mxu0 %v1096
    %1694 = vmatprep.subr.bf16.mxu0 %v1101
    %1695 = vmatpush1.bf16.msra.mxu0 %v1100
    %1696 = vmatprep.subr.bf16.mxu0 %v1105
    %1697 = vmatpush1.bf16.msra.mxu0 %v1104
    %1698 = vmatprep.subr.bf16.mxu0 %v1109
    %1699 = vmatpush1.bf16.msra.mxu0 %v1108
    %1700 = vmatprep.subr.bf16.mxu0 %v1113
    %1701 = vmatpush1.bf16.msra.mxu0 %v1112
    %1702 = vmatprep.mubr.bf16.mxu0 %v365
    %1703 = vmatmul.mubr.bf16.gmra.mrb[0].mxu0 %v364
    %v1704 = vpop.f32.mrb[0].mxu0
    %v1705 = vadd.f32 %v333, %v1704
    %v1706 = vpop.f32.mrb[0].mxu0
    %v1707 = vadd.f32 %v337, %v1706
    %v1708 = vpop.f32.mrb[0].mxu0
    %v1709 = vadd.f32 %v333, %v1708
    %v1710 = vpop.f32.mrb[0].mxu0
    %v1711 = vadd.f32 %v337, %v1710
    %1712 = vdwg.mxu0
    %1713 = vmatprep.subr.bf16.mxu0 %v1117
    %1714 = vmatpush1.bf16.msra.mxu0 %v1116
    %1715 = vmatprep.subr.bf16.mxu0 %v1121
    %1716 = vmatpush1.bf16.msra.mxu0 %v1120
    %1717 = vmatprep.subr.bf16.mxu0 %v1125
    %1718 = vmatpush1.bf16.msra.mxu0 %v1124
    %1719 = vmatprep.subr.bf16.mxu0 %v1129
    %1720 = vmatpush1.bf16.msra.mxu0 %v1128
    %1721 = vmatprep.subr.bf16.mxu0 %v1133
    %1722 = vmatpush1.bf16.msra.mxu0 %v1132
    %1723 = vmatprep.subr.bf16.mxu0 %v1137
    %1724 = vmatpush1.bf16.msra.mxu0 %v1136
    %1725 = vmatprep.subr.bf16.mxu0 %v1141
    %1726 = vmatpush1.bf16.msra.mxu0 %v1140
    %1727 = vmatprep.subr.bf16.mxu0 %v1145
    %1728 = vmatpush1.bf16.msra.mxu0 %v1144
    %1729 = vmatprep.subr.bf16.mxu0 %v1149
    %1730 = vmatpush1.bf16.msra.mxu0 %v1148
    %1731 = vmatprep.subr.bf16.mxu0 %v1153
    %1732 = vmatpush1.bf16.msra.mxu0 %v1152
    %1733 = vmatprep.subr.bf16.mxu0 %v1157
    %1734 = vmatpush1.bf16.msra.mxu0 %v1156
    %1735 = vmatprep.subr.bf16.mxu0 %v1161
    %1736 = vmatpush1.bf16.msra.mxu0 %v1160
    %1737 = vmatprep.subr.bf16.mxu0 %v1165
    %1738 = vmatpush1.bf16.msra.mxu0 %v1164
    %1739 = vmatprep.subr.bf16.mxu0 %v1169
    %1740 = vmatpush1.bf16.msra.mxu0 %v1168
    %1741 = vmatprep.subr.bf16.mxu0 %v1173
    %1742 = vmatpush1.bf16.msra.mxu0 %v1172
    %1743 = vmatprep.subr.bf16.mxu0 %v1177
    %1744 = vmatpush1.bf16.msra.mxu0 %v1176
    %1745 = vmatprep.mubr.bf16.mxu0 %v367
    %1746 = vmatmul.mubr.bf16.gmra.mrb[0].mxu0 %v366
    %v1747 = vpop.f32.mrb[0].mxu0
    %v1748 = vadd.f32 %v1705, %v1747
    %v1749 = vpop.f32.mrb[0].mxu0
    %v1750 = vadd.f32 %v1707, %v1749
    %v1751 = vpop.f32.mrb[0].mxu0
    %v1752 = vadd.f32 %v1709, %v1751
    %v1753 = vpop.f32.mrb[0].mxu0
    %v1754 = vadd.f32 %v1711, %v1753
    %1755 = vdwg.mxu0
    %1756 = vmatprep.subr.bf16.mxu0 %v1181
    %1757 = vmatpush1.bf16.msra.mxu0 %v1180
    %1758 = vmatprep.subr.bf16.mxu0 %v1185
    %1759 = vmatpush1.bf16.msra.mxu0 %v1184
    %1760 = vmatprep.subr.bf16.mxu0 %v1189
    %1761 = vmatpush1.bf16.msra.mxu0 %v1188
    %1762 = vmatprep.subr.bf16.mxu0 %v1193
    %1763 = vmatpush1.bf16.msra.mxu0 %v1192
    %1764 = vmatprep.subr.bf16.mxu0 %v1197
    %1765 = vmatpush1.bf16.msra.mxu0 %v1196
    %1766 = vmatprep.subr.bf16.mxu0 %v1201
    %1767 = vmatpush1.bf16.msra.mxu0 %v1200
    %1768 = vmatprep.subr.bf16.mxu0 %v1205
    %1769 = vmatpush1.bf16.msra.mxu0 %v1204
    %1770 = vmatprep.subr.bf16.mxu0 %v1209
    %1771 = vmatpush1.bf16.msra.mxu0 %v1208
    %1772 = vmatprep.subr.bf16.mxu0 %v1213
    %1773 = vmatpush1.bf16.msra.mxu0 %v1212
    %1774 = vmatprep.subr.bf16.mxu0 %v1217
    %1775 = vmatpush1.bf16.msra.mxu0 %v1216
    %1776 = vmatprep.subr.bf16.mxu0 %v1221
    %1777 = vmatpush1.bf16.msra.mxu0 %v1220
    %1778 = vmatprep.subr.bf16.mxu0 %v1225
    %1779 = vmatpush1.bf16.msra.mxu0 %v1224
    %1780 = vmatprep.subr.bf16.mxu0 %v1229
    %1781 = vmatpush1.bf16.msra.mxu0 %v1228
    %1782 = vmatprep.subr.bf16.mxu0 %v1233
    %1783 = vmatpush1.bf16.msra.mxu0 %v1232
    %1784 = vmatprep.subr.bf16.mxu0 %v1237
    %1785 = vmatpush1.bf16.msra.mxu0 %v1236
    %1786 = vmatprep.subr.bf16.mxu0 %v1241
    %1787 = vmatpush1.bf16.msra.mxu0 %v1240
    %1788 = vmatprep.mubr.bf16.mxu0 %v369
    %1789 = vmatmul.mubr.bf16.gmra.mrb[0].mxu0 %v368
    %v1790 = vpop.f32.mrb[0].mxu0
    %v1791 = vadd.f32 %v1748, %v1790
    %v1792 = vpop.f32.mrb[0].mxu0
    %v1793 = vadd.f32 %v1750, %v1792
    %v1794 = vpop.f32.mrb[0].mxu0
    %v1795 = vadd.f32 %v1752, %v1794
    %v1796 = vpop.f32.mrb[0].mxu0
    %v1797 = vadd.f32 %v1754, %v1796
    %1798 = vdwg.mxu0
    %1799 = vmatprep.subr.bf16.mxu0 %v1245
    %1800 = vmatpush1.bf16.msra.mxu0 %v1244
    %1801 = vmatprep.subr.bf16.mxu0 %v1249
    %1802 = vmatpush1.bf16.msra.mxu0 %v1248
    %1803 = vmatprep.subr.bf16.mxu0 %v1253
    %1804 = vmatpush1.bf16.msra.mxu0 %v1252
    %1805 = vmatprep.subr.bf16.mxu0 %v1257
    %1806 = vmatpush1.bf16.msra.mxu0 %v1256
    %1807 = vmatprep.subr.bf16.mxu0 %v1261
    %1808 = vmatpush1.bf16.msra.mxu0 %v1260
    %1809 = vmatprep.subr.bf16.mxu0 %v1265
    %1810 = vmatpush1.bf16.msra.mxu0 %v1264
    %1811 = vmatprep.subr.bf16.mxu0 %v1269
    %1812 = vmatpush1.bf16.msra.mxu0 %v1268
    %1813 = vmatprep.subr.bf16.mxu0 %v1273
    %1814 = vmatpush1.bf16.msra.mxu0 %v1272
    %1815 = vmatprep.subr.bf16.mxu0 0
    %1816 = vmatpush1.bf16.msra.mxu0 0
    %1817 = vmatprep.subr.bf16.mxu0 0
    %1818 = vmatpush1.bf16.msra.mxu0 0
    %1819 = vmatprep.subr.bf16.mxu0 0
    %1820 = vmatpush1.bf16.msra.mxu0 0
    %1821 = vmatprep.subr.bf16.mxu0 0
    %1822 = vmatpush1.bf16.msra.mxu0 0
    %1823 = vmatprep.subr.bf16.mxu0 0
    %1824 = vmatpush1.bf16.msra.mxu0 0
    %1825 = vmatprep.subr.bf16.mxu0 0
    %1826 = vmatpush1.bf16.msra.mxu0 0
    %1827 = vmatprep.subr.bf16.mxu0 0
    %1828 = vmatpush1.bf16.msra.mxu0 0
    %1829 = vmatprep.subr.bf16.mxu0 0
    %1830 = vmatpush1.bf16.msra.mxu0 0
    %1831 = vmatprep.mubr.bf16.mxu0 0
    %1832 = vmatmul.mubr.bf16.gmra.mrb[0].mxu0 %v370
    %v1833 = vpop.f32.mrb[0].mxu0
    %v1834 = vadd.f32 %v1791, %v1833
    %v1835 = vpop.f32.mrb[0].mxu0
    %v1836 = vadd.f32 %v1793, %v1835
    %v1837 = vpop.f32.mrb[0].mxu0
    %v1838 = vadd.f32 %v1795, %v1837
    %v1839 = vpop.f32.mrb[0].mxu0
    %v1840 = vadd.f32 %v1797, %v1839
    %1841 = vdwg.mxu0
    %v1842 = vpack.c.bf16 %v1666, %v1662
    %v1843 = vpack.c.bf16 %v1668, %v1664
    %v1844 = vpack.c.bf16 %v1838, %v1834
    %v1845 = vpack.c.bf16 %v1840, %v1836
    %v1846 = vld [vmem:[#allocation4] sm:$0xff]
    %v1847 = vld [vmem:[#allocation4 + $0x8] sm:$0xff]
    %v1848 = vld [vmem:[#allocation4 + $0x10] sm:$0xff]
    %v1849 = vld [vmem:[#allocation4 + $0x18] sm:$0xff]
    %v1850 = vld [vmem:[#allocation4 + $0x20] sm:$0xff]
    %v1851 = vld [vmem:[#allocation4 + $0x28] sm:$0xff]
    %v1852 = vld [vmem:[#allocation4 + $0x30] sm:$0xff]
    %v1853 = vld [vmem:[#allocation4 + $0x38] sm:$0xff]
    %v1854 = vld [vmem:[#allocation4 + $0x40] sm:$0xff]
    %v1855 = vld [vmem:[#allocation4 + $0x48] sm:$0xff]
    %v1856 = vld [vmem:[#allocation4 + $0x50] sm:$0xff]
    %v1857 = vld [vmem:[#allocation4 + $0x58] sm:$0xff]
    %v1858 = vld [vmem:[#allocation4 + $0x60] sm:$0xff]
    %v1859 = vld [vmem:[#allocation4 + $0x68] sm:$0xff]
    %v1860 = vld [vmem:[#allocation4 + $0x70] sm:$0xff]
    %v1861 = vld [vmem:[#allocation4 + $0x78] sm:$0xff]
    %v1862 = vld [vmem:[#allocation4 + $0x80] sm:$0xff]
    %v1863 = vld [vmem:[#allocation4 + $0x88] sm:$0xff]
    %v1864 = vld [vmem:[#allocation4 + $0x90] sm:$0xff]
    %v1865 = vld [vmem:[#allocation4 + $0x98] sm:$0xff]
    %v1866 = vld [vmem:[#allocation4 + $0xa0] sm:$0xff]
    %v1867 = vld [vmem:[#allocation4 + $0xa8] sm:$0xff]
    %v1868 = vld [vmem:[#allocation4 + $0xb0] sm:$0xff]
    %v1869 = vld [vmem:[#allocation4 + $0xb8] sm:$0xff]
    %v1870 = vld [vmem:[#allocation4 + $0xc0] sm:$0xff]
    %v1871 = vld [vmem:[#allocation4 + $0xc8] sm:$0xff]
    %v1872 = vld [vmem:[#allocation4 + $0xd0] sm:$0xff]
    %v1873 = vld [vmem:[#allocation4 + $0xd8] sm:$0xff]
    %v1874 = vld [vmem:[#allocation4 + $0xe0] sm:$0xff]
    %v1875 = vld [vmem:[#allocation4 + $0xe8] sm:$0xff]
    %v1876 = vld [vmem:[#allocation4 + $0xf0] sm:$0xff]
    %v1877 = vld [vmem:[#allocation4 + $0xf8] sm:$0xff]
    %v1878 = vld [vmem:[#allocation4 + $0x100] sm:$0xff]
    %v1879 = vld [vmem:[#allocation4 + $0x108] sm:$0xff]
    %v1880 = vld [vmem:[#allocation4 + $0x110] sm:$0xff]
    %v1881 = vld [vmem:[#allocation4 + $0x118] sm:$0xff]
    %v1882 = vld [vmem:[#allocation4 + $0x120] sm:$0xff]
    %v1883 = vld [vmem:[#allocation4 + $0x128] sm:$0xff]
    %v1884 = vld [vmem:[#allocation4 + $0x130] sm:$0xff]
    %v1885 = vld [vmem:[#allocation4 + $0x138] sm:$0xff]
    %v1886 = vld [vmem:[#allocation4 + $0x140] sm:$0xff]
    %v1887 = vld [vmem:[#allocation4 + $0x148] sm:$0xff]
    %v1888 = vld [vmem:[#allocation4 + $0x150] sm:$0xff]
    %v1889 = vld [vmem:[#allocation4 + $0x158] sm:$0xff]
    %v1890 = vld [vmem:[#allocation4 + $0x160] sm:$0xff]
    %v1891 = vld [vmem:[#allocation4 + $0x168] sm:$0xff]
    %v1892 = vld [vmem:[#allocation4 + $0x170] sm:$0xff]
    %v1893 = vld [vmem:[#allocation4 + $0x178] sm:$0xff]
    %v1894 = vld [vmem:[#allocation4 + $0x180] sm:$0xff]
    %v1895 = vld [vmem:[#allocation4 + $0x188] sm:$0xff]
    %v1896 = vld [vmem:[#allocation4 + $0x190] sm:$0xff]
    %v1897 = vld [vmem:[#allocation4 + $0x198] sm:$0xff]
    %v1898 = vld [vmem:[#allocation4 + $0x1a0] sm:$0xff]
    %v1899 = vld [vmem:[#allocation4 + $0x1a8] sm:$0xff]
    %v1900 = vld [vmem:[#allocation4 + $0x1b0] sm:$0xff]
    %v1901 = vld [vmem:[#allocation4 + $0x1b8] sm:$0xff]
    %v1902 = vld [vmem:[#allocation4 + $0x1c0] sm:$0xff]
    %v1903 = vld [vmem:[#allocation4 + $0x1c8] sm:$0xff]
    %v1904 = vld [vmem:[#allocation4 + $0x1d0] sm:$0xff]
    %v1905 = vld [vmem:[#allocation4 + $0x1d8] sm:$0xff]
    %v1906 = vld [vmem:[#allocation4 + $0x1e0] sm:$0xff]
    %v1907 = vld [vmem:[#allocation4 + $0x1e8] sm:$0xff]
    %v1908 = vld [vmem:[#allocation4 + $0x1f0] sm:$0xff]
    %v1909 = vld [vmem:[#allocation4 + $0x1f8] sm:$0xff]
    %v1910 = vld [vmem:[#allocation4 + $0x200] sm:$0xff]
    %v1911 = vld [vmem:[#allocation4 + $0x208] sm:$0xff]
    %v1912 = vld [vmem:[#allocation4 + $0x210] sm:$0xff]
    %v1913 = vld [vmem:[#allocation4 + $0x218] sm:$0xff]
    %v1914 = vld [vmem:[#allocation4 + $0x220] sm:$0xff]
    %v1915 = vld [vmem:[#allocation4 + $0x228] sm:$0xff]
    %v1916 = vld [vmem:[#allocation4 + $0x230] sm:$0xff]
    %v1917 = vld [vmem:[#allocation4 + $0x238] sm:$0xff]
    %v1918 = vld [vmem:[#allocation4 + $0x240] sm:$0xff]
    %v1919 = vld [vmem:[#allocation4 + $0x248] sm:$0xff]
    %v1920 = vld [vmem:[#allocation4 + $0x250] sm:$0xff]
    %v1921 = vld [vmem:[#allocation4 + $0x258] sm:$0xff]
    %v1922 = vld [vmem:[#allocation4 + $0x260] sm:$0xff]
    %v1923 = vld [vmem:[#allocation4 + $0x268] sm:$0xff]
    %v1924 = vld [vmem:[#allocation4 + $0x270] sm:$0xff]
    %v1925 = vld [vmem:[#allocation4 + $0x278] sm:$0xff]
    %v1926 = vld [vmem:[#allocation4 + $0x280] sm:$0xff]
    %v1927 = vld [vmem:[#allocation4 + $0x288] sm:$0xff]
    %v1928 = vld [vmem:[#allocation4 + $0x290] sm:$0xff]
    %v1929 = vld [vmem:[#allocation4 + $0x298] sm:$0xff]
    %v1930 = vld [vmem:[#allocation4 + $0x2a0] sm:$0xff]
    %v1931 = vld [vmem:[#allocation4 + $0x2a8] sm:$0xff]
    %v1932 = vld [vmem:[#allocation4 + $0x2b0] sm:$0xff]
    %v1933 = vld [vmem:[#allocation4 + $0x2b8] sm:$0xff]
    %v1934 = vld [vmem:[#allocation4 + $0x2c0] sm:$0xff]
    %v1935 = vld [vmem:[#allocation4 + $0x2c8] sm:$0xff]
    %v1936 = vld [vmem:[#allocation4 + $0x2d0] sm:$0xff]
    %v1937 = vld [vmem:[#allocation4 + $0x2d8] sm:$0xff]
    %v1938 = vld [vmem:[#allocation4 + $0x2e0] sm:$0xff]
    %v1939 = vld [vmem:[#allocation4 + $0x2e8] sm:$0xff]
    %v1940 = vld [vmem:[#allocation4 + $0x2f0] sm:$0xff]
    %v1941 = vld [vmem:[#allocation4 + $0x2f8] sm:$0xff]
    %v1942 = vld [vmem:[#allocation4 + $0x300] sm:$0xff]
    %v1943 = vld [vmem:[#allocation4 + $0x308] sm:$0xff]
    %v1944 = vld [vmem:[#allocation4 + $0x310] sm:$0xff]
    %v1945 = vld [vmem:[#allocation4 + $0x318] sm:$0xff]
    %v1946 = vld [vmem:[#allocation4 + $0x320] sm:$0xff]
    %v1947 = vld [vmem:[#allocation4 + $0x328] sm:$0xff]
    %v1948 = vld [vmem:[#allocation4 + $0x330] sm:$0xff]
    %v1949 = vld [vmem:[#allocation4 + $0x338] sm:$0xff]
    %v1950 = vld [vmem:[#allocation4 + $0x340] sm:$0xff]
    %v1951 = vld [vmem:[#allocation4 + $0x348] sm:$0xff]
    %v1952 = vld [vmem:[#allocation4 + $0x350] sm:$0xff]
    %v1953 = vld [vmem:[#allocation4 + $0x358] sm:$0xff]
    %v1954 = vld [vmem:[#allocation4 + $0x360] sm:$0xff]
    %v1955 = vld [vmem:[#allocation4 + $0x368] sm:$0xff]
    %v1956 = vld [vmem:[#allocation4 + $0x370] sm:$0xff]
    %v1957 = vld [vmem:[#allocation4 + $0x378] sm:$0xff]
    %v1958 = vld [vmem:[#allocation4 + $0x380] sm:$0xff]
    %v1959 = vld [vmem:[#allocation4 + $0x388] sm:$0xff]
    %v1960 = vld [vmem:[#allocation4 + $0x390] sm:$0xff]
    %v1961 = vld [vmem:[#allocation4 + $0x398] sm:$0xff]
    %v1962 = vld [vmem:[#allocation4 + $0x3a0] sm:$0xff]
    %v1963 = vld [vmem:[#allocation4 + $0x3a8] sm:$0xff]
    %v1964 = vld [vmem:[#allocation4 + $0x3b0] sm:$0xff]
    %v1965 = vld [vmem:[#allocation4 + $0x3b8] sm:$0xff]
    %v1966 = vld [vmem:[#allocation4 + $0x3c0] sm:$0xff]
    %v1967 = vld [vmem:[#allocation4 + $0x3c8] sm:$0xff]
    %v1968 = vld [vmem:[#allocation4 + $0x3d0] sm:$0xff]
    %v1969 = vld [vmem:[#allocation4 + $0x3d8] sm:$0xff]
    %v1970 = vld [vmem:[#allocation4 + $0x3e0] sm:$0xff]
    %v1971 = vld [vmem:[#allocation4 + $0x3e8] sm:$0xff]
    %v1972 = vld [vmem:[#allocation4 + $0x3f0] sm:$0xff]
    %v1973 = vld [vmem:[#allocation4 + $0x3f8] sm:$0xff]
    %v1974 = vld [vmem:[%s4] sm:$0xf]
    %v1976 = vlaneseq
    %v1977 = vshrl.u32 %v1976, 7
    %v1978 = vsub.s32 0, %v1977
    %v1979 = vrot.slane %v1974, %v1978
    %v1980 = vlaneseq
    %v1981 = vshrl.u32 %v1980, 7
    %v1982 = vsub.s32 1, %v1981
    %v1983 = vrot.slane %v1974, %v1982
    %v1984 = vlaneseq
    %v1985 = vshrl.u32 %v1984, 7
    %v1986 = vsub.s32 2, %v1985
    %v1987 = vrot.slane %v1974, %v1986
    %v1988 = vlaneseq
    %v1989 = vshrl.u32 %v1988, 7
    %v1990 = vsub.s32 3, %v1989
    %v1991 = vrot.slane %v1974, %v1990
    %v2124 = vunpack.c.l.b16 %v1846
    %v2125 = vunpack.c.h.b16 %v1846
    %v2126 = vunpack.c.l.b16 %v1847
    %v2127 = vunpack.c.h.b16 %v1847
    %v2128 = vunpack.c.l.b16 %v1848
    %v2129 = vunpack.c.h.b16 %v1848
    %v2130 = vunpack.c.l.b16 %v1849
    %v2131 = vunpack.c.h.b16 %v1849
    %v2132 = vunpack.c.l.b16 %v1850
    %v2133 = vunpack.c.h.b16 %v1850
    %v2134 = vunpack.c.l.b16 %v1851
    %v2135 = vunpack.c.h.b16 %v1851
    %v2136 = vunpack.c.l.b16 %v1852
    %v2137 = vunpack.c.h.b16 %v1852
    %v2138 = vunpack.c.l.b16 %v1853
    %v2139 = vunpack.c.h.b16 %v1853
    %v2140 = vunpack.c.l.b16 %v1854
    %v2141 = vunpack.c.h.b16 %v1854
    %v2142 = vunpack.c.l.b16 %v1855
    %v2143 = vunpack.c.h.b16 %v1855
    %v2144 = vunpack.c.l.b16 %v1856
    %v2145 = vunpack.c.h.b16 %v1856
    %v2146 = vunpack.c.l.b16 %v1857
    %v2147 = vunpack.c.h.b16 %v1857
    %v2148 = vunpack.c.l.b16 %v1858
    %v2149 = vunpack.c.h.b16 %v1858
    %v2150 = vunpack.c.l.b16 %v1859
    %v2151 = vunpack.c.h.b16 %v1859
    %v2152 = vunpack.c.l.b16 %v1860
    %v2153 = vunpack.c.h.b16 %v1860
    %v2154 = vunpack.c.l.b16 %v1861
    %v2155 = vunpack.c.h.b16 %v1861
    %v2156 = vunpack.c.l.b16 %v1862
    %v2157 = vunpack.c.h.b16 %v1862
    %v2158 = vunpack.c.l.b16 %v1863
    %v2159 = vunpack.c.h.b16 %v1863
    %v2160 = vunpack.c.l.b16 %v1864
    %v2161 = vunpack.c.h.b16 %v1864
    %v2162 = vunpack.c.l.b16 %v1865
    %v2163 = vunpack.c.h.b16 %v1865
    %v2164 = vunpack.c.l.b16 %v1866
    %v2165 = vunpack.c.h.b16 %v1866
    %v2166 = vunpack.c.l.b16 %v1867
    %v2167 = vunpack.c.h.b16 %v1867
    %v2168 = vunpack.c.l.b16 %v1868
    %v2169 = vunpack.c.h.b16 %v1868
    %v2170 = vunpack.c.l.b16 %v1869
    %v2171 = vunpack.c.h.b16 %v1869
    %v2172 = vunpack.c.l.b16 %v1870
    %v2173 = vunpack.c.h.b16 %v1870
    %v2174 = vunpack.c.l.b16 %v1871
    %v2175 = vunpack.c.h.b16 %v1871
    %v2176 = vunpack.c.l.b16 %v1872
    %v2177 = vunpack.c.h.b16 %v1872
    %v2178 = vunpack.c.l.b16 %v1873
    %v2179 = vunpack.c.h.b16 %v1873
    %v2180 = vunpack.c.l.b16 %v1874
    %v2181 = vunpack.c.h.b16 %v1874
    %v2182 = vunpack.c.l.b16 %v1875
    %v2183 = vunpack.c.h.b16 %v1875
    %v2184 = vunpack.c.l.b16 %v1876
    %v2185 = vunpack.c.h.b16 %v1876
    %v2186 = vunpack.c.l.b16 %v1877
    %v2187 = vunpack.c.h.b16 %v1877
    %v2188 = vunpack.c.l.b16 %v1878
    %v2189 = vunpack.c.h.b16 %v1878
    %v2190 = vunpack.c.l.b16 %v1879
    %v2191 = vunpack.c.h.b16 %v1879
    %v2192 = vunpack.c.l.b16 %v1880
    %v2193 = vunpack.c.h.b16 %v1880
    %v2194 = vunpack.c.l.b16 %v1881
    %v2195 = vunpack.c.h.b16 %v1881
    %v2196 = vunpack.c.l.b16 %v1882
    %v2197 = vunpack.c.h.b16 %v1882
    %v2198 = vunpack.c.l.b16 %v1883
    %v2199 = vunpack.c.h.b16 %v1883
    %v2200 = vunpack.c.l.b16 %v1884
    %v2201 = vunpack.c.h.b16 %v1884
    %v2202 = vunpack.c.l.b16 %v1885
    %v2203 = vunpack.c.h.b16 %v1885
    %v2204 = vunpack.c.l.b16 %v1886
    %v2205 = vunpack.c.h.b16 %v1886
    %v2206 = vunpack.c.l.b16 %v1887
    %v2207 = vunpack.c.h.b16 %v1887
    %v2208 = vunpack.c.l.b16 %v1888
    %v2209 = vunpack.c.h.b16 %v1888
    %v2210 = vunpack.c.l.b16 %v1889
    %v2211 = vunpack.c.h.b16 %v1889
    %v2212 = vunpack.c.l.b16 %v1890
    %v2213 = vunpack.c.h.b16 %v1890
    %v2214 = vunpack.c.l.b16 %v1891
    %v2215 = vunpack.c.h.b16 %v1891
    %v2216 = vunpack.c.l.b16 %v1892
    %v2217 = vunpack.c.h.b16 %v1892
    %v2218 = vunpack.c.l.b16 %v1893
    %v2219 = vunpack.c.h.b16 %v1893
    %v2220 = vunpack.c.l.b16 %v1894
    %v2221 = vunpack.c.h.b16 %v1894
    %v2222 = vunpack.c.l.b16 %v1895
    %v2223 = vunpack.c.h.b16 %v1895
    %v2224 = vunpack.c.l.b16 %v1896
    %v2225 = vunpack.c.h.b16 %v1896
    %v2226 = vunpack.c.l.b16 %v1897
    %v2227 = vunpack.c.h.b16 %v1897
    %v2228 = vunpack.c.l.b16 %v1898
    %v2229 = vunpack.c.h.b16 %v1898
    %v2230 = vunpack.c.l.b16 %v1899
    %v2231 = vunpack.c.h.b16 %v1899
    %v2232 = vunpack.c.l.b16 %v1900
    %v2233 = vunpack.c.h.b16 %v1900
    %v2234 = vunpack.c.l.b16 %v1901
    %v2235 = vunpack.c.h.b16 %v1901
    %v2236 = vunpack.c.l.b16 %v1902
    %v2237 = vunpack.c.h.b16 %v1902
    %v2238 = vunpack.c.l.b16 %v1903
    %v2239 = vunpack.c.h.b16 %v1903
    %v2240 = vunpack.c.l.b16 %v1904
    %v2241 = vunpack.c.h.b16 %v1904
    %v2242 = vunpack.c.l.b16 %v1905
    %v2243 = vunpack.c.h.b16 %v1905
    %v2244 = vunpack.c.l.b16 %v1906
    %v2245 = vunpack.c.h.b16 %v1906
    %v2246 = vunpack.c.l.b16 %v1907
    %v2247 = vunpack.c.h.b16 %v1907
    %v2248 = vunpack.c.l.b16 %v1908
    %v2249 = vunpack.c.h.b16 %v1908
    %v2250 = vunpack.c.l.b16 %v1909
    %v2251 = vunpack.c.h.b16 %v1909
    %v2252 = vunpack.c.l.b16 %v1910
    %v2253 = vunpack.c.h.b16 %v1910
    %v2254 = vunpack.c.l.b16 %v1911
    %v2255 = vunpack.c.h.b16 %v1911
    %v2256 = vunpack.c.l.b16 %v1912
    %v2257 = vunpack.c.h.b16 %v1912
    %v2258 = vunpack.c.l.b16 %v1913
    %v2259 = vunpack.c.h.b16 %v1913
    %v2260 = vunpack.c.l.b16 %v1914
    %v2261 = vunpack.c.h.b16 %v1914
    %v2262 = vunpack.c.l.b16 %v1915
    %v2263 = vunpack.c.h.b16 %v1915
    %v2264 = vunpack.c.l.b16 %v1916
    %v2265 = vunpack.c.h.b16 %v1916
    %v2266 = vunpack.c.l.b16 %v1917
    %v2267 = vunpack.c.h.b16 %v1917
    %v2268 = vunpack.c.l.b16 %v1918
    %v2269 = vunpack.c.h.b16 %v1918
    %v2270 = vunpack.c.l.b16 %v1919
    %v2271 = vunpack.c.h.b16 %v1919
    %v2272 = vunpack.c.l.b16 %v1920
    %v2273 = vunpack.c.h.b16 %v1920
    %v2274 = vunpack.c.l.b16 %v1921
    %v2275 = vunpack.c.h.b16 %v1921
    %v2276 = vunpack.c.l.b16 %v1922
    %v2277 = vunpack.c.h.b16 %v1922
    %v2278 = vunpack.c.l.b16 %v1923
    %v2279 = vunpack.c.h.b16 %v1923
    %v2280 = vunpack.c.l.b16 %v1924
    %v2281 = vunpack.c.h.b16 %v1924
    %v2282 = vunpack.c.l.b16 %v1925
    %v2283 = vunpack.c.h.b16 %v1925
    %v2284 = vunpack.c.l.b16 %v1926
    %v2285 = vunpack.c.h.b16 %v1926
    %v2286 = vunpack.c.l.b16 %v1927
    %v2287 = vunpack.c.h.b16 %v1927
    %v2288 = vunpack.c.l.b16 %v1928
    %v2289 = vunpack.c.h.b16 %v1928
    %v2290 = vunpack.c.l.b16 %v1929
    %v2291 = vunpack.c.h.b16 %v1929
    %v2292 = vunpack.c.l.b16 %v1930
    %v2293 = vunpack.c.h.b16 %v1930
    %v2294 = vunpack.c.l.b16 %v1931
    %v2295 = vunpack.c.h.b16 %v1931
    %v2296 = vunpack.c.l.b16 %v1932
    %v2297 = vunpack.c.h.b16 %v1932
    %v2298 = vunpack.c.l.b16 %v1933
    %v2299 = vunpack.c.h.b16 %v1933
    %v2300 = vunpack.c.l.b16 %v1934
    %v2301 = vunpack.c.h.b16 %v1934
    %v2302 = vunpack.c.l.b16 %v1935
    %v2303 = vunpack.c.h.b16 %v1935
    %v2304 = vunpack.c.l.b16 %v1936
    %v2305 = vunpack.c.h.b16 %v1936
    %v2306 = vunpack.c.l.b16 %v1937
    %v2307 = vunpack.c.h.b16 %v1937
    %v2308 = vunpack.c.l.b16 %v1938
    %v2309 = vunpack.c.h.b16 %v1938
    %v2310 = vunpack.c.l.b16 %v1939
    %v2311 = vunpack.c.h.b16 %v1939
    %v2312 = vunpack.c.l.b16 %v1940
    %v2313 = vunpack.c.h.b16 %v1940
    %v2314 = vunpack.c.l.b16 %v1941
    %v2315 = vunpack.c.h.b16 %v1941
    %v2316 = vunpack.c.l.b16 %v1942
    %v2317 = vunpack.c.h.b16 %v1942
    %v2318 = vunpack.c.l.b16 %v1943
    %v2319 = vunpack.c.h.b16 %v1943
    %v2320 = vunpack.c.l.b16 %v1944
    %v2321 = vunpack.c.h.b16 %v1944
    %v2322 = vunpack.c.l.b16 %v1945
    %v2323 = vunpack.c.h.b16 %v1945
    %v2324 = vunpack.c.l.b16 %v1946
    %v2325 = vunpack.c.h.b16 %v1946
    %v2326 = vunpack.c.l.b16 %v1947
    %v2327 = vunpack.c.h.b16 %v1947
    %v2328 = vunpack.c.l.b16 %v1948
    %v2329 = vunpack.c.h.b16 %v1948
    %v2330 = vunpack.c.l.b16 %v1949
    %v2331 = vunpack.c.h.b16 %v1949
    %v2332 = vunpack.c.l.b16 %v1950
    %v2333 = vunpack.c.h.b16 %v1950
    %v2334 = vunpack.c.l.b16 %v1951
    %v2335 = vunpack.c.h.b16 %v1951
    %v2336 = vunpack.c.l.b16 %v1952
    %v2337 = vunpack.c.h.b16 %v1952
    %v2338 = vunpack.c.l.b16 %v1953
    %v2339 = vunpack.c.h.b16 %v1953
    %v2340 = vunpack.c.l.b16 %v1954
    %v2341 = vunpack.c.h.b16 %v1954
    %v2342 = vunpack.c.l.b16 %v1955
    %v2343 = vunpack.c.h.b16 %v1955
    %v2344 = vunpack.c.l.b16 %v1956
    %v2345 = vunpack.c.h.b16 %v1956
    %v2346 = vunpack.c.l.b16 %v1957
    %v2347 = vunpack.c.h.b16 %v1957
    %v2348 = vunpack.c.l.b16 %v1958
    %v2349 = vunpack.c.h.b16 %v1958
    %v2350 = vunpack.c.l.b16 %v1959
    %v2351 = vunpack.c.h.b16 %v1959
    %v2352 = vunpack.c.l.b16 %v1960
    %v2353 = vunpack.c.h.b16 %v1960
    %v2354 = vunpack.c.l.b16 %v1961
    %v2355 = vunpack.c.h.b16 %v1961
    %v2356 = vunpack.c.l.b16 %v1962
    %v2357 = vunpack.c.h.b16 %v1962
    %v2358 = vunpack.c.l.b16 %v1963
    %v2359 = vunpack.c.h.b16 %v1963
    %v2360 = vunpack.c.l.b16 %v1964
    %v2361 = vunpack.c.h.b16 %v1964
    %v2362 = vunpack.c.l.b16 %v1965
    %v2363 = vunpack.c.h.b16 %v1965
    %v2364 = vunpack.c.l.b16 %v1966
    %v2365 = vunpack.c.h.b16 %v1966
    %v2366 = vunpack.c.l.b16 %v1967
    %v2367 = vunpack.c.h.b16 %v1967
    %v2368 = vunpack.c.l.b16 %v1968
    %v2369 = vunpack.c.h.b16 %v1968
    %v2370 = vunpack.c.l.b16 %v1969
    %v2371 = vunpack.c.h.b16 %v1969
    %v2372 = vunpack.c.l.b16 %v1970
    %v2373 = vunpack.c.h.b16 %v1970
    %v2374 = vunpack.c.l.b16 %v1971
    %v2375 = vunpack.c.h.b16 %v1971
    %v2376 = vunpack.c.l.b16 %v1972
    %v2377 = vunpack.c.h.b16 %v1972
    %v2378 = vunpack.c.l.b16 %v1973
    %v2379 = vunpack.c.h.b16 %v1973
    %v2380 = vpack.c.b16 %v2128, %v2124
    %v2381 = vpack.c.b16 %v2129, %v2125
    %v2382 = vpack.c.b16 %v2130, %v2126
    %v2383 = vpack.c.b16 %v2131, %v2127
    %v2384 = vpack.c.b16 %v2136, %v2132
    %v2385 = vpack.c.b16 %v2137, %v2133
    %v2386 = vpack.c.b16 %v2138, %v2134
    %v2387 = vpack.c.b16 %v2139, %v2135
    %v2388 = vpack.c.b16 %v2144, %v2140
    %v2389 = vpack.c.b16 %v2145, %v2141
    %v2390 = vpack.c.b16 %v2146, %v2142
    %v2391 = vpack.c.b16 %v2147, %v2143
    %v2392 = vpack.c.b16 %v2152, %v2148
    %v2393 = vpack.c.b16 %v2153, %v2149
    %v2394 = vpack.c.b16 %v2154, %v2150
    %v2395 = vpack.c.b16 %v2155, %v2151
    %v2396 = vpack.c.b16 %v2160, %v2156
    %v2397 = vpack.c.b16 %v2161, %v2157
    %v2398 = vpack.c.b16 %v2162, %v2158
    %v2399 = vpack.c.b16 %v2163, %v2159
    %v2400 = vpack.c.b16 %v2168, %v2164
    %v2401 = vpack.c.b16 %v2169, %v2165
    %v2402 = vpack.c.b16 %v2170, %v2166
    %v2403 = vpack.c.b16 %v2171, %v2167
    %v2404 = vpack.c.b16 %v2176, %v2172
    %v2405 = vpack.c.b16 %v2177, %v2173
    %v2406 = vpack.c.b16 %v2178, %v2174
    %v2407 = vpack.c.b16 %v2179, %v2175
    %v2408 = vpack.c.b16 %v2184, %v2180
    %v2409 = vpack.c.b16 %v2185, %v2181
    %v2410 = vpack.c.b16 %v2186, %v2182
    %v2411 = vpack.c.b16 %v2187, %v2183
    %v2412 = vpack.c.b16 %v2192, %v2188
    %v2413 = vpack.c.b16 %v2193, %v2189
    %v2414 = vpack.c.b16 %v2194, %v2190
    %v2415 = vpack.c.b16 %v2195, %v2191
    %v2416 = vpack.c.b16 %v2200, %v2196
    %v2417 = vpack.c.b16 %v2201, %v2197
    %v2418 = vpack.c.b16 %v2202, %v2198
    %v2419 = vpack.c.b16 %v2203, %v2199
    %v2420 = vpack.c.b16 %v2208, %v2204
    %v2421 = vpack.c.b16 %v2209, %v2205
    %v2422 = vpack.c.b16 %v2210, %v2206
    %v2423 = vpack.c.b16 %v2211, %v2207
    %v2424 = vpack.c.b16 %v2216, %v2212
    %v2425 = vpack.c.b16 %v2217, %v2213
    %v2426 = vpack.c.b16 %v2218, %v2214
    %v2427 = vpack.c.b16 %v2219, %v2215
    %v2428 = vpack.c.b16 %v2224, %v2220
    %v2429 = vpack.c.b16 %v2225, %v2221
    %v2430 = vpack.c.b16 %v2226, %v2222
    %v2431 = vpack.c.b16 %v2227, %v2223
    %v2432 = vpack.c.b16 %v2232, %v2228
    %v2433 = vpack.c.b16 %v2233, %v2229
    %v2434 = vpack.c.b16 %v2234, %v2230
    %v2435 = vpack.c.b16 %v2235, %v2231
    %v2436 = vpack.c.b16 %v2240, %v2236
    %v2437 = vpack.c.b16 %v2241, %v2237
    %v2438 = vpack.c.b16 %v2242, %v2238
    %v2439 = vpack.c.b16 %v2243, %v2239
    %v2440 = vpack.c.b16 %v2248, %v2244
    %v2441 = vpack.c.b16 %v2249, %v2245
    %v2442 = vpack.c.b16 %v2250, %v2246
    %v2443 = vpack.c.b16 %v2251, %v2247
    %v2444 = vpack.c.b16 %v2256, %v2252
    %v2445 = vpack.c.b16 %v2257, %v2253
    %v2446 = vpack.c.b16 %v2258, %v2254
    %v2447 = vpack.c.b16 %v2259, %v2255
    %v2448 = vpack.c.b16 %v2264, %v2260
    %v2449 = vpack.c.b16 %v2265, %v2261
    %v2450 = vpack.c.b16 %v2266, %v2262
    %v2451 = vpack.c.b16 %v2267, %v2263
    %v2452 = vpack.c.b16 %v2272, %v2268
    %v2453 = vpack.c.b16 %v2273, %v2269
    %v2454 = vpack.c.b16 %v2274, %v2270
    %v2455 = vpack.c.b16 %v2275, %v2271
    %v2456 = vpack.c.b16 %v2280, %v2276
    %v2457 = vpack.c.b16 %v2281, %v2277
    %v2458 = vpack.c.b16 %v2282, %v2278
    %v2459 = vpack.c.b16 %v2283, %v2279
    %v2460 = vpack.c.b16 %v2288, %v2284
    %v2461 = vpack.c.b16 %v2289, %v2285
    %v2462 = vpack.c.b16 %v2290, %v2286
    %v2463 = vpack.c.b16 %v2291, %v2287
    %v2464 = vpack.c.b16 %v2296, %v2292
    %v2465 = vpack.c.b16 %v2297, %v2293
    %v2466 = vpack.c.b16 %v2298, %v2294
    %v2467 = vpack.c.b16 %v2299, %v2295
    %v2468 = vpack.c.b16 %v2304, %v2300
    %v2469 = vpack.c.b16 %v2305, %v2301
    %v2470 = vpack.c.b16 %v2306, %v2302
    %v2471 = vpack.c.b16 %v2307, %v2303
    %v2472 = vpack.c.b16 %v2312, %v2308
    %v2473 = vpack.c.b16 %v2313, %v2309
    %v2474 = vpack.c.b16 %v2314, %v2310
    %v2475 = vpack.c.b16 %v2315, %v2311
    %v2476 = vpack.c.b16 %v2320, %v2316
    %v2477 = vpack.c.b16 %v2321, %v2317
    %v2478 = vpack.c.b16 %v2322, %v2318
    %v2479 = vpack.c.b16 %v2323, %v2319
    %v2480 = vpack.c.b16 %v2328, %v2324
    %v2481 = vpack.c.b16 %v2329, %v2325
    %v2482 = vpack.c.b16 %v2330, %v2326
    %v2483 = vpack.c.b16 %v2331, %v2327
    %v2484 = vpack.c.b16 %v2336, %v2332
    %v2485 = vpack.c.b16 %v2337, %v2333
    %v2486 = vpack.c.b16 %v2338, %v2334
    %v2487 = vpack.c.b16 %v2339, %v2335
    %v2488 = vpack.c.b16 %v2344, %v2340
    %v2489 = vpack.c.b16 %v2345, %v2341
    %v2490 = vpack.c.b16 %v2346, %v2342
    %v2491 = vpack.c.b16 %v2347, %v2343
    %v2492 = vpack.c.b16 %v2352, %v2348
    %v2493 = vpack.c.b16 %v2353, %v2349
    %v2494 = vpack.c.b16 %v2354, %v2350
    %v2495 = vpack.c.b16 %v2355, %v2351
    %v2496 = vpack.c.b16 %v2360, %v2356
    %v2497 = vpack.c.b16 %v2361, %v2357
    %v2498 = vpack.c.b16 %v2362, %v2358
    %v2499 = vpack.c.b16 %v2363, %v2359
    %v2500 = vpack.c.b16 %v2368, %v2364
    %v2501 = vpack.c.b16 %v2369, %v2365
    %v2502 = vpack.c.b16 %v2370, %v2366
    %v2503 = vpack.c.b16 %v2371, %v2367
    %v2504 = vpack.c.b16 %v2376, %v2372
    %v2505 = vpack.c.b16 %v2377, %v2373
    %v2506 = vpack.c.b16 %v2378, %v2374
    %v2507 = vpack.c.b16 %v2379, %v2375
    %2636 = vmatprep.subr.bf16.mxu0 %v2381
    %2637 = vmatpush1.bf16.msra.mxu0 %v2380
    %2638 = vmatprep.subr.bf16.mxu0 %v2385
    %2639 = vmatpush1.bf16.msra.mxu0 %v2384
    %2640 = vmatprep.subr.bf16.mxu0 %v2389
    %2641 = vmatpush1.bf16.msra.mxu0 %v2388
    %2642 = vmatprep.subr.bf16.mxu0 %v2393
    %2643 = vmatpush1.bf16.msra.mxu0 %v2392
    %2644 = vmatprep.subr.bf16.mxu0 %v2397
    %2645 = vmatpush1.bf16.msra.mxu0 %v2396
    %2646 = vmatprep.subr.bf16.mxu0 %v2401
    %2647 = vmatpush1.bf16.msra.mxu0 %v2400
    %2648 = vmatprep.subr.bf16.mxu0 %v2405
    %2649 = vmatpush1.bf16.msra.mxu0 %v2404
    %2650 = vmatprep.subr.bf16.mxu0 %v2409
    %2651 = vmatpush1.bf16.msra.mxu0 %v2408
    %2652 = vmatprep.subr.bf16.mxu0 %v2413
    %2653 = vmatpush1.bf16.msra.mxu0 %v2412
    %2654 = vmatprep.subr.bf16.mxu0 %v2417
    %2655 = vmatpush1.bf16.msra.mxu0 %v2416
    %2656 = vmatprep.subr.bf16.mxu0 %v2421
    %2657 = vmatpush1.bf16.msra.mxu0 %v2420
    %2658 = vmatprep.subr.bf16.mxu0 %v2425
    %2659 = vmatpush1.bf16.msra.mxu0 %v2424
    %2660 = vmatprep.subr.bf16.mxu0 %v2429
    %2661 = vmatpush1.bf16.msra.mxu0 %v2428
    %2662 = vmatprep.subr.bf16.mxu0 %v2433
    %2663 = vmatpush1.bf16.msra.mxu0 %v2432
    %2664 = vmatprep.subr.bf16.mxu0 %v2437
    %2665 = vmatpush1.bf16.msra.mxu0 %v2436
    %2666 = vmatprep.subr.bf16.mxu0 %v2441
    %2667 = vmatpush1.bf16.msra.mxu0 %v2440
    %2668 = vmatprep.mubr.bf16.mxu0 %v1843
    %2669 = vmatmul.mubr.bf16.gmra.mrb[0].mxu0 %v1842
    %v2670 = vpop.f32.mrb[0].mxu0
    %v2671 = vadd.f32 %v1979, %v2670
    %v2672 = vpop.f32.mrb[0].mxu0
    %v2673 = vadd.f32 %v1983, %v2672
    %v2674 = vpop.f32.mrb[0].mxu0
    %v2675 = vadd.f32 %v1979, %v2674
    %v2676 = vpop.f32.mrb[0].mxu0
    %v2677 = vadd.f32 %v1983, %v2676
    %2678 = vdwg.mxu0
    %2679 = vmatprep.subr.bf16.mxu0 %v2445
    %2680 = vmatpush1.bf16.msra.mxu0 %v2444
    %2681 = vmatprep.subr.bf16.mxu0 %v2449
    %2682 = vmatpush1.bf16.msra.mxu0 %v2448
    %2683 = vmatprep.subr.bf16.mxu0 %v2453
    %2684 = vmatpush1.bf16.msra.mxu0 %v2452
    %2685 = vmatprep.subr.bf16.mxu0 %v2457
    %2686 = vmatpush1.bf16.msra.mxu0 %v2456
    %2687 = vmatprep.subr.bf16.mxu0 %v2461
    %2688 = vmatpush1.bf16.msra.mxu0 %v2460
    %2689 = vmatprep.subr.bf16.mxu0 %v2465
    %2690 = vmatpush1.bf16.msra.mxu0 %v2464
    %2691 = vmatprep.subr.bf16.mxu0 %v2469
    %2692 = vmatpush1.bf16.msra.mxu0 %v2468
    %2693 = vmatprep.subr.bf16.mxu0 %v2473
    %2694 = vmatpush1.bf16.msra.mxu0 %v2472
    %2695 = vmatprep.subr.bf16.mxu0 %v2477
    %2696 = vmatpush1.bf16.msra.mxu0 %v2476
    %2697 = vmatprep.subr.bf16.mxu0 %v2481
    %2698 = vmatpush1.bf16.msra.mxu0 %v2480
    %2699 = vmatprep.subr.bf16.mxu0 %v2485
    %2700 = vmatpush1.bf16.msra.mxu0 %v2484
    %2701 = vmatprep.subr.bf16.mxu0 %v2489
    %2702 = vmatpush1.bf16.msra.mxu0 %v2488
    %2703 = vmatprep.subr.bf16.mxu0 %v2493
    %2704 = vmatpush1.bf16.msra.mxu0 %v2492
    %2705 = vmatprep.subr.bf16.mxu0 %v2497
    %2706 = vmatpush1.bf16.msra.mxu0 %v2496
    %2707 = vmatprep.subr.bf16.mxu0 %v2501
    %2708 = vmatpush1.bf16.msra.mxu0 %v2500
    %2709 = vmatprep.subr.bf16.mxu0 %v2505
    %2710 = vmatpush1.bf16.msra.mxu0 %v2504
    %2711 = vmatprep.mubr.bf16.mxu0 %v1845
    %2712 = vmatmul.mubr.bf16.gmra.mrb[0].mxu0 %v1844
    %v2713 = vpop.f32.mrb[0].mxu0
    %v2714 = vadd.f32 %v2671, %v2713
    %v2715 = vpop.f32.mrb[0].mxu0
    %v2716 = vadd.f32 %v2673, %v2715
    %v2717 = vpop.f32.mrb[0].mxu0
    %v2718 = vadd.f32 %v2675, %v2717
    %v2719 = vpop.f32.mrb[0].mxu0
    %v2720 = vadd.f32 %v2677, %v2719
    %2721 = vdwg.mxu0
    %2722 = vmatprep.subr.bf16.mxu0 %v2383
    %2723 = vmatpush1.bf16.msra.mxu0 %v2382
    %2724 = vmatprep.subr.bf16.mxu0 %v2387
    %2725 = vmatpush1.bf16.msra.mxu0 %v2386
    %2726 = vmatprep.subr.bf16.mxu0 %v2391
    %2727 = vmatpush1.bf16.msra.mxu0 %v2390
    %2728 = vmatprep.subr.bf16.mxu0 %v2395
    %2729 = vmatpush1.bf16.msra.mxu0 %v2394
    %2730 = vmatprep.subr.bf16.mxu0 %v2399
    %2731 = vmatpush1.bf16.msra.mxu0 %v2398
    %2732 = vmatprep.subr.bf16.mxu0 %v2403
    %2733 = vmatpush1.bf16.msra.mxu0 %v2402
    %2734 = vmatprep.subr.bf16.mxu0 %v2407
    %2735 = vmatpush1.bf16.msra.mxu0 %v2406
    %2736 = vmatprep.subr.bf16.mxu0 %v2411
    %2737 = vmatpush1.bf16.msra.mxu0 %v2410
    %2738 = vmatprep.subr.bf16.mxu0 %v2415
    %2739 = vmatpush1.bf16.msra.mxu0 %v2414
    %2740 = vmatprep.subr.bf16.mxu0 %v2419
    %2741 = vmatpush1.bf16.msra.mxu0 %v2418
    %2742 = vmatprep.subr.bf16.mxu0 %v2423
    %2743 = vmatpush1.bf16.msra.mxu0 %v2422
    %2744 = vmatprep.subr.bf16.mxu0 %v2427
    %2745 = vmatpush1.bf16.msra.mxu0 %v2426
    %2746 = vmatprep.subr.bf16.mxu0 %v2431
    %2747 = vmatpush1.bf16.msra.mxu0 %v2430
    %2748 = vmatprep.subr.bf16.mxu0 %v2435
    %2749 = vmatpush1.bf16.msra.mxu0 %v2434
    %2750 = vmatprep.subr.bf16.mxu0 %v2439
    %2751 = vmatpush1.bf16.msra.mxu0 %v2438
    %2752 = vmatprep.subr.bf16.mxu0 %v2443
    %2753 = vmatpush1.bf16.msra.mxu0 %v2442
    %2754 = vmatprep.mubr.bf16.mxu0 %v1843
    %2755 = vmatmul.mubr.bf16.gmra.mrb[0].mxu0 %v1842
    %v2756 = vpop.f32.mrb[0].mxu0
    %v2757 = vadd.f32 %v1987, %v2756
    %v2758 = vpop.f32.mrb[0].mxu0
    %v2759 = vadd.f32 %v1991, %v2758
    %v2760 = vpop.f32.mrb[0].mxu0
    %v2761 = vadd.f32 %v1987, %v2760
    %v2762 = vpop.f32.mrb[0].mxu0
    %v2763 = vadd.f32 %v1991, %v2762
    %2764 = vdwg.mxu0
    %2765 = vmatprep.subr.bf16.mxu0 %v2447
    %2766 = vmatpush1.bf16.msra.mxu0 %v2446
    %2767 = vmatprep.subr.bf16.mxu0 %v2451
    %2768 = vmatpush1.bf16.msra.mxu0 %v2450
    %2769 = vmatprep.subr.bf16.mxu0 %v2455
    %2770 = vmatpush1.bf16.msra.mxu0 %v2454
    %2771 = vmatprep.subr.bf16.mxu0 %v2459
    %2772 = vmatpush1.bf16.msra.mxu0 %v2458
    %2773 = vmatprep.subr.bf16.mxu0 %v2463
    %2774 = vmatpush1.bf16.msra.mxu0 %v2462
    %2775 = vmatprep.subr.bf16.mxu0 %v2467
    %2776 = vmatpush1.bf16.msra.mxu0 %v2466
    %2777 = vmatprep.subr.bf16.mxu0 %v2471
    %2778 = vmatpush1.bf16.msra.mxu0 %v2470
    %2779 = vmatprep.subr.bf16.mxu0 %v2475
    %2780 = vmatpush1.bf16.msra.mxu0 %v2474
    %2781 = vmatprep.subr.bf16.mxu0 %v2479
    %2782 = vmatpush1.bf16.msra.mxu0 %v2478
    %2783 = vmatprep.subr.bf16.mxu0 %v2483
    %2784 = vmatpush1.bf16.msra.mxu0 %v2482
    %2785 = vmatprep.subr.bf16.mxu0 %v2487
    %2786 = vmatpush1.bf16.msra.mxu0 %v2486
    %2787 = vmatprep.subr.bf16.mxu0 %v2491
    %2788 = vmatpush1.bf16.msra.mxu0 %v2490
    %2789 = vmatprep.subr.bf16.mxu0 %v2495
    %2790 = vmatpush1.bf16.msra.mxu0 %v2494
    %2791 = vmatprep.subr.bf16.mxu0 %v2499
    %2792 = vmatpush1.bf16.msra.mxu0 %v2498
    %2793 = vmatprep.subr.bf16.mxu0 %v2503
    %2794 = vmatpush1.bf16.msra.mxu0 %v2502
    %2795 = vmatprep.subr.bf16.mxu0 %v2507
    %2796 = vmatpush1.bf16.msra.mxu0 %v2506
    %2797 = vmatprep.mubr.bf16.mxu0 %v1845
    %2798 = vmatmul.mubr.bf16.gmra.mrb[0].mxu0 %v1844
    %v2799 = vpop.f32.mrb[0].mxu0
    %v2800 = vadd.f32 %v2757, %v2799
    %v2801 = vpop.f32.mrb[0].mxu0
    %v2802 = vadd.f32 %v2759, %v2801
    %v2803 = vpop.f32.mrb[0].mxu0
    %v2804 = vadd.f32 %v2761, %v2803
    %v2805 = vpop.f32.mrb[0].mxu0
    %v2806 = vadd.f32 %v2763, %v2805
    %2807 = vdwg.mxu0
    %v2808 = vpack.c.bf16 %v2718, %v2714
    %v2809 = vpack.c.bf16 %v2720, %v2716
    %v2810 = vpack.c.bf16 %v2804, %v2800
    %v2811 = vpack.c.bf16 %v2806, %v2802
    %v2812 = vld [vmem:[#allocation6] sm:$0xff]
    %v2813 = vld [vmem:[#allocation6 + $0x8] sm:$0xff]
    %v2814 = vld [vmem:[#allocation6 + $0x10] sm:$0xff]
    %v2815 = vld [vmem:[#allocation6 + $0x18] sm:$0xff]
    %v2816 = vld [vmem:[#allocation6 + $0x20] sm:$0xff]
    %v2817 = vld [vmem:[#allocation6 + $0x28] sm:$0xff]
    %v2818 = vld [vmem:[#allocation6 + $0x30] sm:$0xff]
    %v2819 = vld [vmem:[#allocation6 + $0x38] sm:$0xff]
    %v2820 = vld [vmem:[#allocation6 + $0x40] sm:$0xff]
    %v2821 = vld [vmem:[#allocation6 + $0x48] sm:$0xff]
    %v2822 = vld [vmem:[#allocation6 + $0x50] sm:$0xff]
    %v2823 = vld [vmem:[#allocation6 + $0x58] sm:$0xff]
    %v2824 = vld [vmem:[#allocation6 + $0x60] sm:$0xff]
    %v2825 = vld [vmem:[#allocation6 + $0x68] sm:$0xff]
    %v2826 = vld [vmem:[#allocation6 + $0x70] sm:$0xff]
    %v2827 = vld [vmem:[#allocation6 + $0x78] sm:$0xff]
    %v2828 = vld [vmem:[#allocation6 + $0x80] sm:$0xff]
    %v2829 = vld [vmem:[#allocation6 + $0x88] sm:$0xff]
    %v2830 = vld [vmem:[#allocation6 + $0x90] sm:$0xff]
    %v2831 = vld [vmem:[#allocation6 + $0x98] sm:$0xff]
    %v2832 = vld [vmem:[#allocation6 + $0xa0] sm:$0xff]
    %v2833 = vld [vmem:[#allocation6 + $0xa8] sm:$0xff]
    %v2834 = vld [vmem:[#allocation6 + $0xb0] sm:$0xff]
    %v2835 = vld [vmem:[#allocation6 + $0xb8] sm:$0xff]
    %v2836 = vld [vmem:[#allocation6 + $0xc0] sm:$0xff]
    %v2837 = vld [vmem:[#allocation6 + $0xc8] sm:$0xff]
    %v2838 = vld [vmem:[#allocation6 + $0xd0] sm:$0xff]
    %v2839 = vld [vmem:[#allocation6 + $0xd8] sm:$0xff]
    %v2840 = vld [vmem:[#allocation6 + $0xe0] sm:$0xff]
    %v2841 = vld [vmem:[#allocation6 + $0xe8] sm:$0xff]
    %v2842 = vld [vmem:[#allocation6 + $0xf0] sm:$0xff]
    %v2843 = vld [vmem:[#allocation6 + $0xf8] sm:$0xff]
    %v2844 = vld [vmem:[#allocation6 + $0x100] sm:$0xff]
    %v2845 = vld [vmem:[#allocation6 + $0x108] sm:$0xff]
    %v2846 = vld [vmem:[#allocation6 + $0x110] sm:$0xff]
    %v2847 = vld [vmem:[#allocation6 + $0x118] sm:$0xff]
    %v2848 = vld [vmem:[#allocation6 + $0x120] sm:$0xff]
    %v2849 = vld [vmem:[#allocation6 + $0x128] sm:$0xff]
    %v2850 = vld [vmem:[#allocation6 + $0x130] sm:$0xff]
    %v2851 = vld [vmem:[#allocation6 + $0x138] sm:$0xff]
    %v2852 = vld [vmem:[#allocation6 + $0x140] sm:$0xff]
    %v2853 = vld [vmem:[#allocation6 + $0x148] sm:$0xff]
    %v2854 = vld [vmem:[#allocation6 + $0x150] sm:$0xff]
    %v2855 = vld [vmem:[#allocation6 + $0x158] sm:$0xff]
    %v2856 = vld [vmem:[#allocation6 + $0x160] sm:$0xff]
    %v2857 = vld [vmem:[#allocation6 + $0x168] sm:$0xff]
    %v2858 = vld [vmem:[#allocation6 + $0x170] sm:$0xff]
    %v2859 = vld [vmem:[#allocation6 + $0x178] sm:$0xff]
    %v2860 = vld [vmem:[#allocation6 + $0x180] sm:$0xff]
    %v2861 = vld [vmem:[#allocation6 + $0x188] sm:$0xff]
    %v2862 = vld [vmem:[#allocation6 + $0x190] sm:$0xff]
    %v2863 = vld [vmem:[#allocation6 + $0x198] sm:$0xff]
    %v2864 = vld [vmem:[#allocation6 + $0x1a0] sm:$0xff]
    %v2865 = vld [vmem:[#allocation6 + $0x1a8] sm:$0xff]
    %v2866 = vld [vmem:[#allocation6 + $0x1b0] sm:$0xff]
    %v2867 = vld [vmem:[#allocation6 + $0x1b8] sm:$0xff]
    %v2868 = vld [vmem:[#allocation6 + $0x1c0] sm:$0xff]
    %v2869 = vld [vmem:[#allocation6 + $0x1c8] sm:$0xff]
    %v2870 = vld [vmem:[#allocation6 + $0x1d0] sm:$0xff]
    %v2871 = vld [vmem:[#allocation6 + $0x1d8] sm:$0xff]
    %v2872 = vld [vmem:[#allocation6 + $0x1e0] sm:$0xff]
    %v2873 = vld [vmem:[#allocation6 + $0x1e8] sm:$0xff]
    %v2874 = vld [vmem:[#allocation6 + $0x1f0] sm:$0xff]
    %v2875 = vld [vmem:[#allocation6 + $0x1f8] sm:$0xff]
    %v2876 = vld [vmem:[#allocation6 + $0x200] sm:$0xff]
    %v2877 = vld [vmem:[#allocation6 + $0x208] sm:$0xff]
    %v2878 = vld [vmem:[#allocation6 + $0x210] sm:$0xff]
    %v2879 = vld [vmem:[#allocation6 + $0x218] sm:$0xff]
    %v2880 = vld [vmem:[#allocation6 + $0x220] sm:$0xff]
    %v2881 = vld [vmem:[#allocation6 + $0x228] sm:$0xff]
    %v2882 = vld [vmem:[#allocation6 + $0x230] sm:$0xff]
    %v2883 = vld [vmem:[#allocation6 + $0x238] sm:$0xff]
    %v2884 = vld [vmem:[#allocation6 + $0x240] sm:$0xff]
    %v2885 = vld [vmem:[#allocation6 + $0x248] sm:$0xff]
    %v2886 = vld [vmem:[#allocation6 + $0x250] sm:$0xff]
    %v2887 = vld [vmem:[#allocation6 + $0x258] sm:$0xff]
    %v2888 = vld [vmem:[#allocation6 + $0x260] sm:$0xff]
    %v2889 = vld [vmem:[#allocation6 + $0x268] sm:$0xff]
    %v2890 = vld [vmem:[#allocation6 + $0x270] sm:$0xff]
    %v2891 = vld [vmem:[#allocation6 + $0x278] sm:$0xff]
    %v2892 = vld [vmem:[#allocation6 + $0x280] sm:$0xff]
    %v2893 = vld [vmem:[#allocation6 + $0x288] sm:$0xff]
    %v2894 = vld [vmem:[#allocation6 + $0x290] sm:$0xff]
    %v2895 = vld [vmem:[#allocation6 + $0x298] sm:$0xff]
    %v2896 = vld [vmem:[#allocation6 + $0x2a0] sm:$0xff]
    %v2897 = vld [vmem:[#allocation6 + $0x2a8] sm:$0xff]
    %v2898 = vld [vmem:[#allocation6 + $0x2b0] sm:$0xff]
    %v2899 = vld [vmem:[#allocation6 + $0x2b8] sm:$0xff]
    %v2900 = vld [vmem:[#allocation6 + $0x2c0] sm:$0xff]
    %v2901 = vld [vmem:[#allocation6 + $0x2c8] sm:$0xff]
    %v2902 = vld [vmem:[#allocation6 + $0x2d0] sm:$0xff]
    %v2903 = vld [vmem:[#allocation6 + $0x2d8] sm:$0xff]
    %v2904 = vld [vmem:[#allocation6 + $0x2e0] sm:$0xff]
    %v2905 = vld [vmem:[#allocation6 + $0x2e8] sm:$0xff]
    %v2906 = vld [vmem:[#allocation6 + $0x2f0] sm:$0xff]
    %v2907 = vld [vmem:[#allocation6 + $0x2f8] sm:$0xff]
    %v2908 = vld [vmem:[#allocation6 + $0x300] sm:$0xff]
    %v2909 = vld [vmem:[#allocation6 + $0x308] sm:$0xff]
    %v2910 = vld [vmem:[#allocation6 + $0x310] sm:$0xff]
    %v2911 = vld [vmem:[#allocation6 + $0x318] sm:$0xff]
    %v2912 = vld [vmem:[#allocation6 + $0x320] sm:$0xff]
    %v2913 = vld [vmem:[#allocation6 + $0x328] sm:$0xff]
    %v2914 = vld [vmem:[#allocation6 + $0x330] sm:$0xff]
    %v2915 = vld [vmem:[#allocation6 + $0x338] sm:$0xff]
    %v2916 = vld [vmem:[#allocation6 + $0x340] sm:$0xff]
    %v2917 = vld [vmem:[#allocation6 + $0x348] sm:$0xff]
    %v2918 = vld [vmem:[#allocation6 + $0x350] sm:$0xff]
    %v2919 = vld [vmem:[#allocation6 + $0x358] sm:$0xff]
    %v2920 = vld [vmem:[#allocation6 + $0x360] sm:$0xff]
    %v2921 = vld [vmem:[#allocation6 + $0x368] sm:$0xff]
    %v2922 = vld [vmem:[#allocation6 + $0x370] sm:$0xff]
    %v2923 = vld [vmem:[#allocation6 + $0x378] sm:$0xff]
    %v2924 = vld [vmem:[#allocation6 + $0x380] sm:$0xff]
    %v2925 = vld [vmem:[#allocation6 + $0x388] sm:$0xff]
    %v2926 = vld [vmem:[#allocation6 + $0x390] sm:$0xff]
    %v2927 = vld [vmem:[#allocation6 + $0x398] sm:$0xff]
    %v2928 = vld [vmem:[#allocation6 + $0x3a0] sm:$0xff]
    %v2929 = vld [vmem:[#allocation6 + $0x3a8] sm:$0xff]
    %v2930 = vld [vmem:[#allocation6 + $0x3b0] sm:$0xff]
    %v2931 = vld [vmem:[#allocation6 + $0x3b8] sm:$0xff]
    %v2932 = vld [vmem:[#allocation6 + $0x3c0] sm:$0xff]
    %v2933 = vld [vmem:[#allocation6 + $0x3c8] sm:$0xff]
    %v2934 = vld [vmem:[#allocation6 + $0x3d0] sm:$0xff]
    %v2935 = vld [vmem:[#allocation6 + $0x3d8] sm:$0xff]
    %v2936 = vld [vmem:[#allocation6 + $0x3e0] sm:$0xff]
    %v2937 = vld [vmem:[#allocation6 + $0x3e8] sm:$0xff]
    %v2938 = vld [vmem:[#allocation6 + $0x3f0] sm:$0xff]
    %v2939 = vld [vmem:[#allocation6 + $0x3f8] sm:$0xff]
    %v2940 = vld [vmem:[%s6] sm:$0xf]
    %v2942 = vlaneseq
    %v2943 = vshrl.u32 %v2942, 7
    %v2944 = vsub.s32 0, %v2943
    %v2945 = vrot.slane %v2940, %v2944
    %v2946 = vlaneseq
    %v2947 = vshrl.u32 %v2946, 7
    %v2948 = vsub.s32 1, %v2947
    %v2949 = vrot.slane %v2940, %v2948
    %v2950 = vlaneseq
    %v2951 = vshrl.u32 %v2950, 7
    %v2952 = vsub.s32 2, %v2951
    %v2953 = vrot.slane %v2940, %v2952
    %v2954 = vlaneseq
    %v2955 = vshrl.u32 %v2954, 7
    %v2956 = vsub.s32 3, %v2955
    %v2957 = vrot.slane %v2940, %v2956
    %v3090 = vunpack.c.l.b16 %v2812
    %v3091 = vunpack.c.h.b16 %v2812
    %v3092 = vunpack.c.l.b16 %v2813
    %v3093 = vunpack.c.h.b16 %v2813
    %v3094 = vunpack.c.l.b16 %v2814
    %v3095 = vunpack.c.h.b16 %v2814
    %v3096 = vunpack.c.l.b16 %v2815
    %v3097 = vunpack.c.h.b16 %v2815
    %v3098 = vunpack.c.l.b16 %v2816
    %v3099 = vunpack.c.h.b16 %v2816
    %v3100 = vunpack.c.l.b16 %v2817
    %v3101 = vunpack.c.h.b16 %v2817
    %v3102 = vunpack.c.l.b16 %v2818
    %v3103 = vunpack.c.h.b16 %v2818
    %v3104 = vunpack.c.l.b16 %v2819
    %v3105 = vunpack.c.h.b16 %v2819
    %v3106 = vunpack.c.l.b16 %v2820
    %v3107 = vunpack.c.h.b16 %v2820
    %v3108 = vunpack.c.l.b16 %v2821
    %v3109 = vunpack.c.h.b16 %v2821
    %v3110 = vunpack.c.l.b16 %v2822
    %v3111 = vunpack.c.h.b16 %v2822
    %v3112 = vunpack.c.l.b16 %v2823
    %v3113 = vunpack.c.h.b16 %v2823
    %v3114 = vunpack.c.l.b16 %v2824
    %v3115 = vunpack.c.h.b16 %v2824
    %v3116 = vunpack.c.l.b16 %v2825
    %v3117 = vunpack.c.h.b16 %v2825
    %v3118 = vunpack.c.l.b16 %v2826
    %v3119 = vunpack.c.h.b16 %v2826
    %v3120 = vunpack.c.l.b16 %v2827
    %v3121 = vunpack.c.h.b16 %v2827
    %v3122 = vunpack.c.l.b16 %v2828
    %v3123 = vunpack.c.h.b16 %v2828
    %v3124 = vunpack.c.l.b16 %v2829
    %v3125 = vunpack.c.h.b16 %v2829
    %v3126 = vunpack.c.l.b16 %v2830
    %v3127 = vunpack.c.h.b16 %v2830
    %v3128 = vunpack.c.l.b16 %v2831
    %v3129 = vunpack.c.h.b16 %v2831
    %v3130 = vunpack.c.l.b16 %v2832
    %v3131 = vunpack.c.h.b16 %v2832
    %v3132 = vunpack.c.l.b16 %v2833
    %v3133 = vunpack.c.h.b16 %v2833
    %v3134 = vunpack.c.l.b16 %v2834
    %v3135 = vunpack.c.h.b16 %v2834
    %v3136 = vunpack.c.l.b16 %v2835
    %v3137 = vunpack.c.h.b16 %v2835
    %v3138 = vunpack.c.l.b16 %v2836
    %v3139 = vunpack.c.h.b16 %v2836
    %v3140 = vunpack.c.l.b16 %v2837
    %v3141 = vunpack.c.h.b16 %v2837
    %v3142 = vunpack.c.l.b16 %v2838
    %v3143 = vunpack.c.h.b16 %v2838
    %v3144 = vunpack.c.l.b16 %v2839
    %v3145 = vunpack.c.h.b16 %v2839
    %v3146 = vunpack.c.l.b16 %v2840
    %v3147 = vunpack.c.h.b16 %v2840
    %v3148 = vunpack.c.l.b16 %v2841
    %v3149 = vunpack.c.h.b16 %v2841
    %v3150 = vunpack.c.l.b16 %v2842
    %v3151 = vunpack.c.h.b16 %v2842
    %v3152 = vunpack.c.l.b16 %v2843
    %v3153 = vunpack.c.h.b16 %v2843
    %v3154 = vunpack.c.l.b16 %v2844
    %v3155 = vunpack.c.h.b16 %v2844
    %v3156 = vunpack.c.l.b16 %v2845
    %v3157 = vunpack.c.h.b16 %v2845
    %v3158 = vunpack.c.l.b16 %v2846
    %v3159 = vunpack.c.h.b16 %v2846
    %v3160 = vunpack.c.l.b16 %v2847
    %v3161 = vunpack.c.h.b16 %v2847
    %v3162 = vunpack.c.l.b16 %v2848
    %v3163 = vunpack.c.h.b16 %v2848
    %v3164 = vunpack.c.l.b16 %v2849
    %v3165 = vunpack.c.h.b16 %v2849
    %v3166 = vunpack.c.l.b16 %v2850
    %v3167 = vunpack.c.h.b16 %v2850
    %v3168 = vunpack.c.l.b16 %v2851
    %v3169 = vunpack.c.h.b16 %v2851
    %v3170 = vunpack.c.l.b16 %v2852
    %v3171 = vunpack.c.h.b16 %v2852
    %v3172 = vunpack.c.l.b16 %v2853
    %v3173 = vunpack.c.h.b16 %v2853
    %v3174 = vunpack.c.l.b16 %v2854
    %v3175 = vunpack.c.h.b16 %v2854
    %v3176 = vunpack.c.l.b16 %v2855
    %v3177 = vunpack.c.h.b16 %v2855
    %v3178 = vunpack.c.l.b16 %v2856
    %v3179 = vunpack.c.h.b16 %v2856
    %v3180 = vunpack.c.l.b16 %v2857
    %v3181 = vunpack.c.h.b16 %v2857
    %v3182 = vunpack.c.l.b16 %v2858
    %v3183 = vunpack.c.h.b16 %v2858
    %v3184 = vunpack.c.l.b16 %v2859
    %v3185 = vunpack.c.h.b16 %v2859
    %v3186 = vunpack.c.l.b16 %v2860
    %v3187 = vunpack.c.h.b16 %v2860
    %v3188 = vunpack.c.l.b16 %v2861
    %v3189 = vunpack.c.h.b16 %v2861
    %v3190 = vunpack.c.l.b16 %v2862
    %v3191 = vunpack.c.h.b16 %v2862
    %v3192 = vunpack.c.l.b16 %v2863
    %v3193 = vunpack.c.h.b16 %v2863
    %v3194 = vunpack.c.l.b16 %v2864
    %v3195 = vunpack.c.h.b16 %v2864
    %v3196 = vunpack.c.l.b16 %v2865
    %v3197 = vunpack.c.h.b16 %v2865
    %v3198 = vunpack.c.l.b16 %v2866
    %v3199 = vunpack.c.h.b16 %v2866
    %v3200 = vunpack.c.l.b16 %v2867
    %v3201 = vunpack.c.h.b16 %v2867
    %v3202 = vunpack.c.l.b16 %v2868
    %v3203 = vunpack.c.h.b16 %v2868
    %v3204 = vunpack.c.l.b16 %v2869
    %v3205 = vunpack.c.h.b16 %v2869
    %v3206 = vunpack.c.l.b16 %v2870
    %v3207 = vunpack.c.h.b16 %v2870
    %v3208 = vunpack.c.l.b16 %v2871
    %v3209 = vunpack.c.h.b16 %v2871
    %v3210 = vunpack.c.l.b16 %v2872
    %v3211 = vunpack.c.h.b16 %v2872
    %v3212 = vunpack.c.l.b16 %v2873
    %v3213 = vunpack.c.h.b16 %v2873
    %v3214 = vunpack.c.l.b16 %v2874
    %v3215 = vunpack.c.h.b16 %v2874
    %v3216 = vunpack.c.l.b16 %v2875
    %v3217 = vunpack.c.h.b16 %v2875
    %v3218 = vunpack.c.l.b16 %v2876
    %v3219 = vunpack.c.h.b16 %v2876
    %v3220 = vunpack.c.l.b16 %v2877
    %v3221 = vunpack.c.h.b16 %v2877
    %v3222 = vunpack.c.l.b16 %v2878
    %v3223 = vunpack.c.h.b16 %v2878
    %v3224 = vunpack.c.l.b16 %v2879
    %v3225 = vunpack.c.h.b16 %v2879
    %v3226 = vunpack.c.l.b16 %v2880
    %v3227 = vunpack.c.h.b16 %v2880
    %v3228 = vunpack.c.l.b16 %v2881
    %v3229 = vunpack.c.h.b16 %v2881
    %v3230 = vunpack.c.l.b16 %v2882
    %v3231 = vunpack.c.h.b16 %v2882
    %v3232 = vunpack.c.l.b16 %v2883
    %v3233 = vunpack.c.h.b16 %v2883
    %v3234 = vunpack.c.l.b16 %v2884
    %v3235 = vunpack.c.h.b16 %v2884
    %v3236 = vunpack.c.l.b16 %v2885
    %v3237 = vunpack.c.h.b16 %v2885
    %v3238 = vunpack.c.l.b16 %v2886
    %v3239 = vunpack.c.h.b16 %v2886
    %v3240 = vunpack.c.l.b16 %v2887
    %v3241 = vunpack.c.h.b16 %v2887
    %v3242 = vunpack.c.l.b16 %v2888
    %v3243 = vunpack.c.h.b16 %v2888
    %v3244 = vunpack.c.l.b16 %v2889
    %v3245 = vunpack.c.h.b16 %v2889
    %v3246 = vunpack.c.l.b16 %v2890
    %v3247 = vunpack.c.h.b16 %v2890
    %v3248 = vunpack.c.l.b16 %v2891
    %v3249 = vunpack.c.h.b16 %v2891
    %v3250 = vunpack.c.l.b16 %v2892
    %v3251 = vunpack.c.h.b16 %v2892
    %v3252 = vunpack.c.l.b16 %v2893
    %v3253 = vunpack.c.h.b16 %v2893
    %v3254 = vunpack.c.l.b16 %v2894
    %v3255 = vunpack.c.h.b16 %v2894
    %v3256 = vunpack.c.l.b16 %v2895
    %v3257 = vunpack.c.h.b16 %v2895
    %v3258 = vunpack.c.l.b16 %v2896
    %v3259 = vunpack.c.h.b16 %v2896
    %v3260 = vunpack.c.l.b16 %v2897
    %v3261 = vunpack.c.h.b16 %v2897
    %v3262 = vunpack.c.l.b16 %v2898
    %v3263 = vunpack.c.h.b16 %v2898
    %v3264 = vunpack.c.l.b16 %v2899
    %v3265 = vunpack.c.h.b16 %v2899
    %v3266 = vunpack.c.l.b16 %v2900
    %v3267 = vunpack.c.h.b16 %v2900
    %v3268 = vunpack.c.l.b16 %v2901
    %v3269 = vunpack.c.h.b16 %v2901
    %v3270 = vunpack.c.l.b16 %v2902
    %v3271 = vunpack.c.h.b16 %v2902
    %v3272 = vunpack.c.l.b16 %v2903
    %v3273 = vunpack.c.h.b16 %v2903
    %v3274 = vunpack.c.l.b16 %v2904
    %v3275 = vunpack.c.h.b16 %v2904
    %v3276 = vunpack.c.l.b16 %v2905
    %v3277 = vunpack.c.h.b16 %v2905
    %v3278 = vunpack.c.l.b16 %v2906
    %v3279 = vunpack.c.h.b16 %v2906
    %v3280 = vunpack.c.l.b16 %v2907
    %v3281 = vunpack.c.h.b16 %v2907
    %v3282 = vunpack.c.l.b16 %v2908
    %v3283 = vunpack.c.h.b16 %v2908
    %v3284 = vunpack.c.l.b16 %v2909
    %v3285 = vunpack.c.h.b16 %v2909
    %v3286 = vunpack.c.l.b16 %v2910
    %v3287 = vunpack.c.h.b16 %v2910
    %v3288 = vunpack.c.l.b16 %v2911
    %v3289 = vunpack.c.h.b16 %v2911
    %v3290 = vunpack.c.l.b16 %v2912
    %v3291 = vunpack.c.h.b16 %v2912
    %v3292 = vunpack.c.l.b16 %v2913
    %v3293 = vunpack.c.h.b16 %v2913
    %v3294 = vunpack.c.l.b16 %v2914
    %v3295 = vunpack.c.h.b16 %v2914
    %v3296 = vunpack.c.l.b16 %v2915
    %v3297 = vunpack.c.h.b16 %v2915
    %v3298 = vunpack.c.l.b16 %v2916
    %v3299 = vunpack.c.h.b16 %v2916
    %v3300 = vunpack.c.l.b16 %v2917
    %v3301 = vunpack.c.h.b16 %v2917
    %v3302 = vunpack.c.l.b16 %v2918
    %v3303 = vunpack.c.h.b16 %v2918
    %v3304 = vunpack.c.l.b16 %v2919
    %v3305 = vunpack.c.h.b16 %v2919
    %v3306 = vunpack.c.l.b16 %v2920
    %v3307 = vunpack.c.h.b16 %v2920
    %v3308 = vunpack.c.l.b16 %v2921
    %v3309 = vunpack.c.h.b16 %v2921
    %v3310 = vunpack.c.l.b16 %v2922
    %v3311 = vunpack.c.h.b16 %v2922
    %v3312 = vunpack.c.l.b16 %v2923
    %v3313 = vunpack.c.h.b16 %v2923
    %v3314 = vunpack.c.l.b16 %v2924
    %v3315 = vunpack.c.h.b16 %v2924
    %v3316 = vunpack.c.l.b16 %v2925
    %v3317 = vunpack.c.h.b16 %v2925
    %v3318 = vunpack.c.l.b16 %v2926
    %v3319 = vunpack.c.h.b16 %v2926
    %v3320 = vunpack.c.l.b16 %v2927
    %v3321 = vunpack.c.h.b16 %v2927
    %v3322 = vunpack.c.l.b16 %v2928
    %v3323 = vunpack.c.h.b16 %v2928
    %v3324 = vunpack.c.l.b16 %v2929
    %v3325 = vunpack.c.h.b16 %v2929
    %v3326 = vunpack.c.l.b16 %v2930
    %v3327 = vunpack.c.h.b16 %v2930
    %v3328 = vunpack.c.l.b16 %v2931
    %v3329 = vunpack.c.h.b16 %v2931
    %v3330 = vunpack.c.l.b16 %v2932
    %v3331 = vunpack.c.h.b16 %v2932
    %v3332 = vunpack.c.l.b16 %v2933
    %v3333 = vunpack.c.h.b16 %v2933
    %v3334 = vunpack.c.l.b16 %v2934
    %v3335 = vunpack.c.h.b16 %v2934
    %v3336 = vunpack.c.l.b16 %v2935
    %v3337 = vunpack.c.h.b16 %v2935
    %v3338 = vunpack.c.l.b16 %v2936
    %v3339 = vunpack.c.h.b16 %v2936
    %v3340 = vunpack.c.l.b16 %v2937
    %v3341 = vunpack.c.h.b16 %v2937
    %v3342 = vunpack.c.l.b16 %v2938
    %v3343 = vunpack.c.h.b16 %v2938
    %v3344 = vunpack.c.l.b16 %v2939
    %v3345 = vunpack.c.h.b16 %v2939
    %v3346 = vpack.c.b16 %v3094, %v3090
    %v3347 = vpack.c.b16 %v3095, %v3091
    %v3348 = vpack.c.b16 %v3096, %v3092
    %v3349 = vpack.c.b16 %v3097, %v3093
    %v3350 = vpack.c.b16 %v3102, %v3098
    %v3351 = vpack.c.b16 %v3103, %v3099
    %v3352 = vpack.c.b16 %v3104, %v3100
    %v3353 = vpack.c.b16 %v3105, %v3101
    %v3354 = vpack.c.b16 %v3110, %v3106
    %v3355 = vpack.c.b16 %v3111, %v3107
    %v3356 = vpack.c.b16 %v3112, %v3108
    %v3357 = vpack.c.b16 %v3113, %v3109
    %v3358 = vpack.c.b16 %v3118, %v3114
    %v3359 = vpack.c.b16 %v3119, %v3115
    %v3360 = vpack.c.b16 %v3120, %v3116
    %v3361 = vpack.c.b16 %v3121, %v3117
    %v3362 = vpack.c.b16 %v3126, %v3122
    %v3363 = vpack.c.b16 %v3127, %v3123
    %v3364 = vpack.c.b16 %v3128, %v3124
    %v3365 = vpack.c.b16 %v3129, %v3125
    %v3366 = vpack.c.b16 %v3134, %v3130
    %v3367 = vpack.c.b16 %v3135, %v3131
    %v3368 = vpack.c.b16 %v3136, %v3132
    %v3369 = vpack.c.b16 %v3137, %v3133
    %v3370 = vpack.c.b16 %v3142, %v3138
    %v3371 = vpack.c.b16 %v3143, %v3139
    %v3372 = vpack.c.b16 %v3144, %v3140
    %v3373 = vpack.c.b16 %v3145, %v3141
    %v3374 = vpack.c.b16 %v3150, %v3146
    %v3375 = vpack.c.b16 %v3151, %v3147
    %v3376 = vpack.c.b16 %v3152, %v3148
    %v3377 = vpack.c.b16 %v3153, %v3149
    %v3378 = vpack.c.b16 %v3158, %v3154
    %v3379 = vpack.c.b16 %v3159, %v3155
    %v3380 = vpack.c.b16 %v3160, %v3156
    %v3381 = vpack.c.b16 %v3161, %v3157
    %v3382 = vpack.c.b16 %v3166, %v3162
    %v3383 = vpack.c.b16 %v3167, %v3163
    %v3384 = vpack.c.b16 %v3168, %v3164
    %v3385 = vpack.c.b16 %v3169, %v3165
    %v3386 = vpack.c.b16 %v3174, %v3170
    %v3387 = vpack.c.b16 %v3175, %v3171
    %v3388 = vpack.c.b16 %v3176, %v3172
    %v3389 = vpack.c.b16 %v3177, %v3173
    %v3390 = vpack.c.b16 %v3182, %v3178
    %v3391 = vpack.c.b16 %v3183, %v3179
    %v3392 = vpack.c.b16 %v3184, %v3180
    %v3393 = vpack.c.b16 %v3185, %v3181
    %v3394 = vpack.c.b16 %v3190, %v3186
    %v3395 = vpack.c.b16 %v3191, %v3187
    %v3396 = vpack.c.b16 %v3192, %v3188
    %v3397 = vpack.c.b16 %v3193, %v3189
    %v3398 = vpack.c.b16 %v3198, %v3194
    %v3399 = vpack.c.b16 %v3199, %v3195
    %v3400 = vpack.c.b16 %v3200, %v3196
    %v3401 = vpack.c.b16 %v3201, %v3197
    %v3402 = vpack.c.b16 %v3206, %v3202
    %v3403 = vpack.c.b16 %v3207, %v3203
    %v3404 = vpack.c.b16 %v3208, %v3204
    %v3405 = vpack.c.b16 %v3209, %v3205
    %v3406 = vpack.c.b16 %v3214, %v3210
    %v3407 = vpack.c.b16 %v3215, %v3211
    %v3408 = vpack.c.b16 %v3216, %v3212
    %v3409 = vpack.c.b16 %v3217, %v3213
    %v3410 = vpack.c.b16 %v3222, %v3218
    %v3411 = vpack.c.b16 %v3223, %v3219
    %v3412 = vpack.c.b16 %v3224, %v3220
    %v3413 = vpack.c.b16 %v3225, %v3221
    %v3414 = vpack.c.b16 %v3230, %v3226
    %v3415 = vpack.c.b16 %v3231, %v3227
    %v3416 = vpack.c.b16 %v3232, %v3228
    %v3417 = vpack.c.b16 %v3233, %v3229
    %v3418 = vpack.c.b16 %v3238, %v3234
    %v3419 = vpack.c.b16 %v3239, %v3235
    %v3420 = vpack.c.b16 %v3240, %v3236
    %v3421 = vpack.c.b16 %v3241, %v3237
    %v3422 = vpack.c.b16 %v3246, %v3242
    %v3423 = vpack.c.b16 %v3247, %v3243
    %v3424 = vpack.c.b16 %v3248, %v3244
    %v3425 = vpack.c.b16 %v3249, %v3245
    %v3426 = vpack.c.b16 %v3254, %v3250
    %v3427 = vpack.c.b16 %v3255, %v3251
    %v3428 = vpack.c.b16 %v3256, %v3252
    %v3429 = vpack.c.b16 %v3257, %v3253
    %v3430 = vpack.c.b16 %v3262, %v3258
    %v3431 = vpack.c.b16 %v3263, %v3259
    %v3432 = vpack.c.b16 %v3264, %v3260
    %v3433 = vpack.c.b16 %v3265, %v3261
    %v3434 = vpack.c.b16 %v3270, %v3266
    %v3435 = vpack.c.b16 %v3271, %v3267
    %v3436 = vpack.c.b16 %v3272, %v3268
    %v3437 = vpack.c.b16 %v3273, %v3269
    %v3438 = vpack.c.b16 %v3278, %v3274
    %v3439 = vpack.c.b16 %v3279, %v3275
    %v3440 = vpack.c.b16 %v3280, %v3276
    %v3441 = vpack.c.b16 %v3281, %v3277
    %v3442 = vpack.c.b16 %v3286, %v3282
    %v3443 = vpack.c.b16 %v3287, %v3283
    %v3444 = vpack.c.b16 %v3288, %v3284
    %v3445 = vpack.c.b16 %v3289, %v3285
    %v3446 = vpack.c.b16 %v3294, %v3290
    %v3447 = vpack.c.b16 %v3295, %v3291
    %v3448 = vpack.c.b16 %v3296, %v3292
    %v3449 = vpack.c.b16 %v3297, %v3293
    %v3450 = vpack.c.b16 %v3302, %v3298
    %v3451 = vpack.c.b16 %v3303, %v3299
    %v3452 = vpack.c.b16 %v3304, %v3300
    %v3453 = vpack.c.b16 %v3305, %v3301
    %v3454 = vpack.c.b16 %v3310, %v3306
    %v3455 = vpack.c.b16 %v3311, %v3307
    %v3456 = vpack.c.b16 %v3312, %v3308
    %v3457 = vpack.c.b16 %v3313, %v3309
    %v3458 = vpack.c.b16 %v3318, %v3314
    %v3459 = vpack.c.b16 %v3319, %v3315
    %v3460 = vpack.c.b16 %v3320, %v3316
    %v3461 = vpack.c.b16 %v3321, %v3317
    %v3462 = vpack.c.b16 %v3326, %v3322
    %v3463 = vpack.c.b16 %v3327, %v3323
    %v3464 = vpack.c.b16 %v3328, %v3324
    %v3465 = vpack.c.b16 %v3329, %v3325
    %v3466 = vpack.c.b16 %v3334, %v3330
    %v3467 = vpack.c.b16 %v3335, %v3331
    %v3468 = vpack.c.b16 %v3336, %v3332
    %v3469 = vpack.c.b16 %v3337, %v3333
    %v3470 = vpack.c.b16 %v3342, %v3338
    %v3471 = vpack.c.b16 %v3343, %v3339
    %v3472 = vpack.c.b16 %v3344, %v3340
    %v3473 = vpack.c.b16 %v3345, %v3341
    %3602 = vmatprep.subr.bf16.mxu0 %v3347
    %3603 = vmatpush1.bf16.msra.mxu0 %v3346
    %3604 = vmatprep.subr.bf16.mxu0 %v3351
    %3605 = vmatpush1.bf16.msra.mxu0 %v3350
    %3606 = vmatprep.subr.bf16.mxu0 %v3355
    %3607 = vmatpush1.bf16.msra.mxu0 %v3354
    %3608 = vmatprep.subr.bf16.mxu0 %v3359
    %3609 = vmatpush1.bf16.msra.mxu0 %v3358
    %3610 = vmatprep.subr.bf16.mxu0 %v3363
    %3611 = vmatpush1.bf16.msra.mxu0 %v3362
    %3612 = vmatprep.subr.bf16.mxu0 %v3367
    %3613 = vmatpush1.bf16.msra.mxu0 %v3366
    %3614 = vmatprep.subr.bf16.mxu0 %v3371
    %3615 = vmatpush1.bf16.msra.mxu0 %v3370
    %3616 = vmatprep.subr.bf16.mxu0 %v3375
    %3617 = vmatpush1.bf16.msra.mxu0 %v3374
    %3618 = vmatprep.subr.bf16.mxu0 %v3379
    %3619 = vmatpush1.bf16.msra.mxu0 %v3378
    %3620 = vmatprep.subr.bf16.mxu0 %v3383
    %3621 = vmatpush1.bf16.msra.mxu0 %v3382
    %3622 = vmatprep.subr.bf16.mxu0 %v3387
    %3623 = vmatpush1.bf16.msra.mxu0 %v3386
    %3624 = vmatprep.subr.bf16.mxu0 %v3391
    %3625 = vmatpush1.bf16.msra.mxu0 %v3390
    %3626 = vmatprep.subr.bf16.mxu0 %v3395
    %3627 = vmatpush1.bf16.msra.mxu0 %v3394
    %3628 = vmatprep.subr.bf16.mxu0 %v3399
    %3629 = vmatpush1.bf16.msra.mxu0 %v3398
    %3630 = vmatprep.subr.bf16.mxu0 %v3403
    %3631 = vmatpush1.bf16.msra.mxu0 %v3402
    %3632 = vmatprep.subr.bf16.mxu0 %v3407
    %3633 = vmatpush1.bf16.msra.mxu0 %v3406
    %3634 = vmatprep.mubr.bf16.mxu0 %v2809
    %3635 = vmatmul.mubr.bf16.gmra.mrb[0].mxu0 %v2808
    %v3636 = vpop.f32.mrb[0].mxu0
    %v3637 = vadd.f32 %v2945, %v3636
    %v3638 = vpop.f32.mrb[0].mxu0
    %v3639 = vadd.f32 %v2949, %v3638
    %v3640 = vpop.f32.mrb[0].mxu0
    %v3641 = vadd.f32 %v2945, %v3640
    %v3642 = vpop.f32.mrb[0].mxu0
    %v3643 = vadd.f32 %v2949, %v3642
    %3644 = vdwg.mxu0
    %3645 = vmatprep.subr.bf16.mxu0 %v3411
    %3646 = vmatpush1.bf16.msra.mxu0 %v3410
    %3647 = vmatprep.subr.bf16.mxu0 %v3415
    %3648 = vmatpush1.bf16.msra.mxu0 %v3414
    %3649 = vmatprep.subr.bf16.mxu0 %v3419
    %3650 = vmatpush1.bf16.msra.mxu0 %v3418
    %3651 = vmatprep.subr.bf16.mxu0 %v3423
    %3652 = vmatpush1.bf16.msra.mxu0 %v3422
    %3653 = vmatprep.subr.bf16.mxu0 %v3427
    %3654 = vmatpush1.bf16.msra.mxu0 %v3426
    %3655 = vmatprep.subr.bf16.mxu0 %v3431
    %3656 = vmatpush1.bf16.msra.mxu0 %v3430
    %3657 = vmatprep.subr.bf16.mxu0 %v3435
    %3658 = vmatpush1.bf16.msra.mxu0 %v3434
    %3659 = vmatprep.subr.bf16.mxu0 %v3439
    %3660 = vmatpush1.bf16.msra.mxu0 %v3438
    %3661 = vmatprep.subr.bf16.mxu0 %v3443
    %3662 = vmatpush1.bf16.msra.mxu0 %v3442
    %3663 = vmatprep.subr.bf16.mxu0 %v3447
    %3664 = vmatpush1.bf16.msra.mxu0 %v3446
    %3665 = vmatprep.subr.bf16.mxu0 %v3451
    %3666 = vmatpush1.bf16.msra.mxu0 %v3450
    %3667 = vmatprep.subr.bf16.mxu0 %v3455
    %3668 = vmatpush1.bf16.msra.mxu0 %v3454
    %3669 = vmatprep.subr.bf16.mxu0 %v3459
    %3670 = vmatpush1.bf16.msra.mxu0 %v3458
    %3671 = vmatprep.subr.bf16.mxu0 %v3463
    %3672 = vmatpush1.bf16.msra.mxu0 %v3462
    %3673 = vmatprep.subr.bf16.mxu0 %v3467
    %3674 = vmatpush1.bf16.msra.mxu0 %v3466
    %3675 = vmatprep.subr.bf16.mxu0 %v3471
    %3676 = vmatpush1.bf16.msra.mxu0 %v3470
    %3677 = vmatprep.mubr.bf16.mxu0 %v2811
    %3678 = vmatmul.mubr.bf16.gmra.mrb[0].mxu0 %v2810
    %v3679 = vpop.f32.mrb[0].mxu0
    %v3680 = vadd.f32 %v3637, %v3679
    %v3681 = vpop.f32.mrb[0].mxu0
    %v3682 = vadd.f32 %v3639, %v3681
    %v3683 = vpop.f32.mrb[0].mxu0
    %v3684 = vadd.f32 %v3641, %v3683
    %v3685 = vpop.f32.mrb[0].mxu0
    %v3686 = vadd.f32 %v3643, %v3685
    %3687 = vdwg.mxu0
    %3688 = vmatprep.subr.bf16.mxu0 %v3349
    %3689 = vmatpush1.bf16.msra.mxu0 %v3348
    %3690 = vmatprep.subr.bf16.mxu0 %v3353
    %3691 = vmatpush1.bf16.msra.mxu0 %v3352
    %3692 = vmatprep.subr.bf16.mxu0 %v3357
    %3693 = vmatpush1.bf16.msra.mxu0 %v3356
    %3694 = vmatprep.subr.bf16.mxu0 %v3361
    %3695 = vmatpush1.bf16.msra.mxu0 %v3360
    %3696 = vmatprep.subr.bf16.mxu0 %v3365
    %3697 = vmatpush1.bf16.msra.mxu0 %v3364
    %3698 = vmatprep.subr.bf16.mxu0 %v3369
    %3699 = vmatpush1.bf16.msra.mxu0 %v3368
    %3700 = vmatprep.subr.bf16.mxu0 %v3373
    %3701 = vmatpush1.bf16.msra.mxu0 %v3372
    %3702 = vmatprep.subr.bf16.mxu0 %v3377
    %3703 = vmatpush1.bf16.msra.mxu0 %v3376
    %3704 = vmatprep.subr.bf16.mxu0 %v3381
    %3705 = vmatpush1.bf16.msra.mxu0 %v3380
    %3706 = vmatprep.subr.bf16.mxu0 %v3385
    %3707 = vmatpush1.bf16.msra.mxu0 %v3384
    %3708 = vmatprep.subr.bf16.mxu0 %v3389
    %3709 = vmatpush1.bf16.msra.mxu0 %v3388
    %3710 = vmatprep.subr.bf16.mxu0 %v3393
    %3711 = vmatpush1.bf16.msra.mxu0 %v3392
    %3712 = vmatprep.subr.bf16.mxu0 %v3397
    %3713 = vmatpush1.bf16.msra.mxu0 %v3396
    %3714 = vmatprep.subr.bf16.mxu0 %v3401
    %3715 = vmatpush1.bf16.msra.mxu0 %v3400
    %3716 = vmatprep.subr.bf16.mxu0 %v3405
    %3717 = vmatpush1.bf16.msra.mxu0 %v3404
    %3718 = vmatprep.subr.bf16.mxu0 %v3409
    %3719 = vmatpush1.bf16.msra.mxu0 %v3408
    %3720 = vmatprep.mubr.bf16.mxu0 %v2809
    %3721 = vmatmul.mubr.bf16.gmra.mrb[0].mxu0 %v2808
    %v3722 = vpop.f32.mrb[0].mxu0
    %v3723 = vadd.f32 %v2953, %v3722
    %v3724 = vpop.f32.mrb[0].mxu0
    %v3725 = vadd.f32 %v2957, %v3724
    %v3726 = vpop.f32.mrb[0].mxu0
    %v3727 = vadd.f32 %v2953, %v3726
    %v3728 = vpop.f32.mrb[0].mxu0
    %v3729 = vadd.f32 %v2957, %v3728
    %3730 = vdwg.mxu0
    %3731 = vmatprep.subr.bf16.mxu0 %v3413
    %3732 = vmatpush1.bf16.msra.mxu0 %v3412
    %3733 = vmatprep.subr.bf16.mxu0 %v3417
    %3734 = vmatpush1.bf16.msra.mxu0 %v3416
    %3735 = vmatprep.subr.bf16.mxu0 %v3421
    %3736 = vmatpush1.bf16.msra.mxu0 %v3420
    %3737 = vmatprep.subr.bf16.mxu0 %v3425
    %3738 = vmatpush1.bf16.msra.mxu0 %v3424
    %3739 = vmatprep.subr.bf16.mxu0 %v3429
    %3740 = vmatpush1.bf16.msra.mxu0 %v3428
    %3741 = vmatprep.subr.bf16.mxu0 %v3433
    %3742 = vmatpush1.bf16.msra.mxu0 %v3432
    %3743 = vmatprep.subr.bf16.mxu0 %v3437
    %3744 = vmatpush1.bf16.msra.mxu0 %v3436
    %3745 = vmatprep.subr.bf16.mxu0 %v3441
    %3746 = vmatpush1.bf16.msra.mxu0 %v3440
    %3747 = vmatprep.subr.bf16.mxu0 %v3445
    %3748 = vmatpush1.bf16.msra.mxu0 %v3444
    %3749 = vmatprep.subr.bf16.mxu0 %v3449
    %3750 = vmatpush1.bf16.msra.mxu0 %v3448
    %3751 = vmatprep.subr.bf16.mxu0 %v3453
    %3752 = vmatpush1.bf16.msra.mxu0 %v3452
    %3753 = vmatprep.subr.bf16.mxu0 %v3457
    %3754 = vmatpush1.bf16.msra.mxu0 %v3456
    %3755 = vmatprep.subr.bf16.mxu0 %v3461
    %3756 = vmatpush1.bf16.msra.mxu0 %v3460
    %3757 = vmatprep.subr.bf16.mxu0 %v3465
    %3758 = vmatpush1.bf16.msra.mxu0 %v3464
    %3759 = vmatprep.subr.bf16.mxu0 %v3469
    %3760 = vmatpush1.bf16.msra.mxu0 %v3468
    %3761 = vmatprep.subr.bf16.mxu0 %v3473
    %3762 = vmatpush1.bf16.msra.mxu0 %v3472
    %3763 = vmatprep.mubr.bf16.mxu0 %v2811
    %3764 = vmatmul.mubr.bf16.gmra.mrb[0].mxu0 %v2810
    %v3765 = vpop.f32.mrb[0].mxu0
    %v3766 = vadd.f32 %v3723, %v3765
    %v3767 = vpop.f32.mrb[0].mxu0
    %v3768 = vadd.f32 %v3725, %v3767
    %v3769 = vpop.f32.mrb[0].mxu0
    %v3770 = vadd.f32 %v3727, %v3769
    %v3771 = vpop.f32.mrb[0].mxu0
    %v3772 = vadd.f32 %v3729, %v3771
    %3773 = vdwg.mxu0
    %v3774 = vpack.c.bf16 %v3684, %v3680
    %v3775 = vpack.c.bf16 %v3686, %v3682
    %v3776 = vpack.c.bf16 %v3770, %v3766
    %v3777 = vpack.c.bf16 %v3772, %v3768
    %v3778 = vld [vmem:[#allocation7] sm:$0xf]
    %v3779 = vld [vmem:[#allocation7 + $0x4] sm:$0xf]
    %v3780 = vld [vmem:[#allocation7 + $0x8] sm:$0xf]
    %v3781 = vld [vmem:[#allocation7 + $0xc] sm:$0xf]
    %v3782 = vld [vmem:[#allocation7 + $0x10] sm:$0xf]
    %v3783 = vld [vmem:[#allocation7 + $0x14] sm:$0xf]
    %v3784 = vld [vmem:[#allocation7 + $0x18] sm:$0xf]
    %v3785 = vld [vmem:[#allocation7 + $0x1c] sm:$0xf]
    %v3786 = vld [vmem:[#allocation7 + $0x20] sm:$0xf]
    %v3787 = vld [vmem:[#allocation7 + $0x24] sm:$0xf]
    %v3788 = vld [vmem:[#allocation7 + $0x28] sm:$0xf]
    %v3789 = vld [vmem:[#allocation7 + $0x2c] sm:$0xf]
    %v3790 = vld [vmem:[#allocation7 + $0x30] sm:$0xf]
    %v3791 = vld [vmem:[#allocation7 + $0x34] sm:$0xf]
    %v3792 = vld [vmem:[#allocation7 + $0x38] sm:$0xf]
    %v3793 = vld [vmem:[#allocation7 + $0x3c] sm:$0xf]
    %v3794 = vld [vmem:[#allocation7 + $0x40] sm:$0xf]
    %v3795 = vld [vmem:[#allocation7 + $0x44] sm:$0xf]
    %v3796 = vld [vmem:[#allocation7 + $0x48] sm:$0xf]
    %v3797 = vld [vmem:[#allocation7 + $0x4c] sm:$0xf]
    %v3798 = vld [vmem:[#allocation7 + $0x50] sm:$0xf]
    %v3799 = vld [vmem:[#allocation7 + $0x54] sm:$0xf]
    %v3800 = vld [vmem:[#allocation7 + $0x58] sm:$0xf]
    %v3801 = vld [vmem:[#allocation7 + $0x5c] sm:$0xf]
    %v3802 = vld [vmem:[#allocation7 + $0x60] sm:$0xf]
    %v3803 = vld [vmem:[#allocation7 + $0x64] sm:$0xf]
    %v3804 = vld [vmem:[#allocation7 + $0x68] sm:$0xf]
    %v3805 = vld [vmem:[#allocation7 + $0x6c] sm:$0xf]
    %v3806 = vld [vmem:[#allocation7 + $0x70] sm:$0xf]
    %v3807 = vld [vmem:[#allocation7 + $0x74] sm:$0xf]
    %v3808 = vld [vmem:[#allocation7 + $0x78] sm:$0xf]
    %v3809 = vld [vmem:[#allocation7 + $0x7c] sm:$0xf]
    %v3810 = vld [vmem:[#allocation7 + $0x80] sm:$0xf]
    %v3811 = vld [vmem:[#allocation7 + $0x84] sm:$0xf]
    %v3812 = vld [vmem:[#allocation7 + $0x88] sm:$0xf]
    %v3813 = vld [vmem:[#allocation7 + $0x8c] sm:$0xf]
    %v3814 = vld [vmem:[#allocation7 + $0x90] sm:$0xf]
    %v3815 = vld [vmem:[#allocation7 + $0x94] sm:$0xf]
    %v3816 = vld [vmem:[#allocation7 + $0x98] sm:$0xf]
    %v3817 = vld [vmem:[#allocation7 + $0x9c] sm:$0xf]
    %v3818 = vld [vmem:[#allocation7 + $0xa0] sm:$0xf]
    %v3819 = vld [vmem:[#allocation7 + $0xa4] sm:$0xf]
    %v3820 = vld [vmem:[#allocation7 + $0xa8] sm:$0xf]
    %v3821 = vld [vmem:[#allocation7 + $0xac] sm:$0xf]
    %v3822 = vld [vmem:[#allocation7 + $0xb0] sm:$0xf]
    %v3823 = vld [vmem:[#allocation7 + $0xb4] sm:$0xf]
    %v3824 = vld [vmem:[#allocation7 + $0xb8] sm:$0xf]
    %v3825 = vld [vmem:[#allocation7 + $0xbc] sm:$0xf]
    %v3826 = vld [vmem:[#allocation7 + $0xc0] sm:$0xf]
    %v3827 = vld [vmem:[#allocation7 + $0xc4] sm:$0xf]
    %v3828 = vld [vmem:[#allocation7 + $0xc8] sm:$0xf]
    %v3829 = vld [vmem:[#allocation7 + $0xcc] sm:$0xf]
    %v3830 = vld [vmem:[#allocation7 + $0xd0] sm:$0xf]
    %v3831 = vld [vmem:[#allocation7 + $0xd4] sm:$0xf]
    %v3832 = vld [vmem:[#allocation7 + $0xd8] sm:$0xf]
    %v3833 = vld [vmem:[#allocation7 + $0xdc] sm:$0xf]
    %v3834 = vld [vmem:[#allocation7 + $0xe0] sm:$0xf]
    %v3835 = vld [vmem:[#allocation7 + $0xe4] sm:$0xf]
    %v3836 = vld [vmem:[#allocation7 + $0xe8] sm:$0xf]
    %v3837 = vld [vmem:[#allocation7 + $0xec] sm:$0xf]
    %v3838 = vld [vmem:[#allocation7 + $0xf0] sm:$0xf]
    %v3839 = vld [vmem:[#allocation7 + $0xf4] sm:$0xf]
    %v3840 = vld [vmem:[#allocation7 + $0xf8] sm:$0xf]
    %v3841 = vld [vmem:[#allocation7 + $0xfc] sm:$0xf]
    %v3842 = vld [vmem:[%s8] sm:$0x1]
    %v3844 = vlaneseq
    %v3845 = vshrl.u32 %v3844, 7
    %v3846 = vsub.s32 0, %v3845
    %v3847 = vrot.slane %v3842, %v3846
    %v3913 = vunpack.c.l.b16 %v3778
    %v3914 = vunpack.c.l.b16 %v3779
    %v3915 = vunpack.c.l.b16 %v3780
    %v3916 = vunpack.c.l.b16 %v3781
    %v3917 = vunpack.c.l.b16 %v3782
    %v3918 = vunpack.c.l.b16 %v3783
    %v3919 = vunpack.c.l.b16 %v3784
    %v3920 = vunpack.c.l.b16 %v3785
    %v3921 = vunpack.c.l.b16 %v3786
    %v3922 = vunpack.c.l.b16 %v3787
    %v3923 = vunpack.c.l.b16 %v3788
    %v3924 = vunpack.c.l.b16 %v3789
    %v3925 = vunpack.c.l.b16 %v3790
    %v3926 = vunpack.c.l.b16 %v3791
    %v3927 = vunpack.c.l.b16 %v3792
    %v3928 = vunpack.c.l.b16 %v3793
    %v3929 = vunpack.c.l.b16 %v3794
    %v3930 = vunpack.c.l.b16 %v3795
    %v3931 = vunpack.c.l.b16 %v3796
    %v3932 = vunpack.c.l.b16 %v3797
    %v3933 = vunpack.c.l.b16 %v3798
    %v3934 = vunpack.c.l.b16 %v3799
    %v3935 = vunpack.c.l.b16 %v3800
    %v3936 = vunpack.c.l.b16 %v3801
    %v3937 = vunpack.c.l.b16 %v3802
    %v3938 = vunpack.c.l.b16 %v3803
    %v3939 = vunpack.c.l.b16 %v3804
    %v3940 = vunpack.c.l.b16 %v3805
    %v3941 = vunpack.c.l.b16 %v3806
    %v3942 = vunpack.c.l.b16 %v3807
    %v3943 = vunpack.c.l.b16 %v3808
    %v3944 = vunpack.c.l.b16 %v3809
    %v3945 = vunpack.c.l.b16 %v3810
    %v3946 = vunpack.c.l.b16 %v3811
    %v3947 = vunpack.c.l.b16 %v3812
    %v3948 = vunpack.c.l.b16 %v3813
    %v3949 = vunpack.c.l.b16 %v3814
    %v3950 = vunpack.c.l.b16 %v3815
    %v3951 = vunpack.c.l.b16 %v3816
    %v3952 = vunpack.c.l.b16 %v3817
    %v3953 = vunpack.c.l.b16 %v3818
    %v3954 = vunpack.c.l.b16 %v3819
    %v3955 = vunpack.c.l.b16 %v3820
    %v3956 = vunpack.c.l.b16 %v3821
    %v3957 = vunpack.c.l.b16 %v3822
    %v3958 = vunpack.c.l.b16 %v3823
    %v3959 = vunpack.c.l.b16 %v3824
    %v3960 = vunpack.c.l.b16 %v3825
    %v3961 = vunpack.c.l.b16 %v3826
    %v3962 = vunpack.c.l.b16 %v3827
    %v3963 = vunpack.c.l.b16 %v3828
    %v3964 = vunpack.c.l.b16 %v3829
    %v3965 = vunpack.c.l.b16 %v3830
    %v3966 = vunpack.c.l.b16 %v3831
    %v3967 = vunpack.c.l.b16 %v3832
    %v3968 = vunpack.c.l.b16 %v3833
    %v3969 = vunpack.c.l.b16 %v3834
    %v3970 = vunpack.c.l.b16 %v3835
    %v3971 = vunpack.c.l.b16 %v3836
    %v3972 = vunpack.c.l.b16 %v3837
    %v3973 = vunpack.c.l.b16 %v3838
    %v3974 = vunpack.c.l.b16 %v3839
    %v3975 = vunpack.c.l.b16 %v3840
    %v3976 = vunpack.c.l.b16 %v3841
    %v3977 = vpack.c.b16 %v3914, %v3913
    %v3978 = vpack.c.b16 %v3916, %v3915
    %v3979 = vpack.c.b16 %v3918, %v3917
    %v3980 = vpack.c.b16 %v3920, %v3919
    %v3981 = vpack.c.b16 %v3922, %v3921
    %v3982 = vpack.c.b16 %v3924, %v3923
    %v3983 = vpack.c.b16 %v3926, %v3925
    %v3984 = vpack.c.b16 %v3928, %v3927
    %v3985 = vpack.c.b16 %v3930, %v3929
    %v3986 = vpack.c.b16 %v3932, %v3931
    %v3987 = vpack.c.b16 %v3934, %v3933
    %v3988 = vpack.c.b16 %v3936, %v3935
    %v3989 = vpack.c.b16 %v3938, %v3937
    %v3990 = vpack.c.b16 %v3940, %v3939
    %v3991 = vpack.c.b16 %v3942, %v3941
    %v3992 = vpack.c.b16 %v3944, %v3943
    %v3993 = vpack.c.b16 %v3946, %v3945
    %v3994 = vpack.c.b16 %v3948, %v3947
    %v3995 = vpack.c.b16 %v3950, %v3949
    %v3996 = vpack.c.b16 %v3952, %v3951
    %v3997 = vpack.c.b16 %v3954, %v3953
    %v3998 = vpack.c.b16 %v3956, %v3955
    %v3999 = vpack.c.b16 %v3958, %v3957
    %v4000 = vpack.c.b16 %v3960, %v3959
    %v4001 = vpack.c.b16 %v3962, %v3961
    %v4002 = vpack.c.b16 %v3964, %v3963
    %v4003 = vpack.c.b16 %v3966, %v3965
    %v4004 = vpack.c.b16 %v3968, %v3967
    %v4005 = vpack.c.b16 %v3970, %v3969
    %v4006 = vpack.c.b16 %v3972, %v3971
    %v4007 = vpack.c.b16 %v3974, %v3973
    %v4008 = vpack.c.b16 %v3976, %v3975
    %4041 = vmatprep.subr.bf16.mxu0 0
    %4042 = vmatpush1.bf16.msra.mxu0 %v3977
    %4043 = vmatprep.subr.bf16.mxu0 0
    %4044 = vmatpush1.bf16.msra.mxu0 %v3978
    %4045 = vmatprep.subr.bf16.mxu0 0
    %4046 = vmatpush1.bf16.msra.mxu0 %v3979
    %4047 = vmatprep.subr.bf16.mxu0 0
    %4048 = vmatpush1.bf16.msra.mxu0 %v3980
    %4049 = vmatprep.subr.bf16.mxu0 0
    %4050 = vmatpush1.bf16.msra.mxu0 %v3981
    %4051 = vmatprep.subr.bf16.mxu0 0
    %4052 = vmatpush1.bf16.msra.mxu0 %v3982
    %4053 = vmatprep.subr.bf16.mxu0 0
    %4054 = vmatpush1.bf16.msra.mxu0 %v3983
    %4055 = vmatprep.subr.bf16.mxu0 0
    %4056 = vmatpush1.bf16.msra.mxu0 %v3984
    %4057 = vmatprep.subr.bf16.mxu0 0
    %4058 = vmatpush1.bf16.msra.mxu0 %v3985
    %4059 = vmatprep.subr.bf16.mxu0 0
    %4060 = vmatpush1.bf16.msra.mxu0 %v3986
    %4061 = vmatprep.subr.bf16.mxu0 0
    %4062 = vmatpush1.bf16.msra.mxu0 %v3987
    %4063 = vmatprep.subr.bf16.mxu0 0
    %4064 = vmatpush1.bf16.msra.mxu0 %v3988
    %4065 = vmatprep.subr.bf16.mxu0 0
    %4066 = vmatpush1.bf16.msra.mxu0 %v3989
    %4067 = vmatprep.subr.bf16.mxu0 0
    %4068 = vmatpush1.bf16.msra.mxu0 %v3990
    %4069 = vmatprep.subr.bf16.mxu0 0
    %4070 = vmatpush1.bf16.msra.mxu0 %v3991
    %4071 = vmatprep.subr.bf16.mxu0 0
    %4072 = vmatpush1.bf16.msra.mxu0 %v3992
    %4073 = vmatprep.mubr.bf16.mxu0 %v3775
    %4074 = vmatmul.mubr.bf16.gmra.mrb[0].mxu0 %v3774
    %v4075 = vpop.f32.mrb[0].mxu0
    %v4076 = vadd.f32 %v3847, %v4075
    %v4077 = vpop.f32.mrb[0].mxu0
    %v4078 = vpop.f32.mrb[0].mxu0
    %v4079 = vadd.f32 %v3847, %v4078
    %v4080 = vpop.f32.mrb[0].mxu0
    %4081 = vdwg.mxu0
    %4082 = vmatprep.subr.bf16.mxu0 0
    %4083 = vmatpush1.bf16.msra.mxu0 %v3993
    %4084 = vmatprep.subr.bf16.mxu0 0
    %4085 = vmatpush1.bf16.msra.mxu0 %v3994
    %4086 = vmatprep.subr.bf16.mxu0 0
    %4087 = vmatpush1.bf16.msra.mxu0 %v3995
    %4088 = vmatprep.subr.bf16.mxu0 0
    %4089 = vmatpush1.bf16.msra.mxu0 %v3996
    %4090 = vmatprep.subr.bf16.mxu0 0
    %4091 = vmatpush1.bf16.msra.mxu0 %v3997
    %4092 = vmatprep.subr.bf16.mxu0 0
    %4093 = vmatpush1.bf16.msra.mxu0 %v3998
    %4094 = vmatprep.subr.bf16.mxu0 0
    %4095 = vmatpush1.bf16.msra.mxu0 %v3999
    %4096 = vmatprep.subr.bf16.mxu0 0
    %4097 = vmatpush1.bf16.msra.mxu0 %v4000
    %4098 = vmatprep.subr.bf16.mxu0 0
    %4099 = vmatpush1.bf16.msra.mxu0 %v4001
    %4100 = vmatprep.subr.bf16.mxu0 0
    %4101 = vmatpush1.bf16.msra.mxu0 %v4002
    %4102 = vmatprep.subr.bf16.mxu0 0
    %4103 = vmatpush1.bf16.msra.mxu0 %v4003
    %4104 = vmatprep.subr.bf16.mxu0 0
    %4105 = vmatpush1.bf16.msra.mxu0 %v4004
    %4106 = vmatprep.subr.bf16.mxu0 0
    %4107 = vmatpush1.bf16.msra.mxu0 %v4005
    %4108 = vmatprep.subr.bf16.mxu0 0
    %4109 = vmatpush1.bf16.msra.mxu0 %v4006
    %4110 = vmatprep.subr.bf16.mxu0 0
    %4111 = vmatpush1.bf16.msra.mxu0 %v4007
    %4112 = vmatprep.subr.bf16.mxu0 0
    %4113 = vmatpush1.bf16.msra.mxu0 %v4008
    %4114 = vmatprep.mubr.bf16.mxu0 %v3777
    %4115 = vmatmul.mubr.bf16.gmra.mrb[0].mxu0 %v3776
    %v4116 = vpop.f32.mrb[0].mxu0
    %v4117 = vadd.f32 %v4076, %v4116
    %v4118 = vpop.f32.mrb[0].mxu0
    %v4119 = vpop.f32.mrb[0].mxu0
    %v4120 = vadd.f32 %v4079, %v4119
    %v4121 = vpop.f32.mrb[0].mxu0
    %4122 = vdwg.mxu0
    %4123 = vst [vmem:[%s9] sm:$0xff] %v4117
    %4124 = vst [vmem:[%s9 + $0x8] sm:$0xff] %v4120
    // Predicated region
    $region54: #{mlp_forward.1} parent=1 // pred_check
      _
    $region55: #{mlp_forward.1} parent=1 // pred_check_branch
      %4126 = sbr.rel (0) target = $region57
    $region56: #{mlp_forward.1} parent=1 // pred_region
      _
    $region57: #{mlp_forward.1} parent=1 // pred_fallthru
      _
    // Predicated region
    $region58: #{mlp_forward.1} parent=1 // pred_check
      _
    $region59: #{mlp_forward.1} parent=1 // pred_check_branch
      %4128 = sbr.rel (0) target = $region61
    $region60: #{mlp_forward.1} parent=1 // pred_region
      _
    $region61: #{mlp_forward.1} parent=1 // pred_fallthru
      _
    %4129 = vsyncpa [#allocation3], 1
    %4130 = vsyncpa [#allocation5], 1
    %4131 = vsyncpa [#allocation8], 1

</llo_original>
